<compile_context>
chip_gen: v7x
topology: tpu7x:2x2x1
jax: 0.10.0
libtpu: 0.0.40
codegen_flags: <defaults>
</compile_context>

<pallas_src>
import functools

import jax
import jax.numpy as jnp
import numpy as np
from jax.experimental import pallas as pl
from jax.experimental.pallas import tpu as pltpu

EXPANSION = 4


# ----------------------------------------------------------------------------
# In-kernel average pooling: (H*W, C) -> (Hs*Ws, C), window = stride = s.
# Reshape + small-axis sums: the H reduction is over a leading (vreg-batch)
# axis (pure VPU adds), the W reduction is a tiny sublane-pair reduction.
# ----------------------------------------------------------------------------
def _avg_pool(v, H, W, s):
    if s == 1:
        return v
    C = v.shape[-1]
    Hs, Ws = H // s, W // s
    v = v.reshape(Hs, s, W, C).sum(axis=1)          # pool along H -> (Hs, W, C)
    v = v.reshape(Hs, Ws, s, C).sum(axis=2)         # pool along W -> (Hs, Ws, C)
    return (v * (1.0 / float(s * s))).reshape(Hs * Ws, C)


# ----------------------------------------------------------------------------
# Fused bottleneck kernel: one grid step == one image.
# ----------------------------------------------------------------------------
def _bottleneck_kernel(*refs, H, W, stride, has_down):
    x_ref, w1_ref, b1_ref, w2_ref, b2_ref, w3_ref, b3_ref = refs[:7]
    rest = refs[7:]
    idx = 0
    wd_ref = bd_ref = None
    if has_down:
        wd_ref, bd_ref = rest[0], rest[1]
        idx = 2
    o_ref, h1pad_ref = rest[idx], rest[idx + 1]

    planes = h1pad_ref.shape[-1]

    xb = x_ref[0]                                   # (H*W, cin) bf16

    # ---- conv1 (1x1) + bn1 (folded) + relu -------------------------------
    h1 = jnp.dot(xb, w1_ref[...], preferred_element_type=jnp.float32)
    h1 = jnp.maximum(h1 + b1_ref[...], 0.0)         # (H*W, planes) f32

    # ---- conv2 (3x3, pad=1) + bn2 (folded) + relu ------------------------
    # Zero only the 4 halo strips; the interior is fully overwritten below.
    zrow = jnp.zeros((1, W + 2, planes), jnp.bfloat16)
    h1pad_ref[pl.ds(0, 1)] = zrow
    h1pad_ref[pl.ds(H + 1, 1)] = zrow
    zcol = jnp.zeros((H, 1, planes), jnp.bfloat16)
    h1pad_ref[pl.ds(1, H), pl.ds(0, 1), :] = zcol
    h1pad_ref[pl.ds(1, H), pl.ds(W + 1, 1), :] = zcol
    h1pad_ref[pl.ds(1, H), pl.ds(1, W), :] = (
        h1.astype(jnp.bfloat16).reshape(H, W, planes))

    if planes >= 128:
        # Wide stages: 9 accumulating matmuls (per-tap K = planes >= 128),
        # avoids the (H*W, 9*planes) bf16 patches temp and its copy traffic.
        h2 = jnp.zeros((H * W, planes), jnp.float32)
        for t in range(9):
            kh, kw = t // 3, t % 3
            tap = h1pad_ref[pl.ds(kh, H), pl.ds(kw, W), :].reshape(H * W, planes)
            h2 = h2 + jnp.dot(tap, w2_ref[pl.ds(t * planes, planes), :],
                              preferred_element_type=jnp.float32)
    else:
        # Narrow stages: one big-K (9*planes) im2col matmul keeps the MXU fed.
        taps = [h1pad_ref[pl.ds(kh, H), pl.ds(kw, W), :]
                for kh in range(3) for kw in range(3)]          # 9 x (H, W, planes)
        patches = jnp.concatenate(taps, axis=-1)                # (H, W, 9*planes)
        h2 = jnp.dot(patches.reshape(H * W, 9 * planes), w2_ref[...],
                     preferred_element_type=jnp.float32)
    h2 = jnp.maximum(h2 + b2_ref[...], 0.0)                     # (H*W, planes) f32

    # ---- avgpool(stride) on the VPU ---------------------------------------
    pooled = _avg_pool(h2, H, W, stride).astype(jnp.bfloat16)   # (Hs*Ws, planes)

    # ---- conv3 (1x1) + bn3 (folded) ---------------------------------------
    y = jnp.dot(pooled, w3_ref[...],
                preferred_element_type=jnp.float32) + b3_ref[...]

    # ---- identity / downsample branch (pool-then-1x1-conv) ----------------
    if has_down:
        xpool = _avg_pool(xb.astype(jnp.float32), H, W, stride).astype(jnp.bfloat16)
        ident = jnp.dot(xpool, wd_ref[...],
                        preferred_element_type=jnp.float32) + bd_ref[...]
    else:
        ident = xb.astype(jnp.float32)               # stride==1 and cin==cout

    # ---- residual add + relu ----------------------------------------------
    o_ref[0] = jnp.maximum(y + ident, 0.0).astype(o_ref.dtype)  # (Hs*Ws, cout)


# ----------------------------------------------------------------------------
# Wrapper: NCHW in / NCHW out, BN folding + bf16 weight/activation prep.
# ----------------------------------------------------------------------------
def bottleneck_forward(x_nchw, params, *, inplanes, planes, stride,
                       out_dtype=jnp.bfloat16):
    cout = planes * EXPANSION
    x = jnp.transpose(x_nchw, (0, 2, 3, 1))                     # NCHW -> NHWC
    N, H, W, _ = x.shape
    Hs, Ws = H // stride, W // stride
    has_down = (stride > 1) or (inplanes != cout)

    # Activations shipped in bf16: halves HBM->VMEM DMA and the input block.
    xb = x.reshape(N, H * W, inplanes).astype(jnp.bfloat16)

    # Fold eval-mode BN scale into the conv weights; keep only the bias add.
    w1 = (params['w1'] * params['s1'][None, :]).astype(jnp.bfloat16)
    b1 = params['b1'].reshape(1, planes).astype(jnp.float32)
    w2 = (params['w2'] * params['s2'][None, None, None, :]
          ).reshape(9 * planes, planes).astype(jnp.bfloat16)
    b2 = params['b2'].reshape(1, planes).astype(jnp.float32)
    w3 = (params['w3'] * params['s3'][None, :]).astype(jnp.bfloat16)
    b3 = params['b3'].reshape(1, cout).astype(jnp.float32)

    args = [xb, w1, b1, w2, b2, w3, b3]
    in_specs = [
        pl.BlockSpec((1, H * W, inplanes), lambda n: (n, 0, 0)),
        pl.BlockSpec((inplanes, planes), lambda n: (0, 0)),
        pl.BlockSpec((1, planes), lambda n: (0, 0)),
        pl.BlockSpec((9 * planes, planes), lambda n: (0, 0)),
        pl.BlockSpec((1, planes), lambda n: (0, 0)),
        pl.BlockSpec((planes, cout), lambda n: (0, 0)),
        pl.BlockSpec((1, cout), lambda n: (0, 0)),
    ]
    if has_down:
        wd = (params['wd'] * params['sd'][None, :]).astype(jnp.bfloat16)
        bd = params['bd'].reshape(1, cout).astype(jnp.float32)
        args += [wd, bd]
        in_specs += [pl.BlockSpec((inplanes, cout), lambda n: (0, 0)),
                     pl.BlockSpec((1, cout), lambda n: (0, 0))]

    # Explicit VMEM budget: double-buffered blocks + scratch + f32 temps,
    # capped below physical VMEM of the current chip generation.
    def _nb(shape, dt):
        return int(np.prod(shape)) * jnp.dtype(dt).itemsize

    need = 2 * _nb((1, H * W, inplanes), jnp.bfloat16)              # x block
    need += sum(2 * int(a.size) * a.dtype.itemsize for a in args[1:])  # weights/biases
    need += 2 * _nb((1, Hs * Ws, cout), out_dtype)                  # out block
    need += _nb((H + 2, W + 2, planes), jnp.bfloat16)               # padded scratch
    need += 6 * _nb((H * W, planes), jnp.float32)                   # f32 temporaries
    if planes < 128:
        need += _nb((H * W, 9 * planes), jnp.bfloat16)              # im2col patches
    try:
        vmem_cap = int(pltpu.get_tpu_info().vmem_capacity_bytes)
    except Exception:
        vmem_cap = 64 * 1024 * 1024                                 # v7x-sized fallback
    vmem_limit = int(min(0.9 * vmem_cap, max(1.5 * need, 32 * 1024 * 1024)))

    kern = functools.partial(_bottleneck_kernel, H=H, W=W, stride=stride,
                             has_down=has_down)
    out = pl.pallas_call(
        kern,
        out_shape=jax.ShapeDtypeStruct((N, Hs * Ws, cout), out_dtype),
        grid=(N,),
        in_specs=in_specs,
        out_specs=pl.BlockSpec((1, Hs * Ws, cout), lambda n: (n, 0, 0)),
        scratch_shapes=[pltpu.VMEM((H + 2, W + 2, planes), jnp.bfloat16)],
        compiler_params=pltpu.CompilerParams(
            dimension_semantics=("parallel",),
            vmem_limit_bytes=vmem_limit),
    )(*args)

    out = out.reshape(N, Hs, Ws, cout)
    return jnp.transpose(out, (0, 3, 1, 2))                         # NHWC -> NCHW


# ----------------------------------------------------------------------------
# Deterministic parameter construction (eval-mode BN pre-reduced to scale/bias).
# ----------------------------------------------------------------------------
def make_params(key, inplanes, planes):
    cout = planes * EXPANSION
    ks = jax.random.split(key, 8)

    def conv(k, ci, co):
        return jax.random.normal(k, (ci, co), jnp.float32) * (1.0 / np.sqrt(ci))

    def bn(k, c):
        k1, k2, k3, k4 = jax.random.split(k, 4)
        gamma = 1.0 + 0.1 * jax.random.normal(k1, (c,), jnp.float32)
        beta = 0.1 * jax.random.normal(k2, (c,), jnp.float32)
        mean = 0.1 * jax.random.normal(k3, (c,), jnp.float32)
        var = jnp.abs(jax.random.normal(k4, (c,), jnp.float32)) + 0.5
        scale = gamma / jnp.sqrt(var + 1e-5)
        bias = beta - mean * scale
        return scale, bias

    p = {}
    p['w1'] = conv(ks[0], inplanes, planes)
    p['s1'], p['b1'] = bn(ks[1], planes)
    p['w2'] = (jax.random.normal(ks[2], (3, 3, planes, planes), jnp.float32)
               * (1.0 / np.sqrt(9 * planes)))                  # HWIO
    p['s2'], p['b2'] = bn(ks[3], planes)
    p['w3'] = conv(ks[4], planes, cout)
    p['s3'], p['b3'] = bn(ks[5], cout)
    p['wd'] = conv(ks[6], inplanes, cout)                      # downsample conv
    p['sd'], p['bd'] = bn(ks[7], cout)
    return p


# ----------------------------------------------------------------------------
# Pure-JAX f32 reference (same math, no Pallas) for the numerical check.
# ----------------------------------------------------------------------------
def ref_forward(x_nchw, params, *, inplanes, planes, stride):
    cout = planes * EXPANSION
    hi = jax.lax.Precision.HIGHEST
    x = jnp.transpose(x_nchw, (0, 2, 3, 1)).astype(jnp.float32)

    def bn(y, s, b):
        return y * s + b

    def pool(y, s):
        if s == 1:
            return y
        n, h, w, c = y.shape
        return y.reshape(n, h // s, s, w // s, s, c).mean(axis=(2, 4))

    out = jnp.maximum(bn(jnp.einsum('nhwc,cd->nhwd', x, params['w1'],
                                    precision=hi), params['s1'], params['b1']), 0.0)
    out = jax.lax.conv_general_dilated(
        out, params['w2'], (1, 1), 'SAME',
        dimension_numbers=('NHWC', 'HWIO', 'NHWC'), precision=hi)
    out = jnp.maximum(bn(out, params['s2'], params['b2']), 0.0)
    out = pool(out, stride)
    out = bn(jnp.einsum('nhwc,cd->nhwd', out, params['w3'], precision=hi),
             params['s3'], params['b3'])
    if stride > 1 or inplanes != cout:
        ident = bn(jnp.einsum('nhwc,cd->nhwd', pool(x, stride), params['wd'],
                              precision=hi), params['sd'], params['bd'])
    else:
        ident = x
    out = jnp.maximum(out + ident, 0.0)
    return jnp.transpose(out, (0, 3, 1, 2))


if __name__ == "__main__":
    key = jax.random.PRNGKey(0)
    kx, kp = jax.random.split(key)

    N, inplanes, H, W = 2, 8, 16, 16
    planes, stride = 4, 2            # -> cout=16, spatial 8x8, downsample branch active

    x = jax.random.normal(kx, (N, inplanes, H, W), jnp.float32)   # NCHW like PyTorch
    params = make_params(kp, inplanes, planes)

    out = bottleneck_forward(x, params, inplanes=inplanes, planes=planes, stride=stride)
    out = jax.block_until_ready(out)

    assert out.shape == (N, planes * EXPANSION, H // stride, W // stride)

    ref = ref_forward(x, params, inplanes=inplanes, planes=planes, stride=stride)
    # bf16 activations/weights on the MXU + bf16 output vs f32-HIGHEST reference.
    np.testing.assert_allclose(np.asarray(out.astype(jnp.float32)), np.asarray(ref),
                               rtol=5e-2, atol=1e-1)

    print("KERNEL_OK")
</pallas_src>

<mosaic_0001>
module attributes {stable_mosaic.version = 11 : i64} {
  func.func @_bottleneck_kernel(%arg0: i32, %arg1: memref<1x256x8xbf16, #tpu.memory_space<vmem>>, %arg2: memref<8x4xbf16, #tpu.memory_space<vmem>>, %arg3: memref<1x4xf32, #tpu.memory_space<vmem>>, %arg4: memref<36x4xbf16, #tpu.memory_space<vmem>>, %arg5: memref<1x4xf32, #tpu.memory_space<vmem>>, %arg6: memref<4x16xbf16, #tpu.memory_space<vmem>>, %arg7: memref<1x16xf32, #tpu.memory_space<vmem>>, %arg8: memref<8x16xbf16, #tpu.memory_space<vmem>>, %arg9: memref<1x16xf32, #tpu.memory_space<vmem>>, %arg10: memref<1x64x16xbf16, #tpu.memory_space<vmem>>, %arg11: memref<18x18x4xbf16, #tpu.memory_space<vmem>>) attributes {dimension_semantics = [#tpu.dimension_semantics<parallel>], iteration_bounds = array<i64: 2>, scalar_prefetch = 0 : i64, scratch_operands = 1 : i64, tpu.core_type = #tpu.core_type<tc>, window_params = [{transform_indices = @transform_0, window_bounds = array<i64: 1, 256, 8>}, {pipeline_mode = #tpu.pipeline_mode<synchronous>, transform_indices = @transform_1, window_bounds = array<i64: 8, 4>}, {pipeline_mode = #tpu.pipeline_mode<synchronous>, transform_indices = @transform_2, window_bounds = array<i64: 1, 4>}, {pipeline_mode = #tpu.pipeline_mode<synchronous>, transform_indices = @transform_3, window_bounds = array<i64: 36, 4>}, {pipeline_mode = #tpu.pipeline_mode<synchronous>, transform_indices = @transform_4, window_bounds = array<i64: 1, 4>}, {pipeline_mode = #tpu.pipeline_mode<synchronous>, transform_indices = @transform_5, window_bounds = array<i64: 4, 16>}, {pipeline_mode = #tpu.pipeline_mode<synchronous>, transform_indices = @transform_6, window_bounds = array<i64: 1, 16>}, {pipeline_mode = #tpu.pipeline_mode<synchronous>, transform_indices = @transform_7, window_bounds = array<i64: 8, 16>}, {pipeline_mode = #tpu.pipeline_mode<synchronous>, transform_indices = @transform_8, window_bounds = array<i64: 1, 16>}, {transform_indices = @transform_9, window_bounds = array<i64: 1, 64, 16>}]} {
    %c0 = arith.constant 0 : index
    %c0_0 = arith.constant 0 : index
    %c0_1 = arith.constant 0 : index
    %0 = vector.load %arg1[%c0, %c0_0, %c0_1] : memref<1x256x8xbf16, #tpu.memory_space<vmem>>, vector<1x256x8xbf16>
    %1 = vector.shape_cast %0 : vector<1x256x8xbf16> to vector<256x8xbf16>
    %c0_2 = arith.constant 0 : index
    %c0_3 = arith.constant 0 : index
    %2 = vector.load %arg2[%c0_2, %c0_3] : memref<8x4xbf16, #tpu.memory_space<vmem>>, vector<8x4xbf16>
    %cst = arith.constant dense<0.000000e+00> : vector<256x4xf32>
    %3 = tpu.matmul %1, %2, %cst {dimension_numbers = #tpu.dot_dimension_numbers<[1], [0], [0], [1], [0, 0, 1, 1], [], []>} : vector<256x8xbf16>, vector<8x4xbf16>, vector<256x4xf32> -> vector<256x4xf32>
    %c0_4 = arith.constant 0 : index
    %c0_5 = arith.constant 0 : index
    %4 = vector.load %arg3[%c0_4, %c0_5] : memref<1x4xf32, #tpu.memory_space<vmem>>, vector<1x4xf32>
    %5 = vector.broadcast %4 : vector<1x4xf32> to vector<256x4xf32>
    %6 = arith.addf %3, %5 : vector<256x4xf32>
    %cst_6 = arith.constant 0.000000e+00 : f32
    %7 = vector.broadcast %cst_6 : f32 to vector<256x4xf32>
    %8 = arith.maximumf %6, %7 : vector<256x4xf32>
    %cst_7 = arith.constant 0.000000e+00 : bf16
    %9 = vector.broadcast %cst_7 : bf16 to vector<1x18x4xbf16>
    %c0_8 = arith.constant 0 : index
    %c0_9 = arith.constant 0 : index
    %c0_10 = arith.constant 0 : index
    %10 = vector.load %arg11[%c0_8, %c0_9, %c0_10] : memref<18x18x4xbf16, #tpu.memory_space<vmem>>, vector<1x18x4xbf16>
    tpu.vector_store %arg11[%c0_8, %c0_9, %c0_10], %9 {strides = array<i32>} : memref<18x18x4xbf16, #tpu.memory_space<vmem>>, vector<1x18x4xbf16>,
    %c17 = arith.constant 17 : index
    %c0_11 = arith.constant 0 : index
    %c0_12 = arith.constant 0 : index
    %11 = vector.load %arg11[%c17, %c0_11, %c0_12] : memref<18x18x4xbf16, #tpu.memory_space<vmem>>, vector<1x18x4xbf16>
    tpu.vector_store %arg11[%c17, %c0_11, %c0_12], %9 {strides = array<i32>} : memref<18x18x4xbf16, #tpu.memory_space<vmem>>, vector<1x18x4xbf16>,
    %cst_13 = arith.constant 0.000000e+00 : bf16
    %12 = vector.broadcast %cst_13 : bf16 to vector<16x1x4xbf16>
    %c1 = arith.constant 1 : index
    %c0_14 = arith.constant 0 : index
    %c0_15 = arith.constant 0 : index
    %13 = vector.load %arg11[%c1, %c0_14, %c0_15] : memref<18x18x4xbf16, #tpu.memory_space<vmem>>, vector<16x1x4xbf16>
    tpu.vector_store %arg11[%c1, %c0_14, %c0_15], %12 {strides = array<i32>} : memref<18x18x4xbf16, #tpu.memory_space<vmem>>, vector<16x1x4xbf16>,
    %c1_16 = arith.constant 1 : index
    %c17_17 = arith.constant 17 : index
    %c0_18 = arith.constant 0 : index
    %14 = vector.load %arg11[%c1_16, %c17_17, %c0_18] : memref<18x18x4xbf16, #tpu.memory_space<vmem>>, vector<16x1x4xbf16>
    tpu.vector_store %arg11[%c1_16, %c17_17, %c0_18], %12 {strides = array<i32>} : memref<18x18x4xbf16, #tpu.memory_space<vmem>>, vector<16x1x4xbf16>,
    %15 = arith.truncf %8 : vector<256x4xf32> to vector<256x4xbf16>
    %16 = vector.shape_cast %15 : vector<256x4xbf16> to vector<16x16x4xbf16>
    %c1_19 = arith.constant 1 : index
    %c1_20 = arith.constant 1 : index
    %c0_21 = arith.constant 0 : index
    %17 = vector.load %arg11[%c1_19, %c1_20, %c0_21] : memref<18x18x4xbf16, #tpu.memory_space<vmem>>, vector<16x16x4xbf16>
    tpu.vector_store %arg11[%c1_19, %c1_20, %c0_21], %16 {strides = array<i32>} : memref<18x18x4xbf16, #tpu.memory_space<vmem>>, vector<16x16x4xbf16>,
    %c0_22 = arith.constant 0 : index
    %c0_23 = arith.constant 0 : index
    %c0_24 = arith.constant 0 : index
    %18 = vector.load %arg11[%c0_22, %c0_23, %c0_24] : memref<18x18x4xbf16, #tpu.memory_space<vmem>>, vector<16x16x4xbf16>
    %c0_25 = arith.constant 0 : index
    %c1_26 = arith.constant 1 : index
    %c0_27 = arith.constant 0 : index
    %19 = vector.load %arg11[%c0_25, %c1_26, %c0_27] : memref<18x18x4xbf16, #tpu.memory_space<vmem>>, vector<16x16x4xbf16>
    %c0_28 = arith.constant 0 : index
    %c2 = arith.constant 2 : index
    %c0_29 = arith.constant 0 : index
    %20 = vector.load %arg11[%c0_28, %c2, %c0_29] : memref<18x18x4xbf16, #tpu.memory_space<vmem>>, vector<16x16x4xbf16>
    %c1_30 = arith.constant 1 : index
    %c0_31 = arith.constant 0 : index
    %c0_32 = arith.constant 0 : index
    %21 = vector.load %arg11[%c1_30, %c0_31, %c0_32] : memref<18x18x4xbf16, #tpu.memory_space<vmem>>, vector<16x16x4xbf16>
    %c1_33 = arith.constant 1 : index
    %c1_34 = arith.constant 1 : index
    %c0_35 = arith.constant 0 : index
    %22 = vector.load %arg11[%c1_33, %c1_34, %c0_35] : memref<18x18x4xbf16, #tpu.memory_space<vmem>>, vector<16x16x4xbf16>
    %c1_36 = arith.constant 1 : index
    %c2_37 = arith.constant 2 : index
    %c0_38 = arith.constant 0 : index
    %23 = vector.load %arg11[%c1_36, %c2_37, %c0_38] : memref<18x18x4xbf16, #tpu.memory_space<vmem>>, vector<16x16x4xbf16>
    %c2_39 = arith.constant 2 : index
    %c0_40 = arith.constant 0 : index
    %c0_41 = arith.constant 0 : index
    %24 = vector.load %arg11[%c2_39, %c0_40, %c0_41] : memref<18x18x4xbf16, #tpu.memory_space<vmem>>, vector<16x16x4xbf16>
    %c2_42 = arith.constant 2 : index
    %c1_43 = arith.constant 1 : index
    %c0_44 = arith.constant 0 : index
    %25 = vector.load %arg11[%c2_42, %c1_43, %c0_44] : memref<18x18x4xbf16, #tpu.memory_space<vmem>>, vector<16x16x4xbf16>
    %c2_45 = arith.constant 2 : index
    %c2_46 = arith.constant 2 : index
    %c0_47 = arith.constant 0 : index
    %26 = vector.load %arg11[%c2_45, %c2_46, %c0_47] : memref<18x18x4xbf16, #tpu.memory_space<vmem>>, vector<16x16x4xbf16>
    %27 = tpu.concatenate %18, %19, %20, %21, %22, %23, %24, %25, %26 in 2 : vector<16x16x4xbf16>, vector<16x16x4xbf16>, vector<16x16x4xbf16>, vector<16x16x4xbf16>, vector<16x16x4xbf16>, vector<16x16x4xbf16>, vector<16x16x4xbf16>, vector<16x16x4xbf16>, vector<16x16x4xbf16> -> vector<16x16x36xbf16>
    %28 = vector.shape_cast %27 : vector<16x16x36xbf16> to vector<256x36xbf16>
    %c0_48 = arith.constant 0 : index
    %c0_49 = arith.constant 0 : index
    %29 = vector.load %arg4[%c0_48, %c0_49] : memref<36x4xbf16, #tpu.memory_space<vmem>>, vector<36x4xbf16>
    %cst_50 = arith.constant dense<0.000000e+00> : vector<256x4xf32>
    %30 = tpu.matmul %28, %29, %cst_50 {dimension_numbers = #tpu.dot_dimension_numbers<[1], [0], [0], [1], [0, 0, 1, 1], [], []>} : vector<256x36xbf16>, vector<36x4xbf16>, vector<256x4xf32> -> vector<256x4xf32>
    %c0_51 = arith.constant 0 : index
    %c0_52 = arith.constant 0 : index
    %31 = vector.load %arg5[%c0_51, %c0_52] : memref<1x4xf32, #tpu.memory_space<vmem>>, vector<1x4xf32>
    %32 = vector.broadcast %31 : vector<1x4xf32> to vector<256x4xf32>
    %33 = arith.addf %30, %32 : vector<256x4xf32>
    %cst_53 = arith.constant 0.000000e+00 : f32
    %34 = vector.broadcast %cst_53 : f32 to vector<256x4xf32>
    %35 = arith.maximumf %33, %34 : vector<256x4xf32>
    %36 = vector.shape_cast %35 : vector<256x4xf32> to vector<8x2x16x4xf32>
    %cst_54 = arith.constant dense<0.000000e+00> : vector<8x16x4xf32>
    %37 = vector.multi_reduction <add>, %36, %cst_54 [1] : vector<8x2x16x4xf32> to vector<8x16x4xf32>
    %38 = vector.shape_cast %37 : vector<8x16x4xf32> to vector<8x8x2x4xf32>
    %cst_55 = arith.constant dense<0.000000e+00> : vector<8x8x4xf32>
    %39 = vector.multi_reduction <add>, %38, %cst_55 [2] : vector<8x8x2x4xf32> to vector<8x8x4xf32>
    %cst_56 = arith.constant 2.500000e-01 : f32
    %40 = vector.broadcast %cst_56 : f32 to vector<8x8x4xf32>
    %41 = arith.mulf %39, %40 : vector<8x8x4xf32>
    %42 = vector.shape_cast %41 : vector<8x8x4xf32> to vector<64x4xf32>
    %43 = arith.truncf %42 : vector<64x4xf32> to vector<64x4xbf16>
    %c0_57 = arith.constant 0 : index
    %c0_58 = arith.constant 0 : index
    %44 = vector.load %arg6[%c0_57, %c0_58] : memref<4x16xbf16, #tpu.memory_space<vmem>>, vector<4x16xbf16>
    %cst_59 = arith.constant dense<0.000000e+00> : vector<64x16xf32>
    %45 = tpu.matmul %43, %44, %cst_59 {dimension_numbers = #tpu.dot_dimension_numbers<[1], [0], [0], [1], [0, 0, 1, 1], [], []>} : vector<64x4xbf16>, vector<4x16xbf16>, vector<64x16xf32> -> vector<64x16xf32>
    %c0_60 = arith.constant 0 : index
    %c0_61 = arith.constant 0 : index
    %46 = vector.load %arg7[%c0_60, %c0_61] : memref<1x16xf32, #tpu.memory_space<vmem>>, vector<1x16xf32>
    %47 = vector.broadcast %46 : vector<1x16xf32> to vector<64x16xf32>
    %48 = arith.addf %45, %47 : vector<64x16xf32>
    %49 = arith.extf %1 : vector<256x8xbf16> to vector<256x8xf32>
    %50 = vector.shape_cast %49 : vector<256x8xf32> to vector<8x2x16x8xf32>
    %cst_62 = arith.constant dense<0.000000e+00> : vector<8x16x8xf32>
    %51 = vector.multi_reduction <add>, %50, %cst_62 [1] : vector<8x2x16x8xf32> to vector<8x16x8xf32>
    %52 = vector.shape_cast %51 : vector<8x16x8xf32> to vector<8x8x2x8xf32>
    %cst_63 = arith.constant dense<0.000000e+00> : vector<8x8x8xf32>
    %53 = vector.multi_reduction <add>, %52, %cst_63 [2] : vector<8x8x2x8xf32> to vector<8x8x8xf32>
    %cst_64 = arith.constant 2.500000e-01 : f32
    %54 = vector.broadcast %cst_64 : f32 to vector<8x8x8xf32>
    %55 = arith.mulf %53, %54 : vector<8x8x8xf32>
    %56 = vector.shape_cast %55 : vector<8x8x8xf32> to vector<64x8xf32>
    %57 = arith.truncf %56 : vector<64x8xf32> to vector<64x8xbf16>
    %c0_65 = arith.constant 0 : index
    %c0_66 = arith.constant 0 : index
    %58 = vector.load %arg8[%c0_65, %c0_66] : memref<8x16xbf16, #tpu.memory_space<vmem>>, vector<8x16xbf16>
    %cst_67 = arith.constant dense<0.000000e+00> : vector<64x16xf32>
    %59 = tpu.matmul %57, %58, %cst_67 {dimension_numbers = #tpu.dot_dimension_numbers<[1], [0], [0], [1], [0, 0, 1, 1], [], []>} : vector<64x8xbf16>, vector<8x16xbf16>, vector<64x16xf32> -> vector<64x16xf32>
    %c0_68 = arith.constant 0 : index
    %c0_69 = arith.constant 0 : index
    %60 = vector.load %arg9[%c0_68, %c0_69] : memref<1x16xf32, #tpu.memory_space<vmem>>, vector<1x16xf32>
    %61 = vector.broadcast %60 : vector<1x16xf32> to vector<64x16xf32>
    %62 = arith.addf %59, %61 : vector<64x16xf32>
    %63 = arith.addf %48, %62 : vector<64x16xf32>
    %cst_70 = arith.constant 0.000000e+00 : f32
    %64 = vector.broadcast %cst_70 : f32 to vector<64x16xf32>
    %65 = arith.maximumf %63, %64 : vector<64x16xf32>
    %66 = arith.truncf %65 : vector<64x16xf32> to vector<64x16xbf16>
    %c0_71 = arith.constant 0 : index
    %c0_72 = arith.constant 0 : index
    %c0_73 = arith.constant 0 : index
    %67 = vector.load %arg10[%c0_71, %c0_72, %c0_73] : memref<1x64x16xbf16, #tpu.memory_space<vmem>>, vector<1x64x16xbf16>
    %68 = vector.shape_cast %67 : vector<1x64x16xbf16> to vector<64x16xbf16>
    %69 = vector.shape_cast %66 : vector<64x16xbf16> to vector<1x64x16xbf16>
    tpu.vector_store %arg10[%c0_71, %c0_72, %c0_73], %69 {strides = array<i32>} : memref<1x64x16xbf16, #tpu.memory_space<vmem>>, vector<1x64x16xbf16>,
    return
  }
  func.func @transform_0(%arg0: i32) -> (i32, i32, i32) {
    %c0_i32 = arith.constant 0 : i32
    %c0_i32_0 = arith.constant 0 : i32
    %c0_i32_1 = arith.constant 0 : i32
    return %arg0, %c0_i32, %c0_i32_0 : i32, i32, i32
  }
  func.func @transform_1(%arg0: i32) -> (i32, i32) {
    %c0_i32 = arith.constant 0 : i32
    %c0_i32_0 = arith.constant 0 : i32
    %c0_i32_1 = arith.constant 0 : i32
    return %c0_i32, %c0_i32_0 : i32, i32
  }
  func.func @transform_2(%arg0: i32) -> (i32, i32) {
    %c0_i32 = arith.constant 0 : i32
    %c0_i32_0 = arith.constant 0 : i32
    %c0_i32_1 = arith.constant 0 : i32
    return %c0_i32, %c0_i32_0 : i32, i32
  }
  func.func @transform_3(%arg0: i32) -> (i32, i32) {
    %c0_i32 = arith.constant 0 : i32
    %c0_i32_0 = arith.constant 0 : i32
    %c0_i32_1 = arith.constant 0 : i32
    return %c0_i32, %c0_i32_0 : i32, i32
  }
  func.func @transform_4(%arg0: i32) -> (i32, i32) {
    %c0_i32 = arith.constant 0 : i32
    %c0_i32_0 = arith.constant 0 : i32
    %c0_i32_1 = arith.constant 0 : i32
    return %c0_i32, %c0_i32_0 : i32, i32
  }
  func.func @transform_5(%arg0: i32) -> (i32, i32) {
    %c0_i32 = arith.constant 0 : i32
    %c0_i32_0 = arith.constant 0 : i32
    %c0_i32_1 = arith.constant 0 : i32
    return %c0_i32, %c0_i32_0 : i32, i32
  }
  func.func @transform_6(%arg0: i32) -> (i32, i32) {
    %c0_i32 = arith.constant 0 : i32
    %c0_i32_0 = arith.constant 0 : i32
    %c0_i32_1 = arith.constant 0 : i32
    return %c0_i32, %c0_i32_0 : i32, i32
  }
  func.func @transform_7(%arg0: i32) -> (i32, i32) {
    %c0_i32 = arith.constant 0 : i32
    %c0_i32_0 = arith.constant 0 : i32
    %c0_i32_1 = arith.constant 0 : i32
    return %c0_i32, %c0_i32_0 : i32, i32
  }
  func.func @transform_8(%arg0: i32) -> (i32, i32) {
    %c0_i32 = arith.constant 0 : i32
    %c0_i32_0 = arith.constant 0 : i32
    %c0_i32_1 = arith.constant 0 : i32
    return %c0_i32, %c0_i32_0 : i32, i32
  }
  func.func @transform_9(%arg0: i32) -> (i32, i32, i32) {
    %c0_i32 = arith.constant 0 : i32
    %c0_i32_0 = arith.constant 0 : i32
    %c0_i32_1 = arith.constant 0 : i32
    return %arg0, %c0_i32, %c0_i32_0 : i32, i32, i32
  }
}

</mosaic_0001>

<llo_original>
// kernel: tpu_custom_call.1
$region0: #{tpu_custom_call.1}
  #allocation0 [shape = 'u32[]', space=smem, size = 0x4, offset = 0x4, fixed_abs, tag = 'smem constant byte address 0x4 - core index']
  #allocation1 [shape = 'u32[144,128]{1,0:T(1,128)}', space=vmem, size = 0x12000, scoped, tag = 'internal scratch']
  #allocation2 [shape = 'bf16[18,18,4]{2,1,0:T(8,128)(2,1)}', space=vmem, size = 0x1b000, scoped, tag = 'scratch operand']
  %s0 = inlined_call_operand.vmem [shape: bf16[2,256,8], index: 0, kind: input, shape index: {}]
  %s1 = inlined_call_operand.vmem [shape: bf16[8,4], index: 1, kind: input, shape index: {}]
  %s2 = inlined_call_operand.vmem [shape: f32[1,4], index: 2, kind: input, shape index: {}]
  %s3 = inlined_call_operand.vmem [shape: bf16[36,4], index: 3, kind: input, shape index: {}]
  %s4 = inlined_call_operand.vmem [shape: f32[1,4], index: 4, kind: input, shape index: {}]
  %s5 = inlined_call_operand.vmem [shape: bf16[4,16], index: 5, kind: input, shape index: {}]
  %s6 = inlined_call_operand.vmem [shape: f32[1,16], index: 6, kind: input, shape index: {}]
  %s7 = inlined_call_operand.vmem [shape: bf16[8,16], index: 7, kind: input, shape index: {}]
  %s8 = inlined_call_operand.vmem [shape: f32[1,16], index: 8, kind: input, shape index: {}]
  %s9 = inlined_call_operand.vmem [shape: bf16[2,64,16], index: 9, kind: output, shape index: {}]
  %s10 = sld [smem:[#allocation0]]
  $region69: #{tpu_custom_call.1} parent=0
    _
  %s12 = ssub.s32 1, %s10
  %s13 = scalar_select 0, %s12, %s10
  loop: start=0, step=1, limit=4
  $region2: #{tpu_custom_call.1} parent=0 // loop_pre_header
    _
  $region3: #{tpu_custom_call.1} parent=0 // loop_header
    %s15 = sphi 0, %s19
    %p16 = scmp.ge.s32.totalorder %s15, 4
    %s25 = sphi 0, %s27
    %s28 = sphi 0, %s25
    %s29 = sphi 0, %s28
    %s45 = sphi 0, %s29
    %s49 = sphi 0, %s49
    %s51 = sphi 0, %s49
    %s52 = sphi 0, %s51
    %s66 = sphi 0, %s52
    %s70 = sphi 0, %s70
    %s72 = sphi 0, %s70
    %s73 = sphi 0, %s72
    %s87 = sphi 0, %s73
    %s91 = sphi 0, %s91
    %s93 = sphi 0, %s91
    %s94 = sphi 0, %s93
    %s108 = sphi 0, %s94
    %s112 = sphi 0, %s112
    %s114 = sphi 0, %s112
    %s115 = sphi 0, %s114
    %s129 = sphi 0, %s115
    %s133 = sphi 0, %s133
    %s135 = sphi 0, %s133
    %s136 = sphi 0, %s135
    %s150 = sphi 0, %s136
    %s154 = sphi 0, %s154
    %s156 = sphi 0, %s154
    %s157 = sphi 0, %s156
    %s171 = sphi 0, %s157
    %s175 = sphi 0, %s175
    %s177 = sphi 0, %s175
    %s178 = sphi 0, %s177
    %s192 = sphi 0, %s178
    %s196 = sphi 0, %s196
    %s198 = sphi 0, %s196
    %s199 = sphi 0, %s198
    %s213 = sphi 0, %s199
    %s219 = sphi 0, %s221
    %s222 = sphi 0, %s219
    %s223 = sphi 0, %s222
    %s239 = sphi 0, %s223
  $region4: #{tpu_custom_call.1} parent=0 // loop_header_branch
    %18 = sbr.rel (%p16) target = $region8
  $region5: #{tpu_custom_call.1} parent=0 // loop_body
    %s20 = ssub.s32 %s15, 1
    %s21 = ssub.s32 %s15, 2
    %s22 = sadd.s32 %s15, 1
    %s23 = ssub.s32 %s15, %s22
    %p24 = scmp.eq.s32.totalorder %s23, 0
    %s26 = sadd.s32 %s25, 1
    %s27 = scalar_select %p24, %s25, %s26
    %p30 = pneg %p24
    %p31 = scmp.eq.s32.totalorder %s15, 1
    %p32 = por %p30, %p31
    %p33 = scmp.ne.s32.totalorder %s25, %s28
    %p34 = scmp.eq.s32.totalorder %s15, 0
    %p35 = por %p33, %p34
    %p36 = scmp.ne.s32.totalorder %s25, %s28
    %p37 = scmp.eq.s32.totalorder %s20, 1
    %p38 = por %p36, %p37
    %p39 = scmp.ne.s32.totalorder %s28, %s29
    %p40 = scmp.eq.s32.totalorder %s20, 0
    %p41 = por %p39, %p40
    %p42 = scmp.ne.s32.totalorder %s28, %s29
    %p43 = scmp.eq.s32.totalorder %s21, 1
    %p44 = por %p42, %p43
    %p46 = scmp.ne.s32.totalorder %s29, %s45
    %p47 = scmp.eq.s32.totalorder %s21, 0
    %p48 = por %p46, %p47
    %s50 = sadd.s32 %s49, 1
    %p53 = scmp.eq.s32.totalorder %s15, 1
    %p54 = scmp.ne.s32.totalorder %s49, %s51
    %p55 = scmp.eq.s32.totalorder %s15, 0
    %p56 = por %p54, %p55
    %p57 = scmp.ne.s32.totalorder %s49, %s51
    %p58 = scmp.eq.s32.totalorder %s20, 1
    %p59 = por %p57, %p58
    %p60 = scmp.ne.s32.totalorder %s51, %s52
    %p61 = scmp.eq.s32.totalorder %s20, 0
    %p62 = por %p60, %p61
    %p63 = scmp.ne.s32.totalorder %s51, %s52
    %p64 = scmp.eq.s32.totalorder %s21, 1
    %p65 = por %p63, %p64
    %p67 = scmp.ne.s32.totalorder %s52, %s66
    %p68 = scmp.eq.s32.totalorder %s21, 0
    %p69 = por %p67, %p68
    %s71 = sadd.s32 %s70, 1
    %p74 = scmp.eq.s32.totalorder %s15, 1
    %p75 = scmp.ne.s32.totalorder %s70, %s72
    %p76 = scmp.eq.s32.totalorder %s15, 0
    %p77 = por %p75, %p76
    %p78 = scmp.ne.s32.totalorder %s70, %s72
    %p79 = scmp.eq.s32.totalorder %s20, 1
    %p80 = por %p78, %p79
    %p81 = scmp.ne.s32.totalorder %s72, %s73
    %p82 = scmp.eq.s32.totalorder %s20, 0
    %p83 = por %p81, %p82
    %p84 = scmp.ne.s32.totalorder %s72, %s73
    %p85 = scmp.eq.s32.totalorder %s21, 1
    %p86 = por %p84, %p85
    %p88 = scmp.ne.s32.totalorder %s73, %s87
    %p89 = scmp.eq.s32.totalorder %s21, 0
    %p90 = por %p88, %p89
    %s92 = sadd.s32 %s91, 1
    %p95 = scmp.eq.s32.totalorder %s15, 1
    %p96 = scmp.ne.s32.totalorder %s91, %s93
    %p97 = scmp.eq.s32.totalorder %s15, 0
    %p98 = por %p96, %p97
    %p99 = scmp.ne.s32.totalorder %s91, %s93
    %p100 = scmp.eq.s32.totalorder %s20, 1
    %p101 = por %p99, %p100
    %p102 = scmp.ne.s32.totalorder %s93, %s94
    %p103 = scmp.eq.s32.totalorder %s20, 0
    %p104 = por %p102, %p103
    %p105 = scmp.ne.s32.totalorder %s93, %s94
    %p106 = scmp.eq.s32.totalorder %s21, 1
    %p107 = por %p105, %p106
    %p109 = scmp.ne.s32.totalorder %s94, %s108
    %p110 = scmp.eq.s32.totalorder %s21, 0
    %p111 = por %p109, %p110
    %s113 = sadd.s32 %s112, 1
    %p116 = scmp.eq.s32.totalorder %s15, 1
    %p117 = scmp.ne.s32.totalorder %s112, %s114
    %p118 = scmp.eq.s32.totalorder %s15, 0
    %p119 = por %p117, %p118
    %p120 = scmp.ne.s32.totalorder %s112, %s114
    %p121 = scmp.eq.s32.totalorder %s20, 1
    %p122 = por %p120, %p121
    %p123 = scmp.ne.s32.totalorder %s114, %s115
    %p124 = scmp.eq.s32.totalorder %s20, 0
    %p125 = por %p123, %p124
    %p126 = scmp.ne.s32.totalorder %s114, %s115
    %p127 = scmp.eq.s32.totalorder %s21, 1
    %p128 = por %p126, %p127
    %p130 = scmp.ne.s32.totalorder %s115, %s129
    %p131 = scmp.eq.s32.totalorder %s21, 0
    %p132 = por %p130, %p131
    %s134 = sadd.s32 %s133, 1
    %p137 = scmp.eq.s32.totalorder %s15, 1
    %p138 = scmp.ne.s32.totalorder %s133, %s135
    %p139 = scmp.eq.s32.totalorder %s15, 0
    %p140 = por %p138, %p139
    %p141 = scmp.ne.s32.totalorder %s133, %s135
    %p142 = scmp.eq.s32.totalorder %s20, 1
    %p143 = por %p141, %p142
    %p144 = scmp.ne.s32.totalorder %s135, %s136
    %p145 = scmp.eq.s32.totalorder %s20, 0
    %p146 = por %p144, %p145
    %p147 = scmp.ne.s32.totalorder %s135, %s136
    %p148 = scmp.eq.s32.totalorder %s21, 1
    %p149 = por %p147, %p148
    %p151 = scmp.ne.s32.totalorder %s136, %s150
    %p152 = scmp.eq.s32.totalorder %s21, 0
    %p153 = por %p151, %p152
    %s155 = sadd.s32 %s154, 1
    %p158 = scmp.eq.s32.totalorder %s15, 1
    %p159 = scmp.ne.s32.totalorder %s154, %s156
    %p160 = scmp.eq.s32.totalorder %s15, 0
    %p161 = por %p159, %p160
    %p162 = scmp.ne.s32.totalorder %s154, %s156
    %p163 = scmp.eq.s32.totalorder %s20, 1
    %p164 = por %p162, %p163
    %p165 = scmp.ne.s32.totalorder %s156, %s157
    %p166 = scmp.eq.s32.totalorder %s20, 0
    %p167 = por %p165, %p166
    %p168 = scmp.ne.s32.totalorder %s156, %s157
    %p169 = scmp.eq.s32.totalorder %s21, 1
    %p170 = por %p168, %p169
    %p172 = scmp.ne.s32.totalorder %s157, %s171
    %p173 = scmp.eq.s32.totalorder %s21, 0
    %p174 = por %p172, %p173
    %s176 = sadd.s32 %s175, 1
    %p179 = scmp.eq.s32.totalorder %s15, 1
    %p180 = scmp.ne.s32.totalorder %s175, %s177
    %p181 = scmp.eq.s32.totalorder %s15, 0
    %p182 = por %p180, %p181
    %p183 = scmp.ne.s32.totalorder %s175, %s177
    %p184 = scmp.eq.s32.totalorder %s20, 1
    %p185 = por %p183, %p184
    %p186 = scmp.ne.s32.totalorder %s177, %s178
    %p187 = scmp.eq.s32.totalorder %s20, 0
    %p188 = por %p186, %p187
    %p189 = scmp.ne.s32.totalorder %s177, %s178
    %p190 = scmp.eq.s32.totalorder %s21, 1
    %p191 = por %p189, %p190
    %p193 = scmp.ne.s32.totalorder %s178, %s192
    %p194 = scmp.eq.s32.totalorder %s21, 0
    %p195 = por %p193, %p194
    %s197 = sadd.s32 %s196, 1
    %p200 = scmp.eq.s32.totalorder %s15, 1
    %p201 = scmp.ne.s32.totalorder %s196, %s198
    %p202 = scmp.eq.s32.totalorder %s15, 0
    %p203 = por %p201, %p202
    %p204 = scmp.ne.s32.totalorder %s196, %s198
    %p205 = scmp.eq.s32.totalorder %s20, 1
    %p206 = por %p204, %p205
    %p207 = scmp.ne.s32.totalorder %s198, %s199
    %p208 = scmp.eq.s32.totalorder %s20, 0
    %p209 = por %p207, %p208
    %p210 = scmp.ne.s32.totalorder %s198, %s199
    %p211 = scmp.eq.s32.totalorder %s21, 1
    %p212 = por %p210, %p211
    %p214 = scmp.ne.s32.totalorder %s199, %s213
    %p215 = scmp.eq.s32.totalorder %s21, 0
    %p216 = por %p214, %p215
    %s217 = ssub.s32 %s15, %s22
    %p218 = scmp.eq.s32.totalorder %s217, 0
    %s220 = sadd.s32 %s219, 1
    %s221 = scalar_select %p218, %s219, %s220
    %p224 = pneg %p218
    %p225 = scmp.eq.s32.totalorder %s15, 1
    %p226 = por %p224, %p225
    %p227 = scmp.ne.s32.totalorder %s219, %s222
    %p228 = scmp.eq.s32.totalorder %s15, 0
    %p229 = por %p227, %p228
    %p230 = scmp.ne.s32.totalorder %s219, %s222
    %p231 = scmp.eq.s32.totalorder %s20, 1
    %p232 = por %p230, %p231
    %p233 = scmp.ne.s32.totalorder %s222, %s223
    %p234 = scmp.eq.s32.totalorder %s20, 0
    %p235 = por %p233, %p234
    %p236 = scmp.ne.s32.totalorder %s222, %s223
    %p237 = scmp.eq.s32.totalorder %s21, 1
    %p238 = por %p236, %p237
    %p240 = scmp.ne.s32.totalorder %s223, %s239
    %p241 = scmp.eq.s32.totalorder %s21, 0
    %p242 = por %p240, %p241
    %p243 = scmp.le.s32.totalorder 1, %s15
    %p244 = scmp.lt.s32.totalorder %s15, 3
    %p245 = pnand %p243, %p244
    %p246 = pneg %p245
    // Predicated region
    $region9: #{tpu_custom_call.1} parent=5 // pred_check
      _
    $region10: #{tpu_custom_call.1} parent=5 // pred_check_branch
      %248 = sbr.rel (%p245) target = $region12
    $region11: #{tpu_custom_call.1} parent=5 // pred_region
      %s249 = ssub.s32 %s15, 1
      // Predicated region
      $region13: #{tpu_custom_call.1} parent=11 // pred_check
        %p250 = pneg %p62
      $region14: #{tpu_custom_call.1} parent=11 // pred_check_branch
        %252 = sbr.rel (%p250) target = $region16
      $region15: #{tpu_custom_call.1} parent=11 // pred_region
        _
      $region16: #{tpu_custom_call.1} parent=11 // pred_fallthru
        _
      // Predicated region
      $region17: #{tpu_custom_call.1} parent=11 // pred_check
        %p253 = pneg %p83
      $region18: #{tpu_custom_call.1} parent=11 // pred_check_branch
        %255 = sbr.rel (%p253) target = $region20
      $region19: #{tpu_custom_call.1} parent=11 // pred_region
        _
      $region20: #{tpu_custom_call.1} parent=11 // pred_fallthru
        _
      // Predicated region
      $region21: #{tpu_custom_call.1} parent=11 // pred_check
        %p256 = pneg %p104
      $region22: #{tpu_custom_call.1} parent=11 // pred_check_branch
        %258 = sbr.rel (%p256) target = $region24
      $region23: #{tpu_custom_call.1} parent=11 // pred_region
        _
      $region24: #{tpu_custom_call.1} parent=11 // pred_fallthru
        _
      // Predicated region
      $region25: #{tpu_custom_call.1} parent=11 // pred_check
        %p259 = pneg %p125
      $region26: #{tpu_custom_call.1} parent=11 // pred_check_branch
        %261 = sbr.rel (%p259) target = $region28
      $region27: #{tpu_custom_call.1} parent=11 // pred_region
        _
      $region28: #{tpu_custom_call.1} parent=11 // pred_fallthru
        _
      // Predicated region
      $region29: #{tpu_custom_call.1} parent=11 // pred_check
        %p262 = pneg %p146
      $region30: #{tpu_custom_call.1} parent=11 // pred_check_branch
        %264 = sbr.rel (%p262) target = $region32
      $region31: #{tpu_custom_call.1} parent=11 // pred_region
        _
      $region32: #{tpu_custom_call.1} parent=11 // pred_fallthru
        _
      // Predicated region
      $region33: #{tpu_custom_call.1} parent=11 // pred_check
        %p265 = pneg %p167
      $region34: #{tpu_custom_call.1} parent=11 // pred_check_branch
        %267 = sbr.rel (%p265) target = $region36
      $region35: #{tpu_custom_call.1} parent=11 // pred_region
        _
      $region36: #{tpu_custom_call.1} parent=11 // pred_fallthru
        _
      // Predicated region
      $region37: #{tpu_custom_call.1} parent=11 // pred_check
        %p268 = pneg %p188
      $region38: #{tpu_custom_call.1} parent=11 // pred_check_branch
        %270 = sbr.rel (%p268) target = $region40
      $region39: #{tpu_custom_call.1} parent=11 // pred_region
        _
      $region40: #{tpu_custom_call.1} parent=11 // pred_fallthru
        _
      // Predicated region
      $region41: #{tpu_custom_call.1} parent=11 // pred_check
        %p271 = pneg %p209
      $region42: #{tpu_custom_call.1} parent=11 // pred_check_branch
        %273 = sbr.rel (%p271) target = $region44
      $region43: #{tpu_custom_call.1} parent=11 // pred_region
        _
      $region44: #{tpu_custom_call.1} parent=11 // pred_fallthru
        _
    $region12: #{tpu_custom_call.1} parent=5 // pred_fallthru
      _
    %p274 = scmp.lt.s32.totalorder %s15, 2
    // Predicated region
    $region45: #{tpu_custom_call.1} parent=5 // pred_check
      %p275 = pneg %p274
    $region46: #{tpu_custom_call.1} parent=5 // pred_check_branch
      %277 = sbr.rel (%p275) target = $region48
    $region47: #{tpu_custom_call.1} parent=5 // pred_region
      // Predicated region
      $region49: #{tpu_custom_call.1} parent=47 // pred_check
        %p278 = pneg %p35
      $region50: #{tpu_custom_call.1} parent=47 // pred_check_branch
        %280 = sbr.rel (%p278) target = $region52
      $region51: #{tpu_custom_call.1} parent=47 // pred_region
        %p281 = scmp.lt.s32.totalorder %s15, 1
        %s282 = scalar_select %p281, %s15, 1
        %s283 = smul.addr %s282, 32
        %s284 = smul.addr %s283, 4
        %s285 = scalar_lea.vmem %s0, %s284
      $region52: #{tpu_custom_call.1} parent=47 // pred_fallthru
        _
    $region48: #{tpu_custom_call.1} parent=5 // pred_fallthru
      _
    %p286 = scmp.le.s32.totalorder 1, %s15
    %p287 = scmp.lt.s32.totalorder %s15, 3
    %p288 = pnand %p286, %p287
    %p289 = pneg %p288
    // Predicated region
    $region53: #{tpu_custom_call.1} parent=5 // pred_check
      _
    $region54: #{tpu_custom_call.1} parent=5 // pred_check_branch
      %291 = sbr.rel (%p288) target = $region56
    $region55: #{tpu_custom_call.1} parent=5 // pred_region
      %s292 = ssub.s32 %s15, 1
      %p293 = scmp.lt.s32.totalorder %s20, 1
      %s294 = scalar_select %p293, %s20, 1
      %s295 = smul.addr %s294, 32
      %s296 = smul.addr %s295, 4
      %s297 = scalar_lea.vmem %s0, %s296
      %p298 = pneg %p41
      %p299 = pneg %p38
      %p300 = pneg %p62
      %p301 = pneg %p59
      %p302 = pneg %p83
      %p303 = pneg %p80
      %p304 = pneg %p104
      %p305 = pneg %p101
      %p306 = pneg %p125
      %p307 = pneg %p122
      %p308 = pneg %p146
      %p309 = pneg %p143
      %p310 = pneg %p167
      %p311 = pneg %p164
      %p312 = pneg %p188
      %p313 = pneg %p185
      %p314 = pneg %p209
      %p315 = pneg %p206
      %p316 = pneg %p235
      %p317 = pneg %p232
      %p318 = scmp.lt.s32.totalorder %s20, 1
      %s319 = scalar_select %p318, %s20, 1
      %s320 = smul.addr %s319, 8
      %s321 = smul.addr %s320, 4
      %s322 = scalar_lea.vmem %s9, %s321
      %p323 = scmp.lt.s32.totalorder %s20, 1
      %s324 = scalar_select %p323, %s20, 1
      %s325 = smul.addr %s324, 32
      %s326 = smul.addr %s325, 4
      %s327 = scalar_lea.vmem %s0, %s326
      %p328 = scmp.lt.s32.totalorder %s20, 1
      %s329 = scalar_select %p328, %s20, 1
      %s330 = smul.addr %s329, 8
      %s331 = smul.addr %s330, 4
      %s332 = scalar_lea.vmem %s9, %s331
      %v334 = vld [vmem:[%s327] sm:$0xf]
      %v335 = vld [vmem:[%s327 + $0x4] sm:$0xf]
      %v336 = vld [vmem:[%s327 + $0x8] sm:$0xf]
      %v337 = vld [vmem:[%s327 + $0xc] sm:$0xf]
      %v338 = vld [vmem:[%s327 + $0x10] sm:$0xf]
      %v339 = vld [vmem:[%s327 + $0x14] sm:$0xf]
      %v340 = vld [vmem:[%s327 + $0x18] sm:$0xf]
      %v341 = vld [vmem:[%s327 + $0x1c] sm:$0xf]
      %v342 = vld [vmem:[%s327 + $0x20] sm:$0xf]
      %v343 = vld [vmem:[%s327 + $0x24] sm:$0xf]
      %v344 = vld [vmem:[%s327 + $0x28] sm:$0xf]
      %v345 = vld [vmem:[%s327 + $0x2c] sm:$0xf]
      %v346 = vld [vmem:[%s327 + $0x30] sm:$0xf]
      %v347 = vld [vmem:[%s327 + $0x34] sm:$0xf]
      %v348 = vld [vmem:[%s327 + $0x38] sm:$0xf]
      %v349 = vld [vmem:[%s327 + $0x3c] sm:$0xf]
      %v350 = vld [vmem:[%s327 + $0x40] sm:$0xf]
      %v351 = vld [vmem:[%s327 + $0x44] sm:$0xf]
      %v352 = vld [vmem:[%s327 + $0x48] sm:$0xf]
      %v353 = vld [vmem:[%s327 + $0x4c] sm:$0xf]
      %v354 = vld [vmem:[%s327 + $0x50] sm:$0xf]
      %v355 = vld [vmem:[%s327 + $0x54] sm:$0xf]
      %v356 = vld [vmem:[%s327 + $0x58] sm:$0xf]
      %v357 = vld [vmem:[%s327 + $0x5c] sm:$0xf]
      %v358 = vld [vmem:[%s327 + $0x60] sm:$0xf]
      %v359 = vld [vmem:[%s327 + $0x64] sm:$0xf]
      %v360 = vld [vmem:[%s327 + $0x68] sm:$0xf]
      %v361 = vld [vmem:[%s327 + $0x6c] sm:$0xf]
      %v362 = vld [vmem:[%s327 + $0x70] sm:$0xf]
      %v363 = vld [vmem:[%s327 + $0x74] sm:$0xf]
      %v364 = vld [vmem:[%s327 + $0x78] sm:$0xf]
      %v365 = vld [vmem:[%s327 + $0x7c] sm:$0xf]
      %v366 = vld [vmem:[%s1] sm:$0xf]
      %v367 = vld [vmem:[%s2] sm:$0x1]
      %v369 = vlaneseq
      %v370 = vshrl.u32 %v369, 7
      %v371 = vsub.s32 0, %v370
      %v372 = vrot.slane %v367, %v371
      %v406 = vunpack.c.l.b16 %v334
      %v407 = vunpack.c.l.b16 %v335
      %v408 = vunpack.c.l.b16 %v336
      %v409 = vunpack.c.l.b16 %v337
      %v410 = vunpack.c.l.b16 %v338
      %v411 = vunpack.c.l.b16 %v339
      %v412 = vunpack.c.l.b16 %v340
      %v413 = vunpack.c.l.b16 %v341
      %v414 = vunpack.c.l.b16 %v342
      %v415 = vunpack.c.l.b16 %v343
      %v416 = vunpack.c.l.b16 %v344
      %v417 = vunpack.c.l.b16 %v345
      %v418 = vunpack.c.l.b16 %v346
      %v419 = vunpack.c.l.b16 %v347
      %v420 = vunpack.c.l.b16 %v348
      %v421 = vunpack.c.l.b16 %v349
      %v422 = vunpack.c.l.b16 %v350
      %v423 = vunpack.c.l.b16 %v351
      %v424 = vunpack.c.l.b16 %v352
      %v425 = vunpack.c.l.b16 %v353
      %v426 = vunpack.c.l.b16 %v354
      %v427 = vunpack.c.l.b16 %v355
      %v428 = vunpack.c.l.b16 %v356
      %v429 = vunpack.c.l.b16 %v357
      %v430 = vunpack.c.l.b16 %v358
      %v431 = vunpack.c.l.b16 %v359
      %v432 = vunpack.c.l.b16 %v360
      %v433 = vunpack.c.l.b16 %v361
      %v434 = vunpack.c.l.b16 %v362
      %v435 = vunpack.c.l.b16 %v363
      %v436 = vunpack.c.l.b16 %v364
      %v437 = vunpack.c.l.b16 %v365
      %v438 = vpack.c.b16 %v407, %v406
      %v439 = vpack.c.b16 %v409, %v408
      %v440 = vpack.c.b16 %v411, %v410
      %v441 = vpack.c.b16 %v413, %v412
      %v442 = vpack.c.b16 %v415, %v414
      %v443 = vpack.c.b16 %v417, %v416
      %v444 = vpack.c.b16 %v419, %v418
      %v445 = vpack.c.b16 %v421, %v420
      %v446 = vpack.c.b16 %v423, %v422
      %v447 = vpack.c.b16 %v425, %v424
      %v448 = vpack.c.b16 %v427, %v426
      %v449 = vpack.c.b16 %v429, %v428
      %v450 = vpack.c.b16 %v431, %v430
      %v451 = vpack.c.b16 %v433, %v432
      %v452 = vpack.c.b16 %v435, %v434
      %v453 = vpack.c.b16 %v437, %v436
      %vm454 = vcmask 64512
      %v456 = vsel %vm454, %v438, 0
      %v459 = vsel %vm454, %v439, 0
      %v462 = vsel %vm454, %v440, 0
      %v465 = vsel %vm454, %v441, 0
      %v468 = vsel %vm454, %v442, 0
      %v471 = vsel %vm454, %v443, 0
      %v474 = vsel %vm454, %v444, 0
      %v477 = vsel %vm454, %v445, 0
      %v480 = vsel %vm454, %v446, 0
      %v483 = vsel %vm454, %v447, 0
      %v486 = vsel %vm454, %v448, 0
      %v489 = vsel %vm454, %v449, 0
      %v492 = vsel %vm454, %v450, 0
      %v495 = vsel %vm454, %v451, 0
      %v498 = vsel %vm454, %v452, 0
      %v501 = vsel %vm454, %v453, 0
      %vm503 = vcmask 1043456
      %v505 = vsel %vm503, %v366, 0
      %507 = vmatprep.subr.bf16.mxu0 0
      %508 = vmatpush1.bf16.msra.mxu0 %v505
      %509 = vmatprep.subr.bf16.mxu0 0
      %510 = vmatpush1.bf16.msra.mxu0 0
      %511 = vmatprep.subr.bf16.mxu0 0
      %512 = vmatpush1.bf16.msra.mxu0 0
      %513 = vmatprep.subr.bf16.mxu0 0
      %514 = vmatpush1.bf16.msra.mxu0 0
      %515 = vmatprep.subr.bf16.mxu0 0
      %516 = vmatpush1.bf16.msra.mxu0 0
      %517 = vmatprep.subr.bf16.mxu0 0
      %518 = vmatpush1.bf16.msra.mxu0 0
      %519 = vmatprep.subr.bf16.mxu0 0
      %520 = vmatpush1.bf16.msra.mxu0 0
      %521 = vmatprep.subr.bf16.mxu0 0
      %522 = vmatpush1.bf16.msra.mxu0 0
      %523 = vmatprep.subr.bf16.mxu0 0
      %524 = vmatpush1.bf16.msra.mxu0 0
      %525 = vmatprep.subr.bf16.mxu0 0
      %526 = vmatpush1.bf16.msra.mxu0 0
      %527 = vmatprep.subr.bf16.mxu0 0
      %528 = vmatpush1.bf16.msra.mxu0 0
      %529 = vmatprep.subr.bf16.mxu0 0
      %530 = vmatpush1.bf16.msra.mxu0 0
      %531 = vmatprep.subr.bf16.mxu0 0
      %532 = vmatpush1.bf16.msra.mxu0 0
      %533 = vmatprep.subr.bf16.mxu0 0
      %534 = vmatpush1.bf16.msra.mxu0 0
      %535 = vmatprep.subr.bf16.mxu0 0
      %536 = vmatpush1.bf16.msra.mxu0 0
      %537 = vmatprep.subr.bf16.mxu0 0
      %538 = vmatpush1.bf16.msra.mxu0 0
      %539 = vmatprep.mubr.bf16.mxu0 0
      %540 = vmatmul.mubr.bf16.gmra.mrb[0].mxu0 %v456
      %v541 = vpop.f32.mrb[0].mxu0
      %v542 = vadd.f32 %v372, %v541
      %v543 = vpop.f32.mrb[0].mxu0
      %v544 = vpop.f32.mrb[0].mxu0
      %v545 = vadd.f32 %v372, %v544
      %v546 = vpop.f32.mrb[0].mxu0
      %547 = vmatprep.mubr.bf16.mxu0 0
      %548 = vmatmul.mubr.bf16.gmra.mrb[0].mxu0 %v459
      %v549 = vpop.f32.mrb[0].mxu0
      %v550 = vadd.f32 %v372, %v549
      %v551 = vpop.f32.mrb[0].mxu0
      %v552 = vpop.f32.mrb[0].mxu0
      %v553 = vadd.f32 %v372, %v552
      %v554 = vpop.f32.mrb[0].mxu0
      %555 = vmatprep.mubr.bf16.mxu0 0
      %556 = vmatmul.mubr.bf16.gmra.mrb[0].mxu0 %v462
      %v557 = vpop.f32.mrb[0].mxu0
      %v558 = vadd.f32 %v372, %v557
      %v559 = vpop.f32.mrb[0].mxu0
      %v560 = vpop.f32.mrb[0].mxu0
      %v561 = vadd.f32 %v372, %v560
      %v562 = vpop.f32.mrb[0].mxu0
      %563 = vmatprep.mubr.bf16.mxu0 0
      %564 = vmatmul.mubr.bf16.gmra.mrb[0].mxu0 %v465
      %v565 = vpop.f32.mrb[0].mxu0
      %v566 = vadd.f32 %v372, %v565
      %v567 = vpop.f32.mrb[0].mxu0
      %v568 = vpop.f32.mrb[0].mxu0
      %v569 = vadd.f32 %v372, %v568
      %v570 = vpop.f32.mrb[0].mxu0
      %571 = vmatprep.mubr.bf16.mxu0 0
      %572 = vmatmul.mubr.bf16.gmra.mrb[0].mxu0 %v468
      %v573 = vpop.f32.mrb[0].mxu0
      %v574 = vadd.f32 %v372, %v573
      %v575 = vpop.f32.mrb[0].mxu0
      %v576 = vpop.f32.mrb[0].mxu0
      %v577 = vadd.f32 %v372, %v576
      %v578 = vpop.f32.mrb[0].mxu0
      %579 = vmatprep.mubr.bf16.mxu0 0
      %580 = vmatmul.mubr.bf16.gmra.mrb[0].mxu0 %v471
      %v581 = vpop.f32.mrb[0].mxu0
      %v582 = vadd.f32 %v372, %v581
      %v583 = vpop.f32.mrb[0].mxu0
      %v584 = vpop.f32.mrb[0].mxu0
      %v585 = vadd.f32 %v372, %v584
      %v586 = vpop.f32.mrb[0].mxu0
      %587 = vmatprep.mubr.bf16.mxu0 0
      %588 = vmatmul.mubr.bf16.gmra.mrb[0].mxu0 %v474
      %v589 = vpop.f32.mrb[0].mxu0
      %v590 = vadd.f32 %v372, %v589
      %v591 = vpop.f32.mrb[0].mxu0
      %v592 = vpop.f32.mrb[0].mxu0
      %v593 = vadd.f32 %v372, %v592
      %v594 = vpop.f32.mrb[0].mxu0
      %595 = vmatprep.mubr.bf16.mxu0 0
      %596 = vmatmul.mubr.bf16.gmra.mrb[0].mxu0 %v477
      %v597 = vpop.f32.mrb[0].mxu0
      %v598 = vadd.f32 %v372, %v597
      %v599 = vpop.f32.mrb[0].mxu0
      %v600 = vpop.f32.mrb[0].mxu0
      %v601 = vadd.f32 %v372, %v600
      %v602 = vpop.f32.mrb[0].mxu0
      %603 = vmatprep.mubr.bf16.mxu0 0
      %604 = vmatmul.mubr.bf16.gmra.mrb[0].mxu0 %v480
      %v605 = vpop.f32.mrb[0].mxu0
      %v606 = vadd.f32 %v372, %v605
      %v607 = vpop.f32.mrb[0].mxu0
      %v608 = vpop.f32.mrb[0].mxu0
      %v609 = vadd.f32 %v372, %v608
      %v610 = vpop.f32.mrb[0].mxu0
      %611 = vmatprep.mubr.bf16.mxu0 0
      %612 = vmatmul.mubr.bf16.gmra.mrb[0].mxu0 %v483
      %v613 = vpop.f32.mrb[0].mxu0
      %v614 = vadd.f32 %v372, %v613
      %v615 = vpop.f32.mrb[0].mxu0
      %v616 = vpop.f32.mrb[0].mxu0
      %v617 = vadd.f32 %v372, %v616
      %v618 = vpop.f32.mrb[0].mxu0
      %619 = vmatprep.mubr.bf16.mxu0 0
      %620 = vmatmul.mubr.bf16.gmra.mrb[0].mxu0 %v486
      %v621 = vpop.f32.mrb[0].mxu0
      %v622 = vadd.f32 %v372, %v621
      %v623 = vpop.f32.mrb[0].mxu0
      %v624 = vpop.f32.mrb[0].mxu0
      %v625 = vadd.f32 %v372, %v624
      %v626 = vpop.f32.mrb[0].mxu0
      %627 = vmatprep.mubr.bf16.mxu0 0
      %628 = vmatmul.mubr.bf16.gmra.mrb[0].mxu0 %v489
      %v629 = vpop.f32.mrb[0].mxu0
      %v630 = vadd.f32 %v372, %v629
      %v631 = vpop.f32.mrb[0].mxu0
      %v632 = vpop.f32.mrb[0].mxu0
      %v633 = vadd.f32 %v372, %v632
      %v634 = vpop.f32.mrb[0].mxu0
      %635 = vmatprep.mubr.bf16.mxu0 0
      %636 = vmatmul.mubr.bf16.gmra.mrb[0].mxu0 %v492
      %v637 = vpop.f32.mrb[0].mxu0
      %v638 = vadd.f32 %v372, %v637
      %v639 = vpop.f32.mrb[0].mxu0
      %v640 = vpop.f32.mrb[0].mxu0
      %v641 = vadd.f32 %v372, %v640
      %v642 = vpop.f32.mrb[0].mxu0
      %643 = vmatprep.mubr.bf16.mxu0 0
      %644 = vmatmul.mubr.bf16.gmra.mrb[0].mxu0 %v495
      %v645 = vpop.f32.mrb[0].mxu0
      %v646 = vadd.f32 %v372, %v645
      %v647 = vpop.f32.mrb[0].mxu0
      %v648 = vpop.f32.mrb[0].mxu0
      %v649 = vadd.f32 %v372, %v648
      %v650 = vpop.f32.mrb[0].mxu0
      %651 = vmatprep.mubr.bf16.mxu0 0
      %652 = vmatmul.mubr.bf16.gmra.mrb[0].mxu0 %v498
      %v653 = vpop.f32.mrb[0].mxu0
      %v654 = vadd.f32 %v372, %v653
      %v655 = vpop.f32.mrb[0].mxu0
      %v656 = vpop.f32.mrb[0].mxu0
      %v657 = vadd.f32 %v372, %v656
      %v658 = vpop.f32.mrb[0].mxu0
      %659 = vmatprep.mubr.bf16.mxu0 0
      %660 = vmatmul.mubr.bf16.gmra.mrb[0].mxu0 %v501
      %v661 = vpop.f32.mrb[0].mxu0
      %v662 = vadd.f32 %v372, %v661
      %v663 = vpop.f32.mrb[0].mxu0
      %v664 = vpop.f32.mrb[0].mxu0
      %v665 = vadd.f32 %v372, %v664
      %v666 = vpop.f32.mrb[0].mxu0
      %667 = vdwg.mxu0
      %v668 = vmax.f32 %v542, 0.0
      %v669 = vmax.f32 %v545, 0.0
      %v670 = vmax.f32 %v550, 0.0
      %v671 = vmax.f32 %v553, 0.0
      %v672 = vmax.f32 %v558, 0.0
      %v673 = vmax.f32 %v561, 0.0
      %v674 = vmax.f32 %v566, 0.0
      %v675 = vmax.f32 %v569, 0.0
      %v676 = vmax.f32 %v574, 0.0
      %v677 = vmax.f32 %v577, 0.0
      %v678 = vmax.f32 %v582, 0.0
      %v679 = vmax.f32 %v585, 0.0
      %v680 = vmax.f32 %v590, 0.0
      %v681 = vmax.f32 %v593, 0.0
      %v682 = vmax.f32 %v598, 0.0
      %v683 = vmax.f32 %v601, 0.0
      %v684 = vmax.f32 %v606, 0.0
      %v685 = vmax.f32 %v609, 0.0
      %v686 = vmax.f32 %v614, 0.0
      %v687 = vmax.f32 %v617, 0.0
      %v688 = vmax.f32 %v622, 0.0
      %v689 = vmax.f32 %v625, 0.0
      %v690 = vmax.f32 %v630, 0.0
      %v691 = vmax.f32 %v633, 0.0
      %v692 = vmax.f32 %v638, 0.0
      %v693 = vmax.f32 %v641, 0.0
      %v694 = vmax.f32 %v646, 0.0
      %v695 = vmax.f32 %v649, 0.0
      %v696 = vmax.f32 %v654, 0.0
      %v697 = vmax.f32 %v657, 0.0
      %v698 = vmax.f32 %v662, 0.0
      %v699 = vmax.f32 %v665, 0.0
      %vm700 = vcmask 27648
      %701 = vst.msk [vmem:[#allocation2] sm:$0xf] %vm700, 0
      %702 = vst.msk [vmem:[#allocation2 + $0x4] sm:$0xf] %vm700, 0
      %vm703 = vcmask 24576
      %704 = vst.msk [vmem:[#allocation2 + $0x8] sm:$0x1] %vm703, 0
      %s705 = scalar_lea.vmem [#allocation2], 204
      %706 = vst.msk [vmem:[%s705] sm:$0xf] %vm700, 0
      %707 = vst.msk [vmem:[%s705 + $0x4] sm:$0xf] %vm700, 0
      %708 = vst.msk [vmem:[%s705 + $0x8] sm:$0x1] %vm703, 0
      %s709 = scalar_lea.vmem [#allocation2], 12
      %vm710 = vcmask 24576
      %vm711 = vsmask.f32 256
      %vm712 = vmand %vm710, %vm711
      %v713 = vld [vmem:[%s709] sm:$0x1]
      %v714 = vsel %vm712, 0, %v713
      %715 = vst [vmem:[%s709] sm:$0x1] %v714
      %v716 = vld [vmem:[%s709 + $0xc] sm:$0x1]
      %v717 = vsel %vm712, 0, %v716
      %718 = vst [vmem:[%s709 + $0xc] sm:$0x1] %v717
      %v719 = vld [vmem:[%s709 + $0x18] sm:$0x1]
      %v720 = vsel %vm712, 0, %v719
      %721 = vst [vmem:[%s709 + $0x18] sm:$0x1] %v720
      %v722 = vld [vmem:[%s709 + $0x24] sm:$0x1]
      %v723 = vsel %vm712, 0, %v722
      %724 = vst [vmem:[%s709 + $0x24] sm:$0x1] %v723
      %v725 = vld [vmem:[%s709 + $0x30] sm:$0x1]
      %v726 = vsel %vm712, 0, %v725
      %727 = vst [vmem:[%s709 + $0x30] sm:$0x1] %v726
      %v728 = vld [vmem:[%s709 + $0x3c] sm:$0x1]
      %v729 = vsel %vm712, 0, %v728
      %730 = vst [vmem:[%s709 + $0x3c] sm:$0x1] %v729
      %v731 = vld [vmem:[%s709 + $0x48] sm:$0x1]
      %v732 = vsel %vm712, 0, %v731
      %733 = vst [vmem:[%s709 + $0x48] sm:$0x1] %v732
      %v734 = vld [vmem:[%s709 + $0x54] sm:$0x1]
      %v735 = vsel %vm712, 0, %v734
      %736 = vst [vmem:[%s709 + $0x54] sm:$0x1] %v735
      %v737 = vld [vmem:[%s709 + $0x60] sm:$0x1]
      %v738 = vsel %vm712, 0, %v737
      %739 = vst [vmem:[%s709 + $0x60] sm:$0x1] %v738
      %v740 = vld [vmem:[%s709 + $0x6c] sm:$0x1]
      %v741 = vsel %vm712, 0, %v740
      %742 = vst [vmem:[%s709 + $0x6c] sm:$0x1] %v741
      %v743 = vld [vmem:[%s709 + $0x78] sm:$0x1]
      %v744 = vsel %vm712, 0, %v743
      %745 = vst [vmem:[%s709 + $0x78] sm:$0x1] %v744
      %v746 = vld [vmem:[%s709 + $0x84] sm:$0x1]
      %v747 = vsel %vm712, 0, %v746
      %748 = vst [vmem:[%s709 + $0x84] sm:$0x1] %v747
      %v749 = vld [vmem:[%s709 + $0x90] sm:$0x1]
      %v750 = vsel %vm712, 0, %v749
      %751 = vst [vmem:[%s709 + $0x90] sm:$0x1] %v750
      %v752 = vld [vmem:[%s709 + $0x9c] sm:$0x1]
      %v753 = vsel %vm712, 0, %v752
      %754 = vst [vmem:[%s709 + $0x9c] sm:$0x1] %v753
      %v755 = vld [vmem:[%s709 + $0xa8] sm:$0x1]
      %v756 = vsel %vm712, 0, %v755
      %757 = vst [vmem:[%s709 + $0xa8] sm:$0x1] %v756
      %v758 = vld [vmem:[%s709 + $0xb4] sm:$0x1]
      %v759 = vsel %vm712, 0, %v758
      %760 = vst [vmem:[%s709 + $0xb4] sm:$0x1] %v759
      %vm761 = vsmask.f32 7938
      %vm762 = vmand %vm710, %vm761
      %v763 = vld [vmem:[%s709 + $0x8] sm:$0x1]
      %v764 = vsel %vm762, 0, %v763
      %765 = vst [vmem:[%s709 + $0x8] sm:$0x1] %v764
      %v766 = vld [vmem:[%s709 + $0x14] sm:$0x1]
      %v767 = vsel %vm762, 0, %v766
      %768 = vst [vmem:[%s709 + $0x14] sm:$0x1] %v767
      %v769 = vld [vmem:[%s709 + $0x20] sm:$0x1]
      %v770 = vsel %vm762, 0, %v769
      %771 = vst [vmem:[%s709 + $0x20] sm:$0x1] %v770
      %v772 = vld [vmem:[%s709 + $0x2c] sm:$0x1]
      %v773 = vsel %vm762, 0, %v772
      %774 = vst [vmem:[%s709 + $0x2c] sm:$0x1] %v773
      %v775 = vld [vmem:[%s709 + $0x38] sm:$0x1]
      %v776 = vsel %vm762, 0, %v775
      %777 = vst [vmem:[%s709 + $0x38] sm:$0x1] %v776
      %v778 = vld [vmem:[%s709 + $0x44] sm:$0x1]
      %v779 = vsel %vm762, 0, %v778
      %780 = vst [vmem:[%s709 + $0x44] sm:$0x1] %v779
      %v781 = vld [vmem:[%s709 + $0x50] sm:$0x1]
      %v782 = vsel %vm762, 0, %v781
      %783 = vst [vmem:[%s709 + $0x50] sm:$0x1] %v782
      %v784 = vld [vmem:[%s709 + $0x5c] sm:$0x1]
      %v785 = vsel %vm762, 0, %v784
      %786 = vst [vmem:[%s709 + $0x5c] sm:$0x1] %v785
      %v787 = vld [vmem:[%s709 + $0x68] sm:$0x1]
      %v788 = vsel %vm762, 0, %v787
      %789 = vst [vmem:[%s709 + $0x68] sm:$0x1] %v788
      %v790 = vld [vmem:[%s709 + $0x74] sm:$0x1]
      %v791 = vsel %vm762, 0, %v790
      %792 = vst [vmem:[%s709 + $0x74] sm:$0x1] %v791
      %v793 = vld [vmem:[%s709 + $0x80] sm:$0x1]
      %v794 = vsel %vm762, 0, %v793
      %795 = vst [vmem:[%s709 + $0x80] sm:$0x1] %v794
      %v796 = vld [vmem:[%s709 + $0x8c] sm:$0x1]
      %v797 = vsel %vm762, 0, %v796
      %798 = vst [vmem:[%s709 + $0x8c] sm:$0x1] %v797
      %v799 = vld [vmem:[%s709 + $0x98] sm:$0x1]
      %v800 = vsel %vm762, 0, %v799
      %801 = vst [vmem:[%s709 + $0x98] sm:$0x1] %v800
      %v802 = vld [vmem:[%s709 + $0xa4] sm:$0x1]
      %v803 = vsel %vm762, 0, %v802
      %804 = vst [vmem:[%s709 + $0xa4] sm:$0x1] %v803
      %v805 = vld [vmem:[%s709 + $0xb0] sm:$0x1]
      %v806 = vsel %vm762, 0, %v805
      %807 = vst [vmem:[%s709 + $0xb0] sm:$0x1] %v806
      %v808 = vld [vmem:[%s709 + $0xbc] sm:$0x1]
      %v809 = vsel %vm762, 0, %v808
      %810 = vst [vmem:[%s709 + $0xbc] sm:$0x1] %v809
      %v811 = vpack.c.bf16 %v669, %v668
      %v812 = vpack.c.bf16 %v671, %v670
      %v813 = vpack.c.bf16 %v673, %v672
      %v814 = vpack.c.bf16 %v675, %v674
      %v815 = vpack.c.bf16 %v677, %v676
      %v816 = vpack.c.bf16 %v679, %v678
      %v817 = vpack.c.bf16 %v681, %v680
      %v818 = vpack.c.bf16 %v683, %v682
      %v819 = vpack.c.bf16 %v685, %v684
      %v820 = vpack.c.bf16 %v687, %v686
      %v821 = vpack.c.bf16 %v689, %v688
      %v822 = vpack.c.bf16 %v691, %v690
      %v823 = vpack.c.bf16 %v693, %v692
      %v824 = vpack.c.bf16 %v695, %v694
      %v825 = vpack.c.bf16 %v697, %v696
      %v826 = vpack.c.bf16 %v699, %v698
      %v843 = vunpack.c.l.b16 %v811
      %v844 = vunpack.c.h.b16 %v811
      %v845 = vunpack.c.l.b16 %v812
      %v846 = vunpack.c.h.b16 %v812
      %v847 = vunpack.c.l.b16 %v813
      %v848 = vunpack.c.h.b16 %v813
      %v849 = vunpack.c.l.b16 %v814
      %v850 = vunpack.c.h.b16 %v814
      %v851 = vunpack.c.l.b16 %v815
      %v852 = vunpack.c.h.b16 %v815
      %v853 = vunpack.c.l.b16 %v816
      %v854 = vunpack.c.h.b16 %v816
      %v855 = vunpack.c.l.b16 %v817
      %v856 = vunpack.c.h.b16 %v817
      %v857 = vunpack.c.l.b16 %v818
      %v858 = vunpack.c.h.b16 %v818
      %v859 = vunpack.c.l.b16 %v819
      %v860 = vunpack.c.h.b16 %v819
      %v861 = vunpack.c.l.b16 %v820
      %v862 = vunpack.c.h.b16 %v820
      %v863 = vunpack.c.l.b16 %v821
      %v864 = vunpack.c.h.b16 %v821
      %v865 = vunpack.c.l.b16 %v822
      %v866 = vunpack.c.h.b16 %v822
      %v867 = vunpack.c.l.b16 %v823
      %v868 = vunpack.c.h.b16 %v823
      %v869 = vunpack.c.l.b16 %v824
      %v870 = vunpack.c.h.b16 %v824
      %v871 = vunpack.c.l.b16 %v825
      %v872 = vunpack.c.h.b16 %v825
      %v873 = vunpack.c.l.b16 %v826
      %v874 = vunpack.c.h.b16 %v826
      %v875 = vpack.c.b16 %v843, %v843
      %v876 = vpack.c.b16 %v844, %v844
      %v877 = vpack.c.b16 %v845, %v845
      %v878 = vpack.c.b16 %v846, %v846
      %v879 = vpack.c.b16 %v847, %v847
      %v880 = vpack.c.b16 %v848, %v848
      %v881 = vpack.c.b16 %v849, %v849
      %v882 = vpack.c.b16 %v850, %v850
      %v883 = vpack.c.b16 %v851, %v851
      %v884 = vpack.c.b16 %v852, %v852
      %v885 = vpack.c.b16 %v853, %v853
      %v886 = vpack.c.b16 %v854, %v854
      %v887 = vpack.c.b16 %v855, %v855
      %v888 = vpack.c.b16 %v856, %v856
      %v889 = vpack.c.b16 %v857, %v857
      %v890 = vpack.c.b16 %v858, %v858
      %v891 = vpack.c.b16 %v859, %v859
      %v892 = vpack.c.b16 %v860, %v860
      %v893 = vpack.c.b16 %v861, %v861
      %v894 = vpack.c.b16 %v862, %v862
      %v895 = vpack.c.b16 %v863, %v863
      %v896 = vpack.c.b16 %v864, %v864
      %v897 = vpack.c.b16 %v865, %v865
      %v898 = vpack.c.b16 %v866, %v866
      %v899 = vpack.c.b16 %v867, %v867
      %v900 = vpack.c.b16 %v868, %v868
      %v901 = vpack.c.b16 %v869, %v869
      %v902 = vpack.c.b16 %v870, %v870
      %v903 = vpack.c.b16 %v871, %v871
      %v904 = vpack.c.b16 %v872, %v872
      %v905 = vpack.c.b16 %v873, %v873
      %v906 = vpack.c.b16 %v874, %v874
      %vm907 = vsmask.f32 4368
      %vm908 = vmor %vm711, %vm907
      %v910 = vshrl.u32 %v875, 16
      %v912 = vrot.slane %v910, 7
      %v913 = vshll.u32 %v875, 16
      %v915 = vor.u32 %v912, %v913
      %v916 = vrot.slane %v912, 4
      %v918 = vshrl.u32 %v876, 16
      %v920 = vrot.slane %v918, 7
      %v921 = vshll.u32 %v876, 16
      %v923 = vor.u32 %v920, %v921
      %v924 = vsel %vm908, %v916, %v923
      %v925 = vrot.slane %v920, 4
      %v927 = vshrl.u32 %v877, 16
      %v929 = vrot.slane %v927, 7
      %v930 = vshll.u32 %v877, 16
      %v932 = vor.u32 %v929, %v930
      %v933 = vrot.slane %v929, 4
      %v935 = vshrl.u32 %v878, 16
      %v937 = vrot.slane %v935, 7
      %v938 = vshll.u32 %v878, 16
      %v940 = vor.u32 %v937, %v938
      %v941 = vsel %vm908, %v933, %v940
      %v942 = vrot.slane %v937, 4
      %v944 = vshrl.u32 %v879, 16
      %v946 = vrot.slane %v944, 7
      %v947 = vshll.u32 %v879, 16
      %v949 = vor.u32 %v946, %v947
      %v950 = vrot.slane %v946, 4
      %v952 = vshrl.u32 %v880, 16
      %v954 = vrot.slane %v952, 7
      %v955 = vshll.u32 %v880, 16
      %v957 = vor.u32 %v954, %v955
      %v958 = vsel %vm908, %v950, %v957
      %v959 = vrot.slane %v954, 4
      %v961 = vshrl.u32 %v881, 16
      %v963 = vrot.slane %v961, 7
      %v964 = vshll.u32 %v881, 16
      %v966 = vor.u32 %v963, %v964
      %v967 = vrot.slane %v963, 4
      %v969 = vshrl.u32 %v882, 16
      %v971 = vrot.slane %v969, 7
      %v972 = vshll.u32 %v882, 16
      %v974 = vor.u32 %v971, %v972
      %v975 = vsel %vm908, %v967, %v974
      %v976 = vrot.slane %v971, 4
      %v978 = vshrl.u32 %v883, 16
      %v980 = vrot.slane %v978, 7
      %v981 = vshll.u32 %v883, 16
      %v983 = vor.u32 %v980, %v981
      %v984 = vrot.slane %v980, 4
      %v986 = vshrl.u32 %v884, 16
      %v988 = vrot.slane %v986, 7
      %v989 = vshll.u32 %v884, 16
      %v991 = vor.u32 %v988, %v989
      %v992 = vsel %vm908, %v984, %v991
      %v993 = vrot.slane %v988, 4
      %v995 = vshrl.u32 %v885, 16
      %v997 = vrot.slane %v995, 7
      %v998 = vshll.u32 %v885, 16
      %v1000 = vor.u32 %v997, %v998
      %v1001 = vrot.slane %v997, 4
      %v1003 = vshrl.u32 %v886, 16
      %v1005 = vrot.slane %v1003, 7
      %v1006 = vshll.u32 %v886, 16
      %v1008 = vor.u32 %v1005, %v1006
      %v1009 = vsel %vm908, %v1001, %v1008
      %v1010 = vrot.slane %v1005, 4
      %v1012 = vshrl.u32 %v887, 16
      %v1014 = vrot.slane %v1012, 7
      %v1015 = vshll.u32 %v887, 16
      %v1017 = vor.u32 %v1014, %v1015
      %v1018 = vrot.slane %v1014, 4
      %v1020 = vshrl.u32 %v888, 16
      %v1022 = vrot.slane %v1020, 7
      %v1023 = vshll.u32 %v888, 16
      %v1025 = vor.u32 %v1022, %v1023
      %v1026 = vsel %vm908, %v1018, %v1025
      %v1027 = vrot.slane %v1022, 4
      %v1029 = vshrl.u32 %v889, 16
      %v1031 = vrot.slane %v1029, 7
      %v1032 = vshll.u32 %v889, 16
      %v1034 = vor.u32 %v1031, %v1032
      %v1035 = vrot.slane %v1031, 4
      %v1037 = vshrl.u32 %v890, 16
      %v1039 = vrot.slane %v1037, 7
      %v1040 = vshll.u32 %v890, 16
      %v1042 = vor.u32 %v1039, %v1040
      %v1043 = vsel %vm908, %v1035, %v1042
      %v1044 = vrot.slane %v1039, 4
      %v1046 = vshrl.u32 %v891, 16
      %v1048 = vrot.slane %v1046, 7
      %v1049 = vshll.u32 %v891, 16
      %v1051 = vor.u32 %v1048, %v1049
      %v1052 = vrot.slane %v1048, 4
      %v1054 = vshrl.u32 %v892, 16
      %v1056 = vrot.slane %v1054, 7
      %v1057 = vshll.u32 %v892, 16
      %v1059 = vor.u32 %v1056, %v1057
      %v1060 = vsel %vm908, %v1052, %v1059
      %v1061 = vrot.slane %v1056, 4
      %v1063 = vshrl.u32 %v893, 16
      %v1065 = vrot.slane %v1063, 7
      %v1066 = vshll.u32 %v893, 16
      %v1068 = vor.u32 %v1065, %v1066
      %v1069 = vrot.slane %v1065, 4
      %v1071 = vshrl.u32 %v894, 16
      %v1073 = vrot.slane %v1071, 7
      %v1074 = vshll.u32 %v894, 16
      %v1076 = vor.u32 %v1073, %v1074
      %v1077 = vsel %vm908, %v1069, %v1076
      %v1078 = vrot.slane %v1073, 4
      %v1080 = vshrl.u32 %v895, 16
      %v1082 = vrot.slane %v1080, 7
      %v1083 = vshll.u32 %v895, 16
      %v1085 = vor.u32 %v1082, %v1083
      %v1086 = vrot.slane %v1082, 4
      %v1088 = vshrl.u32 %v896, 16
      %v1090 = vrot.slane %v1088, 7
      %v1091 = vshll.u32 %v896, 16
      %v1093 = vor.u32 %v1090, %v1091
      %v1094 = vsel %vm908, %v1086, %v1093
      %v1095 = vrot.slane %v1090, 4
      %v1097 = vshrl.u32 %v897, 16
      %v1099 = vrot.slane %v1097, 7
      %v1100 = vshll.u32 %v897, 16
      %v1102 = vor.u32 %v1099, %v1100
      %v1103 = vrot.slane %v1099, 4
      %v1105 = vshrl.u32 %v898, 16
      %v1107 = vrot.slane %v1105, 7
      %v1108 = vshll.u32 %v898, 16
      %v1110 = vor.u32 %v1107, %v1108
      %v1111 = vsel %vm908, %v1103, %v1110
      %v1112 = vrot.slane %v1107, 4
      %v1114 = vshrl.u32 %v899, 16
      %v1116 = vrot.slane %v1114, 7
      %v1117 = vshll.u32 %v899, 16
      %v1119 = vor.u32 %v1116, %v1117
      %v1120 = vrot.slane %v1116, 4
      %v1122 = vshrl.u32 %v900, 16
      %v1124 = vrot.slane %v1122, 7
      %v1125 = vshll.u32 %v900, 16
      %v1127 = vor.u32 %v1124, %v1125
      %v1128 = vsel %vm908, %v1120, %v1127
      %v1129 = vrot.slane %v1124, 4
      %v1131 = vshrl.u32 %v901, 16
      %v1133 = vrot.slane %v1131, 7
      %v1134 = vshll.u32 %v901, 16
      %v1136 = vor.u32 %v1133, %v1134
      %v1137 = vrot.slane %v1133, 4
      %v1139 = vshrl.u32 %v902, 16
      %v1141 = vrot.slane %v1139, 7
      %v1142 = vshll.u32 %v902, 16
      %v1144 = vor.u32 %v1141, %v1142
      %v1145 = vsel %vm908, %v1137, %v1144
      %v1146 = vrot.slane %v1141, 4
      %v1148 = vshrl.u32 %v903, 16
      %v1150 = vrot.slane %v1148, 7
      %v1151 = vshll.u32 %v903, 16
      %v1153 = vor.u32 %v1150, %v1151
      %v1154 = vrot.slane %v1150, 4
      %v1156 = vshrl.u32 %v904, 16
      %v1158 = vrot.slane %v1156, 7
      %v1159 = vshll.u32 %v904, 16
      %v1161 = vor.u32 %v1158, %v1159
      %v1162 = vsel %vm908, %v1154, %v1161
      %v1163 = vrot.slane %v1158, 4
      %v1165 = vshrl.u32 %v905, 16
      %v1167 = vrot.slane %v1165, 7
      %v1168 = vshll.u32 %v905, 16
      %v1170 = vor.u32 %v1167, %v1168
      %v1171 = vrot.slane %v1167, 4
      %v1173 = vshrl.u32 %v906, 16
      %v1175 = vrot.slane %v1173, 7
      %v1176 = vshll.u32 %v906, 16
      %v1178 = vor.u32 %v1175, %v1176
      %v1179 = vsel %vm908, %v1171, %v1178
      %v1180 = vrot.slane %v1175, 4
      %vm1229 = vcmask 27648
      %vm1230 = vmand %vm1229, %vm761
      %v1231 = vld [vmem:[%s709] sm:$0xf]
      %v1232 = vsel %vm1230, %v915, %v1231
      %1233 = vst [vmem:[%s709] sm:$0xf] %v1232
      %1234 = vst.msk [vmem:[%s709 + $0x4] sm:$0xf] %vm700, %v924
      %v1235 = vld [vmem:[%s709 + $0x8] sm:$0x1]
      %v1236 = vsel %vm712, %v925, %v1235
      %1237 = vst [vmem:[%s709 + $0x8] sm:$0x1] %v1236
      %v1238 = vld [vmem:[%s709 + $0xc] sm:$0xf]
      %v1239 = vsel %vm1230, %v932, %v1238
      %1240 = vst [vmem:[%s709 + $0xc] sm:$0xf] %v1239
      %1241 = vst.msk [vmem:[%s709 + $0x10] sm:$0xf] %vm700, %v941
      %v1242 = vld [vmem:[%s709 + $0x14] sm:$0x1]
      %v1243 = vsel %vm712, %v942, %v1242
      %1244 = vst [vmem:[%s709 + $0x14] sm:$0x1] %v1243
      %v1245 = vld [vmem:[%s709 + $0x18] sm:$0xf]
      %v1246 = vsel %vm1230, %v949, %v1245
      %1247 = vst [vmem:[%s709 + $0x18] sm:$0xf] %v1246
      %1248 = vst.msk [vmem:[%s709 + $0x1c] sm:$0xf] %vm700, %v958
      %v1249 = vld [vmem:[%s709 + $0x20] sm:$0x1]
      %v1250 = vsel %vm712, %v959, %v1249
      %1251 = vst [vmem:[%s709 + $0x20] sm:$0x1] %v1250
      %v1252 = vld [vmem:[%s709 + $0x24] sm:$0xf]
      %v1253 = vsel %vm1230, %v966, %v1252
      %1254 = vst [vmem:[%s709 + $0x24] sm:$0xf] %v1253
      %1255 = vst.msk [vmem:[%s709 + $0x28] sm:$0xf] %vm700, %v975
      %v1256 = vld [vmem:[%s709 + $0x2c] sm:$0x1]
      %v1257 = vsel %vm712, %v976, %v1256
      %1258 = vst [vmem:[%s709 + $0x2c] sm:$0x1] %v1257
      %v1259 = vld [vmem:[%s709 + $0x30] sm:$0xf]
      %v1260 = vsel %vm1230, %v983, %v1259
      %1261 = vst [vmem:[%s709 + $0x30] sm:$0xf] %v1260
      %1262 = vst.msk [vmem:[%s709 + $0x34] sm:$0xf] %vm700, %v992
      %v1263 = vld [vmem:[%s709 + $0x38] sm:$0x1]
      %v1264 = vsel %vm712, %v993, %v1263
      %1265 = vst [vmem:[%s709 + $0x38] sm:$0x1] %v1264
      %v1266 = vld [vmem:[%s709 + $0x3c] sm:$0xf]
      %v1267 = vsel %vm1230, %v1000, %v1266
      %1268 = vst [vmem:[%s709 + $0x3c] sm:$0xf] %v1267
      %1269 = vst.msk [vmem:[%s709 + $0x40] sm:$0xf] %vm700, %v1009
      %v1270 = vld [vmem:[%s709 + $0x44] sm:$0x1]
      %v1271 = vsel %vm712, %v1010, %v1270
      %1272 = vst [vmem:[%s709 + $0x44] sm:$0x1] %v1271
      %v1273 = vld [vmem:[%s709 + $0x48] sm:$0xf]
      %v1274 = vsel %vm1230, %v1017, %v1273
      %1275 = vst [vmem:[%s709 + $0x48] sm:$0xf] %v1274
      %1276 = vst.msk [vmem:[%s709 + $0x4c] sm:$0xf] %vm700, %v1026
      %v1277 = vld [vmem:[%s709 + $0x50] sm:$0x1]
      %v1278 = vsel %vm712, %v1027, %v1277
      %1279 = vst [vmem:[%s709 + $0x50] sm:$0x1] %v1278
      %v1280 = vld [vmem:[%s709 + $0x54] sm:$0xf]
      %v1281 = vsel %vm1230, %v1034, %v1280
      %1282 = vst [vmem:[%s709 + $0x54] sm:$0xf] %v1281
      %1283 = vst.msk [vmem:[%s709 + $0x58] sm:$0xf] %vm700, %v1043
      %v1284 = vld [vmem:[%s709 + $0x5c] sm:$0x1]
      %v1285 = vsel %vm712, %v1044, %v1284
      %1286 = vst [vmem:[%s709 + $0x5c] sm:$0x1] %v1285
      %v1287 = vld [vmem:[%s709 + $0x60] sm:$0xf]
      %v1288 = vsel %vm1230, %v1051, %v1287
      %1289 = vst [vmem:[%s709 + $0x60] sm:$0xf] %v1288
      %1290 = vst.msk [vmem:[%s709 + $0x64] sm:$0xf] %vm700, %v1060
      %v1291 = vld [vmem:[%s709 + $0x68] sm:$0x1]
      %v1292 = vsel %vm712, %v1061, %v1291
      %1293 = vst [vmem:[%s709 + $0x68] sm:$0x1] %v1292
      %v1294 = vld [vmem:[%s709 + $0x6c] sm:$0xf]
      %v1295 = vsel %vm1230, %v1068, %v1294
      %1296 = vst [vmem:[%s709 + $0x6c] sm:$0xf] %v1295
      %1297 = vst.msk [vmem:[%s709 + $0x70] sm:$0xf] %vm700, %v1077
      %v1298 = vld [vmem:[%s709 + $0x74] sm:$0x1]
      %v1299 = vsel %vm712, %v1078, %v1298
      %1300 = vst [vmem:[%s709 + $0x74] sm:$0x1] %v1299
      %v1301 = vld [vmem:[%s709 + $0x78] sm:$0xf]
      %v1302 = vsel %vm1230, %v1085, %v1301
      %1303 = vst [vmem:[%s709 + $0x78] sm:$0xf] %v1302
      %1304 = vst.msk [vmem:[%s709 + $0x7c] sm:$0xf] %vm700, %v1094
      %v1305 = vld [vmem:[%s709 + $0x80] sm:$0x1]
      %v1306 = vsel %vm712, %v1095, %v1305
      %1307 = vst [vmem:[%s709 + $0x80] sm:$0x1] %v1306
      %v1308 = vld [vmem:[%s709 + $0x84] sm:$0xf]
      %v1309 = vsel %vm1230, %v1102, %v1308
      %1310 = vst [vmem:[%s709 + $0x84] sm:$0xf] %v1309
      %1311 = vst.msk [vmem:[%s709 + $0x88] sm:$0xf] %vm700, %v1111
      %v1312 = vld [vmem:[%s709 + $0x8c] sm:$0x1]
      %v1313 = vsel %vm712, %v1112, %v1312
      %1314 = vst [vmem:[%s709 + $0x8c] sm:$0x1] %v1313
      %v1315 = vld [vmem:[%s709 + $0x90] sm:$0xf]
      %v1316 = vsel %vm1230, %v1119, %v1315
      %1317 = vst [vmem:[%s709 + $0x90] sm:$0xf] %v1316
      %1318 = vst.msk [vmem:[%s709 + $0x94] sm:$0xf] %vm700, %v1128
      %v1319 = vld [vmem:[%s709 + $0x98] sm:$0x1]
      %v1320 = vsel %vm712, %v1129, %v1319
      %1321 = vst [vmem:[%s709 + $0x98] sm:$0x1] %v1320
      %v1322 = vld [vmem:[%s709 + $0x9c] sm:$0xf]
      %v1323 = vsel %vm1230, %v1136, %v1322
      %1324 = vst [vmem:[%s709 + $0x9c] sm:$0xf] %v1323
      %1325 = vst.msk [vmem:[%s709 + $0xa0] sm:$0xf] %vm700, %v1145
      %v1326 = vld [vmem:[%s709 + $0xa4] sm:$0x1]
      %v1327 = vsel %vm712, %v1146, %v1326
      %1328 = vst [vmem:[%s709 + $0xa4] sm:$0x1] %v1327
      %v1329 = vld [vmem:[%s709 + $0xa8] sm:$0xf]
      %v1330 = vsel %vm1230, %v1153, %v1329
      %1331 = vst [vmem:[%s709 + $0xa8] sm:$0xf] %v1330
      %1332 = vst.msk [vmem:[%s709 + $0xac] sm:$0xf] %vm700, %v1162
      %v1333 = vld [vmem:[%s709 + $0xb0] sm:$0x1]
      %v1334 = vsel %vm712, %v1163, %v1333
      %1335 = vst [vmem:[%s709 + $0xb0] sm:$0x1] %v1334
      %v1336 = vld [vmem:[%s709 + $0xb4] sm:$0xf]
      %v1337 = vsel %vm1230, %v1170, %v1336
      %1338 = vst [vmem:[%s709 + $0xb4] sm:$0xf] %v1337
      %1339 = vst.msk [vmem:[%s709 + $0xb8] sm:$0xf] %vm700, %v1179
      %v1340 = vld [vmem:[%s709 + $0xbc] sm:$0x1]
      %v1341 = vsel %vm712, %v1180, %v1340
      %1342 = vst [vmem:[%s709 + $0xbc] sm:$0x1] %v1341
      %v1343 = vld [vmem:[#allocation2] sm:$0xf]
      %v1344 = vld [vmem:[#allocation2 + $0x4] sm:$0xf]
      %v1345 = vld [vmem:[#allocation2 + $0xc] sm:$0xf]
      %v1346 = vld [vmem:[#allocation2 + $0x10] sm:$0xf]
      %v1347 = vld [vmem:[#allocation2 + $0x18] sm:$0xf]
      %v1348 = vld [vmem:[#allocation2 + $0x1c] sm:$0xf]
      %v1349 = vld [vmem:[#allocation2 + $0x24] sm:$0xf]
      %v1350 = vld [vmem:[#allocation2 + $0x28] sm:$0xf]
      %v1351 = vld [vmem:[#allocation2 + $0x30] sm:$0xf]
      %v1352 = vld [vmem:[#allocation2 + $0x34] sm:$0xf]
      %v1353 = vld [vmem:[#allocation2 + $0x3c] sm:$0xf]
      %v1354 = vld [vmem:[#allocation2 + $0x40] sm:$0xf]
      %v1355 = vld [vmem:[#allocation2 + $0x48] sm:$0xf]
      %v1356 = vld [vmem:[#allocation2 + $0x4c] sm:$0xf]
      %v1357 = vld [vmem:[#allocation2 + $0x54] sm:$0xf]
      %v1358 = vld [vmem:[#allocation2 + $0x58] sm:$0xf]
      %v1359 = vld [vmem:[#allocation2 + $0x60] sm:$0xf]
      %v1360 = vld [vmem:[#allocation2 + $0x64] sm:$0xf]
      %v1361 = vld [vmem:[#allocation2 + $0x6c] sm:$0xf]
      %v1362 = vld [vmem:[#allocation2 + $0x70] sm:$0xf]
      %v1363 = vld [vmem:[#allocation2 + $0x78] sm:$0xf]
      %v1364 = vld [vmem:[#allocation2 + $0x7c] sm:$0xf]
      %v1365 = vld [vmem:[#allocation2 + $0x84] sm:$0xf]
      %v1366 = vld [vmem:[#allocation2 + $0x88] sm:$0xf]
      %v1367 = vld [vmem:[#allocation2 + $0x90] sm:$0xf]
      %v1368 = vld [vmem:[#allocation2 + $0x94] sm:$0xf]
      %v1369 = vld [vmem:[#allocation2 + $0x9c] sm:$0xf]
      %v1370 = vld [vmem:[#allocation2 + $0xa0] sm:$0xf]
      %v1371 = vld [vmem:[#allocation2 + $0xa8] sm:$0xf]
      %v1372 = vld [vmem:[#allocation2 + $0xac] sm:$0xf]
      %v1373 = vld [vmem:[#allocation2 + $0xb4] sm:$0xf]
      %v1374 = vld [vmem:[#allocation2 + $0xb8] sm:$0xf]
      %v1375 = vld [vmem:[#allocation2 + $0x8] sm:$0x1]
      %v1376 = vld [vmem:[#allocation2 + $0x14] sm:$0x1]
      %v1377 = vld [vmem:[#allocation2 + $0x20] sm:$0x1]
      %v1378 = vld [vmem:[#allocation2 + $0x2c] sm:$0x1]
      %v1379 = vld [vmem:[#allocation2 + $0x38] sm:$0x1]
      %v1380 = vld [vmem:[#allocation2 + $0x44] sm:$0x1]
      %v1381 = vld [vmem:[#allocation2 + $0x50] sm:$0x1]
      %v1382 = vld [vmem:[#allocation2 + $0x5c] sm:$0x1]
      %v1383 = vld [vmem:[#allocation2 + $0x68] sm:$0x1]
      %v1384 = vld [vmem:[#allocation2 + $0x74] sm:$0x1]
      %v1385 = vld [vmem:[#allocation2 + $0x80] sm:$0x1]
      %v1386 = vld [vmem:[#allocation2 + $0x8c] sm:$0x1]
      %v1387 = vld [vmem:[#allocation2 + $0x98] sm:$0x1]
      %v1388 = vld [vmem:[#allocation2 + $0xa4] sm:$0x1]
      %v1389 = vld [vmem:[#allocation2 + $0xb0] sm:$0x1]
      %v1390 = vld [vmem:[#allocation2 + $0xbc] sm:$0x1]
      %v1391 = vld [vmem:[#allocation2] sm:$0xe]
      %v1392 = vld [vmem:[#allocation2 + $0xc] sm:$0xe]
      %v1393 = vld [vmem:[#allocation2 + $0x18] sm:$0xe]
      %v1394 = vld [vmem:[#allocation2 + $0x24] sm:$0xe]
      %v1395 = vld [vmem:[#allocation2 + $0x30] sm:$0xe]
      %v1396 = vld [vmem:[#allocation2 + $0x3c] sm:$0xe]
      %v1397 = vld [vmem:[#allocation2 + $0x48] sm:$0xe]
      %v1398 = vld [vmem:[#allocation2 + $0x54] sm:$0xe]
      %v1399 = vld [vmem:[#allocation2 + $0x60] sm:$0xe]
      %v1400 = vld [vmem:[#allocation2 + $0x6c] sm:$0xe]
      %v1401 = vld [vmem:[#allocation2 + $0x78] sm:$0xe]
      %v1402 = vld [vmem:[#allocation2 + $0x84] sm:$0xe]
      %v1403 = vld [vmem:[#allocation2 + $0x90] sm:$0xe]
      %v1404 = vld [vmem:[#allocation2 + $0x9c] sm:$0xe]
      %v1405 = vld [vmem:[#allocation2 + $0xa8] sm:$0xe]
      %v1406 = vld [vmem:[#allocation2 + $0xb4] sm:$0xe]
      %v1407 = vld [vmem:[%s709] sm:$0xf]
      %v1408 = vld [vmem:[%s709 + $0x4] sm:$0xf]
      %v1409 = vld [vmem:[%s709 + $0xc] sm:$0xf]
      %v1410 = vld [vmem:[%s709 + $0x10] sm:$0xf]
      %v1411 = vld [vmem:[%s709 + $0x18] sm:$0xf]
      %v1412 = vld [vmem:[%s709 + $0x1c] sm:$0xf]
      %v1413 = vld [vmem:[%s709 + $0x24] sm:$0xf]
      %v1414 = vld [vmem:[%s709 + $0x28] sm:$0xf]
      %v1415 = vld [vmem:[%s709 + $0x30] sm:$0xf]
      %v1416 = vld [vmem:[%s709 + $0x34] sm:$0xf]
      %v1417 = vld [vmem:[%s709 + $0x3c] sm:$0xf]
      %v1418 = vld [vmem:[%s709 + $0x40] sm:$0xf]
      %v1419 = vld [vmem:[%s709 + $0x48] sm:$0xf]
      %v1420 = vld [vmem:[%s709 + $0x4c] sm:$0xf]
      %v1421 = vld [vmem:[%s709 + $0x54] sm:$0xf]
      %v1422 = vld [vmem:[%s709 + $0x58] sm:$0xf]
      %v1423 = vld [vmem:[%s709 + $0x60] sm:$0xf]
      %v1424 = vld [vmem:[%s709 + $0x64] sm:$0xf]
      %v1425 = vld [vmem:[%s709 + $0x6c] sm:$0xf]
      %v1426 = vld [vmem:[%s709 + $0x70] sm:$0xf]
      %v1427 = vld [vmem:[%s709 + $0x78] sm:$0xf]
      %v1428 = vld [vmem:[%s709 + $0x7c] sm:$0xf]
      %v1429 = vld [vmem:[%s709 + $0x84] sm:$0xf]
      %v1430 = vld [vmem:[%s709 + $0x88] sm:$0xf]
      %v1431 = vld [vmem:[%s709 + $0x90] sm:$0xf]
      %v1432 = vld [vmem:[%s709 + $0x94] sm:$0xf]
      %v1433 = vld [vmem:[%s709 + $0x9c] sm:$0xf]
      %v1434 = vld [vmem:[%s709 + $0xa0] sm:$0xf]
      %v1435 = vld [vmem:[%s709 + $0xa8] sm:$0xf]
      %v1436 = vld [vmem:[%s709 + $0xac] sm:$0xf]
      %v1437 = vld [vmem:[%s709 + $0xb4] sm:$0xf]
      %v1438 = vld [vmem:[%s709 + $0xb8] sm:$0xf]
      %v1439 = vld [vmem:[%s709 + $0x8] sm:$0x1]
      %v1440 = vld [vmem:[%s709 + $0x14] sm:$0x1]
      %v1441 = vld [vmem:[%s709 + $0x20] sm:$0x1]
      %v1442 = vld [vmem:[%s709 + $0x2c] sm:$0x1]
      %v1443 = vld [vmem:[%s709 + $0x38] sm:$0x1]
      %v1444 = vld [vmem:[%s709 + $0x44] sm:$0x1]
      %v1445 = vld [vmem:[%s709 + $0x50] sm:$0x1]
      %v1446 = vld [vmem:[%s709 + $0x5c] sm:$0x1]
      %v1447 = vld [vmem:[%s709 + $0x68] sm:$0x1]
      %v1448 = vld [vmem:[%s709 + $0x74] sm:$0x1]
      %v1449 = vld [vmem:[%s709 + $0x80] sm:$0x1]
      %v1450 = vld [vmem:[%s709 + $0x8c] sm:$0x1]
      %v1451 = vld [vmem:[%s709 + $0x98] sm:$0x1]
      %v1452 = vld [vmem:[%s709 + $0xa4] sm:$0x1]
      %v1453 = vld [vmem:[%s709 + $0xb0] sm:$0x1]
      %v1454 = vld [vmem:[%s709 + $0xbc] sm:$0x1]
      %v1455 = vld [vmem:[%s709] sm:$0xe]
      %v1456 = vld [vmem:[%s709 + $0xc] sm:$0xe]
      %v1457 = vld [vmem:[%s709 + $0x18] sm:$0xe]
      %v1458 = vld [vmem:[%s709 + $0x24] sm:$0xe]
      %v1459 = vld [vmem:[%s709 + $0x30] sm:$0xe]
      %v1460 = vld [vmem:[%s709 + $0x3c] sm:$0xe]
      %v1461 = vld [vmem:[%s709 + $0x48] sm:$0xe]
      %v1462 = vld [vmem:[%s709 + $0x54] sm:$0xe]
      %v1463 = vld [vmem:[%s709 + $0x60] sm:$0xe]
      %v1464 = vld [vmem:[%s709 + $0x6c] sm:$0xe]
      %v1465 = vld [vmem:[%s709 + $0x78] sm:$0xe]
      %v1466 = vld [vmem:[%s709 + $0x84] sm:$0xe]
      %v1467 = vld [vmem:[%s709 + $0x90] sm:$0xe]
      %v1468 = vld [vmem:[%s709 + $0x9c] sm:$0xe]
      %v1469 = vld [vmem:[%s709 + $0xa8] sm:$0xe]
      %v1470 = vld [vmem:[%s709 + $0xb4] sm:$0xe]
      %s1471 = scalar_lea.vmem [#allocation2], 24
      %v1472 = vld [vmem:[%s1471] sm:$0xf]
      %v1473 = vld [vmem:[%s1471 + $0x4] sm:$0xf]
      %v1474 = vld [vmem:[%s1471 + $0xc] sm:$0xf]
      %v1475 = vld [vmem:[%s1471 + $0x10] sm:$0xf]
      %v1476 = vld [vmem:[%s1471 + $0x18] sm:$0xf]
      %v1477 = vld [vmem:[%s1471 + $0x1c] sm:$0xf]
      %v1478 = vld [vmem:[%s1471 + $0x24] sm:$0xf]
      %v1479 = vld [vmem:[%s1471 + $0x28] sm:$0xf]
      %v1480 = vld [vmem:[%s1471 + $0x30] sm:$0xf]
      %v1481 = vld [vmem:[%s1471 + $0x34] sm:$0xf]
      %v1482 = vld [vmem:[%s1471 + $0x3c] sm:$0xf]
      %v1483 = vld [vmem:[%s1471 + $0x40] sm:$0xf]
      %v1484 = vld [vmem:[%s1471 + $0x48] sm:$0xf]
      %v1485 = vld [vmem:[%s1471 + $0x4c] sm:$0xf]
      %v1486 = vld [vmem:[%s1471 + $0x54] sm:$0xf]
      %v1487 = vld [vmem:[%s1471 + $0x58] sm:$0xf]
      %v1488 = vld [vmem:[%s1471 + $0x60] sm:$0xf]
      %v1489 = vld [vmem:[%s1471 + $0x64] sm:$0xf]
      %v1490 = vld [vmem:[%s1471 + $0x6c] sm:$0xf]
      %v1491 = vld [vmem:[%s1471 + $0x70] sm:$0xf]
      %v1492 = vld [vmem:[%s1471 + $0x78] sm:$0xf]
      %v1493 = vld [vmem:[%s1471 + $0x7c] sm:$0xf]
      %v1494 = vld [vmem:[%s1471 + $0x84] sm:$0xf]
      %v1495 = vld [vmem:[%s1471 + $0x88] sm:$0xf]
      %v1496 = vld [vmem:[%s1471 + $0x90] sm:$0xf]
      %v1497 = vld [vmem:[%s1471 + $0x94] sm:$0xf]
      %v1498 = vld [vmem:[%s1471 + $0x9c] sm:$0xf]
      %v1499 = vld [vmem:[%s1471 + $0xa0] sm:$0xf]
      %v1500 = vld [vmem:[%s1471 + $0xa8] sm:$0xf]
      %v1501 = vld [vmem:[%s1471 + $0xac] sm:$0xf]
      %v1502 = vld [vmem:[%s1471 + $0xb4] sm:$0xf]
      %v1503 = vld [vmem:[%s1471 + $0xb8] sm:$0xf]
      %v1504 = vld [vmem:[%s1471 + $0x8] sm:$0x1]
      %v1505 = vld [vmem:[%s1471 + $0x14] sm:$0x1]
      %v1506 = vld [vmem:[%s1471 + $0x20] sm:$0x1]
      %v1507 = vld [vmem:[%s1471 + $0x2c] sm:$0x1]
      %v1508 = vld [vmem:[%s1471 + $0x38] sm:$0x1]
      %v1509 = vld [vmem:[%s1471 + $0x44] sm:$0x1]
      %v1510 = vld [vmem:[%s1471 + $0x50] sm:$0x1]
      %v1511 = vld [vmem:[%s1471 + $0x5c] sm:$0x1]
      %v1512 = vld [vmem:[%s1471 + $0x68] sm:$0x1]
      %v1513 = vld [vmem:[%s1471 + $0x74] sm:$0x1]
      %v1514 = vld [vmem:[%s1471 + $0x80] sm:$0x1]
      %v1515 = vld [vmem:[%s1471 + $0x8c] sm:$0x1]
      %v1516 = vld [vmem:[%s1471 + $0x98] sm:$0x1]
      %v1517 = vld [vmem:[%s1471 + $0xa4] sm:$0x1]
      %v1518 = vld [vmem:[%s1471 + $0xb0] sm:$0x1]
      %v1519 = vld [vmem:[%s1471 + $0xbc] sm:$0x1]
      %v1520 = vld [vmem:[%s1471] sm:$0xe]
      %v1521 = vld [vmem:[%s1471 + $0xc] sm:$0xe]
      %v1522 = vld [vmem:[%s1471 + $0x18] sm:$0xe]
      %v1523 = vld [vmem:[%s1471 + $0x24] sm:$0xe]
      %v1524 = vld [vmem:[%s1471 + $0x30] sm:$0xe]
      %v1525 = vld [vmem:[%s1471 + $0x3c] sm:$0xe]
      %v1526 = vld [vmem:[%s1471 + $0x48] sm:$0xe]
      %v1527 = vld [vmem:[%s1471 + $0x54] sm:$0xe]
      %v1528 = vld [vmem:[%s1471 + $0x60] sm:$0xe]
      %v1529 = vld [vmem:[%s1471 + $0x6c] sm:$0xe]
      %v1530 = vld [vmem:[%s1471 + $0x78] sm:$0xe]
      %v1531 = vld [vmem:[%s1471 + $0x84] sm:$0xe]
      %v1532 = vld [vmem:[%s1471 + $0x90] sm:$0xe]
      %v1533 = vld [vmem:[%s1471 + $0x9c] sm:$0xe]
      %v1534 = vld [vmem:[%s1471 + $0xa8] sm:$0xe]
      %v1535 = vld [vmem:[%s1471 + $0xb4] sm:$0xe]
      %v1568 = vunpack.c.l.b16 %v1343
      %v1569 = vunpack.c.l.b16 %v1344
      %v1570 = vunpack.c.l.b16 %v1345
      %v1571 = vunpack.c.l.b16 %v1346
      %v1572 = vunpack.c.l.b16 %v1347
      %v1573 = vunpack.c.l.b16 %v1348
      %v1574 = vunpack.c.l.b16 %v1349
      %v1575 = vunpack.c.l.b16 %v1350
      %v1576 = vunpack.c.l.b16 %v1351
      %v1577 = vunpack.c.l.b16 %v1352
      %v1578 = vunpack.c.l.b16 %v1353
      %v1579 = vunpack.c.l.b16 %v1354
      %v1580 = vunpack.c.l.b16 %v1355
      %v1581 = vunpack.c.l.b16 %v1356
      %v1582 = vunpack.c.l.b16 %v1357
      %v1583 = vunpack.c.l.b16 %v1358
      %v1584 = vunpack.c.l.b16 %v1359
      %v1585 = vunpack.c.l.b16 %v1360
      %v1586 = vunpack.c.l.b16 %v1361
      %v1587 = vunpack.c.l.b16 %v1362
      %v1588 = vunpack.c.l.b16 %v1363
      %v1589 = vunpack.c.l.b16 %v1364
      %v1590 = vunpack.c.l.b16 %v1365
      %v1591 = vunpack.c.l.b16 %v1366
      %v1592 = vunpack.c.l.b16 %v1367
      %v1593 = vunpack.c.l.b16 %v1368
      %v1594 = vunpack.c.l.b16 %v1369
      %v1595 = vunpack.c.l.b16 %v1370
      %v1596 = vunpack.c.l.b16 %v1371
      %v1597 = vunpack.c.l.b16 %v1372
      %v1598 = vunpack.c.l.b16 %v1373
      %v1599 = vunpack.c.l.b16 %v1374
      %v1600 = vpack.c.b16 %v1569, %v1568
      %v1601 = vpack.c.b16 %v1571, %v1570
      %v1602 = vpack.c.b16 %v1573, %v1572
      %v1603 = vpack.c.b16 %v1575, %v1574
      %v1604 = vpack.c.b16 %v1577, %v1576
      %v1605 = vpack.c.b16 %v1579, %v1578
      %v1606 = vpack.c.b16 %v1581, %v1580
      %v1607 = vpack.c.b16 %v1583, %v1582
      %v1608 = vpack.c.b16 %v1585, %v1584
      %v1609 = vpack.c.b16 %v1587, %v1586
      %v1610 = vpack.c.b16 %v1589, %v1588
      %v1611 = vpack.c.b16 %v1591, %v1590
      %v1612 = vpack.c.b16 %v1593, %v1592
      %v1613 = vpack.c.b16 %v1595, %v1594
      %v1614 = vpack.c.b16 %v1597, %v1596
      %v1615 = vpack.c.b16 %v1599, %v1598
      %v1632 = vunpack.c.l.b16 %v1375
      %v1633 = vunpack.c.l.b16 %v1376
      %v1634 = vunpack.c.l.b16 %v1377
      %v1635 = vunpack.c.l.b16 %v1378
      %v1636 = vunpack.c.l.b16 %v1379
      %v1637 = vunpack.c.l.b16 %v1380
      %v1638 = vunpack.c.l.b16 %v1381
      %v1639 = vunpack.c.l.b16 %v1382
      %v1640 = vunpack.c.l.b16 %v1383
      %v1641 = vunpack.c.l.b16 %v1384
      %v1642 = vunpack.c.l.b16 %v1385
      %v1643 = vunpack.c.l.b16 %v1386
      %v1644 = vunpack.c.l.b16 %v1387
      %v1645 = vunpack.c.l.b16 %v1388
      %v1646 = vunpack.c.l.b16 %v1389
      %v1647 = vunpack.c.l.b16 %v1390
      %v1648 = vpack.c.b16 %v1632, %v1632
      %v1649 = vpack.c.b16 %v1633, %v1633
      %v1650 = vpack.c.b16 %v1634, %v1634
      %v1651 = vpack.c.b16 %v1635, %v1635
      %v1652 = vpack.c.b16 %v1636, %v1636
      %v1653 = vpack.c.b16 %v1637, %v1637
      %v1654 = vpack.c.b16 %v1638, %v1638
      %v1655 = vpack.c.b16 %v1639, %v1639
      %v1656 = vpack.c.b16 %v1640, %v1640
      %v1657 = vpack.c.b16 %v1641, %v1641
      %v1658 = vpack.c.b16 %v1642, %v1642
      %v1659 = vpack.c.b16 %v1643, %v1643
      %v1660 = vpack.c.b16 %v1644, %v1644
      %v1661 = vpack.c.b16 %v1645, %v1645
      %v1662 = vpack.c.b16 %v1646, %v1646
      %v1663 = vpack.c.b16 %v1647, %v1647
      %vm1664 = vsmask.f32 7424
      %v1666 = vshrl.u32 %v1600, 16
      %v1668 = vshll.u32 %v1600, 16
      %v1670 = vrot.slane %v1668, 1
      %v1671 = vor.u32 %v1666, %v1670
      %v1673 = vshll.u32 %v1648, 16
      %v1675 = vrot.slane %v1673, 1
      %v1676 = vsel %vm1664, %v1671, %v1675
      %v1678 = vshrl.u32 %v1601, 16
      %v1680 = vshll.u32 %v1601, 16
      %v1682 = vrot.slane %v1680, 1
      %v1683 = vor.u32 %v1678, %v1682
      %v1685 = vshll.u32 %v1649, 16
      %v1687 = vrot.slane %v1685, 1
      %v1688 = vsel %vm1664, %v1683, %v1687
      %v1690 = vshrl.u32 %v1602, 16
      %v1692 = vshll.u32 %v1602, 16
      %v1694 = vrot.slane %v1692, 1
      %v1695 = vor.u32 %v1690, %v1694
      %v1697 = vshll.u32 %v1650, 16
      %v1699 = vrot.slane %v1697, 1
      %v1700 = vsel %vm1664, %v1695, %v1699
      %v1702 = vshrl.u32 %v1603, 16
      %v1704 = vshll.u32 %v1603, 16
      %v1706 = vrot.slane %v1704, 1
      %v1707 = vor.u32 %v1702, %v1706
      %v1709 = vshll.u32 %v1651, 16
      %v1711 = vrot.slane %v1709, 1
      %v1712 = vsel %vm1664, %v1707, %v1711
      %v1714 = vshrl.u32 %v1604, 16
      %v1716 = vshll.u32 %v1604, 16
      %v1718 = vrot.slane %v1716, 1
      %v1719 = vor.u32 %v1714, %v1718
      %v1721 = vshll.u32 %v1652, 16
      %v1723 = vrot.slane %v1721, 1
      %v1724 = vsel %vm1664, %v1719, %v1723
      %v1726 = vshrl.u32 %v1605, 16
      %v1728 = vshll.u32 %v1605, 16
      %v1730 = vrot.slane %v1728, 1
      %v1731 = vor.u32 %v1726, %v1730
      %v1733 = vshll.u32 %v1653, 16
      %v1735 = vrot.slane %v1733, 1
      %v1736 = vsel %vm1664, %v1731, %v1735
      %v1738 = vshrl.u32 %v1606, 16
      %v1740 = vshll.u32 %v1606, 16
      %v1742 = vrot.slane %v1740, 1
      %v1743 = vor.u32 %v1738, %v1742
      %v1745 = vshll.u32 %v1654, 16
      %v1747 = vrot.slane %v1745, 1
      %v1748 = vsel %vm1664, %v1743, %v1747
      %v1750 = vshrl.u32 %v1607, 16
      %v1752 = vshll.u32 %v1607, 16
      %v1754 = vrot.slane %v1752, 1
      %v1755 = vor.u32 %v1750, %v1754
      %v1757 = vshll.u32 %v1655, 16
      %v1759 = vrot.slane %v1757, 1
      %v1760 = vsel %vm1664, %v1755, %v1759
      %v1762 = vshrl.u32 %v1608, 16
      %v1764 = vshll.u32 %v1608, 16
      %v1766 = vrot.slane %v1764, 1
      %v1767 = vor.u32 %v1762, %v1766
      %v1769 = vshll.u32 %v1656, 16
      %v1771 = vrot.slane %v1769, 1
      %v1772 = vsel %vm1664, %v1767, %v1771
      %v1774 = vshrl.u32 %v1609, 16
      %v1776 = vshll.u32 %v1609, 16
      %v1778 = vrot.slane %v1776, 1
      %v1779 = vor.u32 %v1774, %v1778
      %v1781 = vshll.u32 %v1657, 16
      %v1783 = vrot.slane %v1781, 1
      %v1784 = vsel %vm1664, %v1779, %v1783
      %v1786 = vshrl.u32 %v1610, 16
      %v1788 = vshll.u32 %v1610, 16
      %v1790 = vrot.slane %v1788, 1
      %v1791 = vor.u32 %v1786, %v1790
      %v1793 = vshll.u32 %v1658, 16
      %v1795 = vrot.slane %v1793, 1
      %v1796 = vsel %vm1664, %v1791, %v1795
      %v1798 = vshrl.u32 %v1611, 16
      %v1800 = vshll.u32 %v1611, 16
      %v1802 = vrot.slane %v1800, 1
      %v1803 = vor.u32 %v1798, %v1802
      %v1805 = vshll.u32 %v1659, 16
      %v1807 = vrot.slane %v1805, 1
      %v1808 = vsel %vm1664, %v1803, %v1807
      %v1810 = vshrl.u32 %v1612, 16
      %v1812 = vshll.u32 %v1612, 16
      %v1814 = vrot.slane %v1812, 1
      %v1815 = vor.u32 %v1810, %v1814
      %v1817 = vshll.u32 %v1660, 16
      %v1819 = vrot.slane %v1817, 1
      %v1820 = vsel %vm1664, %v1815, %v1819
      %v1822 = vshrl.u32 %v1613, 16
      %v1824 = vshll.u32 %v1613, 16
      %v1826 = vrot.slane %v1824, 1
      %v1827 = vor.u32 %v1822, %v1826
      %v1829 = vshll.u32 %v1661, 16
      %v1831 = vrot.slane %v1829, 1
      %v1832 = vsel %vm1664, %v1827, %v1831
      %v1834 = vshrl.u32 %v1614, 16
      %v1836 = vshll.u32 %v1614, 16
      %v1838 = vrot.slane %v1836, 1
      %v1839 = vor.u32 %v1834, %v1838
      %v1841 = vshll.u32 %v1662, 16
      %v1843 = vrot.slane %v1841, 1
      %v1844 = vsel %vm1664, %v1839, %v1843
      %v1846 = vshrl.u32 %v1615, 16
      %v1848 = vshll.u32 %v1615, 16
      %v1850 = vrot.slane %v1848, 1
      %v1851 = vor.u32 %v1846, %v1850
      %v1853 = vshll.u32 %v1663, 16
      %v1855 = vrot.slane %v1853, 1
      %v1856 = vsel %vm1664, %v1851, %v1855
      %1857 = vrot.lane.b32.xlu0 %v1676, 4
      %v1858 = vpop.permute.xlu0 %1857
      %1859 = vrot.lane.b32.xlu0 %v1688, 4
      %v1860 = vpop.permute.xlu0 %1859
      %1861 = vrot.lane.b32.xlu0 %v1700, 4
      %v1862 = vpop.permute.xlu0 %1861
      %1863 = vrot.lane.b32.xlu0 %v1712, 4
      %v1864 = vpop.permute.xlu0 %1863
      %1865 = vrot.lane.b32.xlu0 %v1724, 4
      %v1866 = vpop.permute.xlu0 %1865
      %1867 = vrot.lane.b32.xlu0 %v1736, 4
      %v1868 = vpop.permute.xlu0 %1867
      %1869 = vrot.lane.b32.xlu0 %v1748, 4
      %v1870 = vpop.permute.xlu0 %1869
      %1871 = vrot.lane.b32.xlu0 %v1760, 4
      %v1872 = vpop.permute.xlu0 %1871
      %1873 = vrot.lane.b32.xlu0 %v1772, 4
      %v1874 = vpop.permute.xlu0 %1873
      %1875 = vrot.lane.b32.xlu0 %v1784, 4
      %v1876 = vpop.permute.xlu0 %1875
      %1877 = vrot.lane.b32.xlu0 %v1796, 4
      %v1878 = vpop.permute.xlu0 %1877
      %1879 = vrot.lane.b32.xlu0 %v1808, 4
      %v1880 = vpop.permute.xlu0 %1879
      %1881 = vrot.lane.b32.xlu0 %v1820, 4
      %v1882 = vpop.permute.xlu0 %1881
      %1883 = vrot.lane.b32.xlu0 %v1832, 4
      %v1884 = vpop.permute.xlu0 %1883
      %1885 = vrot.lane.b32.xlu0 %v1844, 4
      %v1886 = vpop.permute.xlu0 %1885
      %1887 = vrot.lane.b32.xlu0 %v1856, 4
      %v1888 = vpop.permute.xlu0 %1887
      %v1905 = vunpack.c.l.b16 %v1391
      %v1906 = vunpack.c.l.b16 %v1392
      %v1907 = vunpack.c.l.b16 %v1393
      %v1908 = vunpack.c.l.b16 %v1394
      %v1909 = vunpack.c.l.b16 %v1395
      %v1910 = vunpack.c.l.b16 %v1396
      %v1911 = vunpack.c.l.b16 %v1397
      %v1912 = vunpack.c.l.b16 %v1398
      %v1913 = vunpack.c.l.b16 %v1399
      %v1914 = vunpack.c.l.b16 %v1400
      %v1915 = vunpack.c.l.b16 %v1401
      %v1916 = vunpack.c.l.b16 %v1402
      %v1917 = vunpack.c.l.b16 %v1403
      %v1918 = vunpack.c.l.b16 %v1404
      %v1919 = vunpack.c.l.b16 %v1405
      %v1920 = vunpack.c.l.b16 %v1406
      %v1921 = vpack.c.b16 %v1569, %v1905
      %v1922 = vpack.c.b16 %v1571, %v1906
      %v1923 = vpack.c.b16 %v1573, %v1907
      %v1924 = vpack.c.b16 %v1575, %v1908
      %v1925 = vpack.c.b16 %v1577, %v1909
      %v1926 = vpack.c.b16 %v1579, %v1910
      %v1927 = vpack.c.b16 %v1581, %v1911
      %v1928 = vpack.c.b16 %v1583, %v1912
      %v1929 = vpack.c.b16 %v1585, %v1913
      %v1930 = vpack.c.b16 %v1587, %v1914
      %v1931 = vpack.c.b16 %v1589, %v1915
      %v1932 = vpack.c.b16 %v1591, %v1916
      %v1933 = vpack.c.b16 %v1593, %v1917
      %v1934 = vpack.c.b16 %v1595, %v1918
      %v1935 = vpack.c.b16 %v1597, %v1919
      %v1936 = vpack.c.b16 %v1599, %v1920
      %vm1937 = vcmask 1046528
      %v1938 = vrot.slane %v1921, 1
      %v1939 = vrot.slane %v1648, 1
      %v1940 = vsel %vm1937, %v1938, %v1939
      %v1941 = vrot.slane %v1922, 1
      %v1942 = vrot.slane %v1649, 1
      %v1943 = vsel %vm1937, %v1941, %v1942
      %v1944 = vrot.slane %v1923, 1
      %v1945 = vrot.slane %v1650, 1
      %v1946 = vsel %vm1937, %v1944, %v1945
      %v1947 = vrot.slane %v1924, 1
      %v1948 = vrot.slane %v1651, 1
      %v1949 = vsel %vm1937, %v1947, %v1948
      %v1950 = vrot.slane %v1925, 1
      %v1951 = vrot.slane %v1652, 1
      %v1952 = vsel %vm1937, %v1950, %v1951
      %v1953 = vrot.slane %v1926, 1
      %v1954 = vrot.slane %v1653, 1
      %v1955 = vsel %vm1937, %v1953, %v1954
      %v1956 = vrot.slane %v1927, 1
      %v1957 = vrot.slane %v1654, 1
      %v1958 = vsel %vm1937, %v1956, %v1957
      %v1959 = vrot.slane %v1928, 1
      %v1960 = vrot.slane %v1655, 1
      %v1961 = vsel %vm1937, %v1959, %v1960
      %v1962 = vrot.slane %v1929, 1
      %v1963 = vrot.slane %v1656, 1
      %v1964 = vsel %vm1937, %v1962, %v1963
      %v1965 = vrot.slane %v1930, 1
      %v1966 = vrot.slane %v1657, 1
      %v1967 = vsel %vm1937, %v1965, %v1966
      %v1968 = vrot.slane %v1931, 1
      %v1969 = vrot.slane %v1658, 1
      %v1970 = vsel %vm1937, %v1968, %v1969
      %v1971 = vrot.slane %v1932, 1
      %v1972 = vrot.slane %v1659, 1
      %v1973 = vsel %vm1937, %v1971, %v1972
      %v1974 = vrot.slane %v1933, 1
      %v1975 = vrot.slane %v1660, 1
      %v1976 = vsel %vm1937, %v1974, %v1975
      %v1977 = vrot.slane %v1934, 1
      %v1978 = vrot.slane %v1661, 1
      %v1979 = vsel %vm1937, %v1977, %v1978
      %v1980 = vrot.slane %v1935, 1
      %v1981 = vrot.slane %v1662, 1
      %v1982 = vsel %vm1937, %v1980, %v1981
      %v1983 = vrot.slane %v1936, 1
      %v1984 = vrot.slane %v1663, 1
      %v1985 = vsel %vm1937, %v1983, %v1984
      %1986 = vrot.lane.b32.xlu0 %v1940, 8
      %v1987 = vpop.permute.xlu0 %1986
      %1988 = vrot.lane.b32.xlu0 %v1943, 8
      %v1989 = vpop.permute.xlu0 %1988
      %1990 = vrot.lane.b32.xlu0 %v1946, 8
      %v1991 = vpop.permute.xlu0 %1990
      %1992 = vrot.lane.b32.xlu0 %v1949, 8
      %v1993 = vpop.permute.xlu0 %1992
      %1994 = vrot.lane.b32.xlu0 %v1952, 8
      %v1995 = vpop.permute.xlu0 %1994
      %1996 = vrot.lane.b32.xlu0 %v1955, 8
      %v1997 = vpop.permute.xlu0 %1996
      %1998 = vrot.lane.b32.xlu0 %v1958, 8
      %v1999 = vpop.permute.xlu0 %1998
      %2000 = vrot.lane.b32.xlu0 %v1961, 8
      %v2001 = vpop.permute.xlu0 %2000
      %2002 = vrot.lane.b32.xlu0 %v1964, 8
      %v2003 = vpop.permute.xlu0 %2002
      %2004 = vrot.lane.b32.xlu0 %v1967, 8
      %v2005 = vpop.permute.xlu0 %2004
      %2006 = vrot.lane.b32.xlu0 %v1970, 8
      %v2007 = vpop.permute.xlu0 %2006
      %2008 = vrot.lane.b32.xlu0 %v1973, 8
      %v2009 = vpop.permute.xlu0 %2008
      %2010 = vrot.lane.b32.xlu0 %v1976, 8
      %v2011 = vpop.permute.xlu0 %2010
      %2012 = vrot.lane.b32.xlu0 %v1979, 8
      %v2013 = vpop.permute.xlu0 %2012
      %2014 = vrot.lane.b32.xlu0 %v1982, 8
      %v2015 = vpop.permute.xlu0 %2014
      %2016 = vrot.lane.b32.xlu0 %v1985, 8
      %v2017 = vpop.permute.xlu0 %2016
      %v2050 = vunpack.c.l.b16 %v1407
      %v2051 = vunpack.c.l.b16 %v1408
      %v2052 = vunpack.c.l.b16 %v1409
      %v2053 = vunpack.c.l.b16 %v1410
      %v2054 = vunpack.c.l.b16 %v1411
      %v2055 = vunpack.c.l.b16 %v1412
      %v2056 = vunpack.c.l.b16 %v1413
      %v2057 = vunpack.c.l.b16 %v1414
      %v2058 = vunpack.c.l.b16 %v1415
      %v2059 = vunpack.c.l.b16 %v1416
      %v2060 = vunpack.c.l.b16 %v1417
      %v2061 = vunpack.c.l.b16 %v1418
      %v2062 = vunpack.c.l.b16 %v1419
      %v2063 = vunpack.c.l.b16 %v1420
      %v2064 = vunpack.c.l.b16 %v1421
      %v2065 = vunpack.c.l.b16 %v1422
      %v2066 = vunpack.c.l.b16 %v1423
      %v2067 = vunpack.c.l.b16 %v1424
      %v2068 = vunpack.c.l.b16 %v1425
      %v2069 = vunpack.c.l.b16 %v1426
      %v2070 = vunpack.c.l.b16 %v1427
      %v2071 = vunpack.c.l.b16 %v1428
      %v2072 = vunpack.c.l.b16 %v1429
      %v2073 = vunpack.c.l.b16 %v1430
      %v2074 = vunpack.c.l.b16 %v1431
      %v2075 = vunpack.c.l.b16 %v1432
      %v2076 = vunpack.c.l.b16 %v1433
      %v2077 = vunpack.c.l.b16 %v1434
      %v2078 = vunpack.c.l.b16 %v1435
      %v2079 = vunpack.c.l.b16 %v1436
      %v2080 = vunpack.c.l.b16 %v1437
      %v2081 = vunpack.c.l.b16 %v1438
      %v2082 = vpack.c.b16 %v2051, %v2050
      %v2083 = vpack.c.b16 %v2053, %v2052
      %v2084 = vpack.c.b16 %v2055, %v2054
      %v2085 = vpack.c.b16 %v2057, %v2056
      %v2086 = vpack.c.b16 %v2059, %v2058
      %v2087 = vpack.c.b16 %v2061, %v2060
      %v2088 = vpack.c.b16 %v2063, %v2062
      %v2089 = vpack.c.b16 %v2065, %v2064
      %v2090 = vpack.c.b16 %v2067, %v2066
      %v2091 = vpack.c.b16 %v2069, %v2068
      %v2092 = vpack.c.b16 %v2071, %v2070
      %v2093 = vpack.c.b16 %v2073, %v2072
      %v2094 = vpack.c.b16 %v2075, %v2074
      %v2095 = vpack.c.b16 %v2077, %v2076
      %v2096 = vpack.c.b16 %v2079, %v2078
      %v2097 = vpack.c.b16 %v2081, %v2080
      %2098 = vrot.lane.b32.xlu0 %v2082, 12
      %v2099 = vpop.permute.xlu0 %2098
      %2100 = vrot.lane.b32.xlu0 %v2083, 12
      %v2101 = vpop.permute.xlu0 %2100
      %2102 = vrot.lane.b32.xlu0 %v2084, 12
      %v2103 = vpop.permute.xlu0 %2102
      %2104 = vrot.lane.b32.xlu0 %v2085, 12
      %v2105 = vpop.permute.xlu0 %2104
      %2106 = vrot.lane.b32.xlu0 %v2086, 12
      %v2107 = vpop.permute.xlu0 %2106
      %2108 = vrot.lane.b32.xlu0 %v2087, 12
      %v2109 = vpop.permute.xlu0 %2108
      %2110 = vrot.lane.b32.xlu0 %v2088, 12
      %v2111 = vpop.permute.xlu0 %2110
      %2112 = vrot.lane.b32.xlu0 %v2089, 12
      %v2113 = vpop.permute.xlu0 %2112
      %2114 = vrot.lane.b32.xlu0 %v2090, 12
      %v2115 = vpop.permute.xlu0 %2114
      %2116 = vrot.lane.b32.xlu0 %v2091, 12
      %v2117 = vpop.permute.xlu0 %2116
      %2118 = vrot.lane.b32.xlu0 %v2092, 12
      %v2119 = vpop.permute.xlu0 %2118
      %2120 = vrot.lane.b32.xlu0 %v2093, 12
      %v2121 = vpop.permute.xlu0 %2120
      %2122 = vrot.lane.b32.xlu0 %v2094, 12
      %v2123 = vpop.permute.xlu0 %2122
      %2124 = vrot.lane.b32.xlu0 %v2095, 12
      %v2125 = vpop.permute.xlu0 %2124
      %2126 = vrot.lane.b32.xlu0 %v2096, 12
      %v2127 = vpop.permute.xlu0 %2126
      %2128 = vrot.lane.b32.xlu0 %v2097, 12
      %v2129 = vpop.permute.xlu0 %2128
      %v2146 = vunpack.c.l.b16 %v1439
      %v2147 = vunpack.c.l.b16 %v1440
      %v2148 = vunpack.c.l.b16 %v1441
      %v2149 = vunpack.c.l.b16 %v1442
      %v2150 = vunpack.c.l.b16 %v1443
      %v2151 = vunpack.c.l.b16 %v1444
      %v2152 = vunpack.c.l.b16 %v1445
      %v2153 = vunpack.c.l.b16 %v1446
      %v2154 = vunpack.c.l.b16 %v1447
      %v2155 = vunpack.c.l.b16 %v1448
      %v2156 = vunpack.c.l.b16 %v1449
      %v2157 = vunpack.c.l.b16 %v1450
      %v2158 = vunpack.c.l.b16 %v1451
      %v2159 = vunpack.c.l.b16 %v1452
      %v2160 = vunpack.c.l.b16 %v1453
      %v2161 = vunpack.c.l.b16 %v1454
      %v2162 = vpack.c.b16 %v2146, %v2146
      %v2163 = vpack.c.b16 %v2147, %v2147
      %v2164 = vpack.c.b16 %v2148, %v2148
      %v2165 = vpack.c.b16 %v2149, %v2149
      %v2166 = vpack.c.b16 %v2150, %v2150
      %v2167 = vpack.c.b16 %v2151, %v2151
      %v2168 = vpack.c.b16 %v2152, %v2152
      %v2169 = vpack.c.b16 %v2153, %v2153
      %v2170 = vpack.c.b16 %v2154, %v2154
      %v2171 = vpack.c.b16 %v2155, %v2155
      %v2172 = vpack.c.b16 %v2156, %v2156
      %v2173 = vpack.c.b16 %v2157, %v2157
      %v2174 = vpack.c.b16 %v2158, %v2158
      %v2175 = vpack.c.b16 %v2159, %v2159
      %v2176 = vpack.c.b16 %v2160, %v2160
      %v2177 = vpack.c.b16 %v2161, %v2161
      %v2179 = vshrl.u32 %v2082, 16
      %v2181 = vshll.u32 %v2082, 16
      %v2183 = vrot.slane %v2181, 1
      %v2184 = vor.u32 %v2179, %v2183
      %v2186 = vshll.u32 %v2162, 16
      %v2188 = vrot.slane %v2186, 1
      %v2189 = vsel %vm1664, %v2184, %v2188
      %v2191 = vshrl.u32 %v2083, 16
      %v2193 = vshll.u32 %v2083, 16
      %v2195 = vrot.slane %v2193, 1
      %v2196 = vor.u32 %v2191, %v2195
      %v2198 = vshll.u32 %v2163, 16
      %v2200 = vrot.slane %v2198, 1
      %v2201 = vsel %vm1664, %v2196, %v2200
      %v2203 = vshrl.u32 %v2084, 16
      %v2205 = vshll.u32 %v2084, 16
      %v2207 = vrot.slane %v2205, 1
      %v2208 = vor.u32 %v2203, %v2207
      %v2210 = vshll.u32 %v2164, 16
      %v2212 = vrot.slane %v2210, 1
      %v2213 = vsel %vm1664, %v2208, %v2212
      %v2215 = vshrl.u32 %v2085, 16
      %v2217 = vshll.u32 %v2085, 16
      %v2219 = vrot.slane %v2217, 1
      %v2220 = vor.u32 %v2215, %v2219
      %v2222 = vshll.u32 %v2165, 16
      %v2224 = vrot.slane %v2222, 1
      %v2225 = vsel %vm1664, %v2220, %v2224
      %v2227 = vshrl.u32 %v2086, 16
      %v2229 = vshll.u32 %v2086, 16
      %v2231 = vrot.slane %v2229, 1
      %v2232 = vor.u32 %v2227, %v2231
      %v2234 = vshll.u32 %v2166, 16
      %v2236 = vrot.slane %v2234, 1
      %v2237 = vsel %vm1664, %v2232, %v2236
      %v2239 = vshrl.u32 %v2087, 16
      %v2241 = vshll.u32 %v2087, 16
      %v2243 = vrot.slane %v2241, 1
      %v2244 = vor.u32 %v2239, %v2243
      %v2246 = vshll.u32 %v2167, 16
      %v2248 = vrot.slane %v2246, 1
      %v2249 = vsel %vm1664, %v2244, %v2248
      %v2251 = vshrl.u32 %v2088, 16
      %v2253 = vshll.u32 %v2088, 16
      %v2255 = vrot.slane %v2253, 1
      %v2256 = vor.u32 %v2251, %v2255
      %v2258 = vshll.u32 %v2168, 16
      %v2260 = vrot.slane %v2258, 1
      %v2261 = vsel %vm1664, %v2256, %v2260
      %v2263 = vshrl.u32 %v2089, 16
      %v2265 = vshll.u32 %v2089, 16
      %v2267 = vrot.slane %v2265, 1
      %v2268 = vor.u32 %v2263, %v2267
      %v2270 = vshll.u32 %v2169, 16
      %v2272 = vrot.slane %v2270, 1
      %v2273 = vsel %vm1664, %v2268, %v2272
      %v2275 = vshrl.u32 %v2090, 16
      %v2277 = vshll.u32 %v2090, 16
      %v2279 = vrot.slane %v2277, 1
      %v2280 = vor.u32 %v2275, %v2279
      %v2282 = vshll.u32 %v2170, 16
      %v2284 = vrot.slane %v2282, 1
      %v2285 = vsel %vm1664, %v2280, %v2284
      %v2287 = vshrl.u32 %v2091, 16
      %v2289 = vshll.u32 %v2091, 16
      %v2291 = vrot.slane %v2289, 1
      %v2292 = vor.u32 %v2287, %v2291
      %v2294 = vshll.u32 %v2171, 16
      %v2296 = vrot.slane %v2294, 1
      %v2297 = vsel %vm1664, %v2292, %v2296
      %v2299 = vshrl.u32 %v2092, 16
      %v2301 = vshll.u32 %v2092, 16
      %v2303 = vrot.slane %v2301, 1
      %v2304 = vor.u32 %v2299, %v2303
      %v2306 = vshll.u32 %v2172, 16
      %v2308 = vrot.slane %v2306, 1
      %v2309 = vsel %vm1664, %v2304, %v2308
      %v2311 = vshrl.u32 %v2093, 16
      %v2313 = vshll.u32 %v2093, 16
      %v2315 = vrot.slane %v2313, 1
      %v2316 = vor.u32 %v2311, %v2315
      %v2318 = vshll.u32 %v2173, 16
      %v2320 = vrot.slane %v2318, 1
      %v2321 = vsel %vm1664, %v2316, %v2320
      %v2323 = vshrl.u32 %v2094, 16
      %v2325 = vshll.u32 %v2094, 16
      %v2327 = vrot.slane %v2325, 1
      %v2328 = vor.u32 %v2323, %v2327
      %v2330 = vshll.u32 %v2174, 16
      %v2332 = vrot.slane %v2330, 1
      %v2333 = vsel %vm1664, %v2328, %v2332
      %v2335 = vshrl.u32 %v2095, 16
      %v2337 = vshll.u32 %v2095, 16
      %v2339 = vrot.slane %v2337, 1
      %v2340 = vor.u32 %v2335, %v2339
      %v2342 = vshll.u32 %v2175, 16
      %v2344 = vrot.slane %v2342, 1
      %v2345 = vsel %vm1664, %v2340, %v2344
      %v2347 = vshrl.u32 %v2096, 16
      %v2349 = vshll.u32 %v2096, 16
      %v2351 = vrot.slane %v2349, 1
      %v2352 = vor.u32 %v2347, %v2351
      %v2354 = vshll.u32 %v2176, 16
      %v2356 = vrot.slane %v2354, 1
      %v2357 = vsel %vm1664, %v2352, %v2356
      %v2359 = vshrl.u32 %v2097, 16
      %v2361 = vshll.u32 %v2097, 16
      %v2363 = vrot.slane %v2361, 1
      %v2364 = vor.u32 %v2359, %v2363
      %v2366 = vshll.u32 %v2177, 16
      %v2368 = vrot.slane %v2366, 1
      %v2369 = vsel %vm1664, %v2364, %v2368
      %2370 = vrot.lane.b32.xlu0 %v2189, 16
      %v2371 = vpop.permute.xlu0 %2370
      %2372 = vrot.lane.b32.xlu0 %v2201, 16
      %v2373 = vpop.permute.xlu0 %2372
      %2374 = vrot.lane.b32.xlu0 %v2213, 16
      %v2375 = vpop.permute.xlu0 %2374
      %2376 = vrot.lane.b32.xlu0 %v2225, 16
      %v2377 = vpop.permute.xlu0 %2376
      %2378 = vrot.lane.b32.xlu0 %v2237, 16
      %v2379 = vpop.permute.xlu0 %2378
      %2380 = vrot.lane.b32.xlu0 %v2249, 16
      %v2381 = vpop.permute.xlu0 %2380
      %2382 = vrot.lane.b32.xlu0 %v2261, 16
      %v2383 = vpop.permute.xlu0 %2382
      %2384 = vrot.lane.b32.xlu0 %v2273, 16
      %v2385 = vpop.permute.xlu0 %2384
      %2386 = vrot.lane.b32.xlu0 %v2285, 16
      %v2387 = vpop.permute.xlu0 %2386
      %2388 = vrot.lane.b32.xlu0 %v2297, 16
      %v2389 = vpop.permute.xlu0 %2388
      %2390 = vrot.lane.b32.xlu0 %v2309, 16
      %v2391 = vpop.permute.xlu0 %2390
      %2392 = vrot.lane.b32.xlu0 %v2321, 16
      %v2393 = vpop.permute.xlu0 %2392
      %2394 = vrot.lane.b32.xlu0 %v2333, 16
      %v2395 = vpop.permute.xlu0 %2394
      %2396 = vrot.lane.b32.xlu0 %v2345, 16
      %v2397 = vpop.permute.xlu0 %2396
      %2398 = vrot.lane.b32.xlu0 %v2357, 16
      %v2399 = vpop.permute.xlu0 %2398
      %2400 = vrot.lane.b32.xlu0 %v2369, 16
      %v2401 = vpop.permute.xlu0 %2400
      %v2418 = vunpack.c.l.b16 %v1455
      %v2419 = vunpack.c.l.b16 %v1456
      %v2420 = vunpack.c.l.b16 %v1457
      %v2421 = vunpack.c.l.b16 %v1458
      %v2422 = vunpack.c.l.b16 %v1459
      %v2423 = vunpack.c.l.b16 %v1460
      %v2424 = vunpack.c.l.b16 %v1461
      %v2425 = vunpack.c.l.b16 %v1462
      %v2426 = vunpack.c.l.b16 %v1463
      %v2427 = vunpack.c.l.b16 %v1464
      %v2428 = vunpack.c.l.b16 %v1465
      %v2429 = vunpack.c.l.b16 %v1466
      %v2430 = vunpack.c.l.b16 %v1467
      %v2431 = vunpack.c.l.b16 %v1468
      %v2432 = vunpack.c.l.b16 %v1469
      %v2433 = vunpack.c.l.b16 %v1470
      %v2434 = vpack.c.b16 %v2051, %v2418
      %v2435 = vpack.c.b16 %v2053, %v2419
      %v2436 = vpack.c.b16 %v2055, %v2420
      %v2437 = vpack.c.b16 %v2057, %v2421
      %v2438 = vpack.c.b16 %v2059, %v2422
      %v2439 = vpack.c.b16 %v2061, %v2423
      %v2440 = vpack.c.b16 %v2063, %v2424
      %v2441 = vpack.c.b16 %v2065, %v2425
      %v2442 = vpack.c.b16 %v2067, %v2426
      %v2443 = vpack.c.b16 %v2069, %v2427
      %v2444 = vpack.c.b16 %v2071, %v2428
      %v2445 = vpack.c.b16 %v2073, %v2429
      %v2446 = vpack.c.b16 %v2075, %v2430
      %v2447 = vpack.c.b16 %v2077, %v2431
      %v2448 = vpack.c.b16 %v2079, %v2432
      %v2449 = vpack.c.b16 %v2081, %v2433
      %v2450 = vrot.slane %v2434, 1
      %v2451 = vrot.slane %v2162, 1
      %v2452 = vsel %vm1937, %v2450, %v2451
      %v2453 = vrot.slane %v2435, 1
      %v2454 = vrot.slane %v2163, 1
      %v2455 = vsel %vm1937, %v2453, %v2454
      %v2456 = vrot.slane %v2436, 1
      %v2457 = vrot.slane %v2164, 1
      %v2458 = vsel %vm1937, %v2456, %v2457
      %v2459 = vrot.slane %v2437, 1
      %v2460 = vrot.slane %v2165, 1
      %v2461 = vsel %vm1937, %v2459, %v2460
      %v2462 = vrot.slane %v2438, 1
      %v2463 = vrot.slane %v2166, 1
      %v2464 = vsel %vm1937, %v2462, %v2463
      %v2465 = vrot.slane %v2439, 1
      %v2466 = vrot.slane %v2167, 1
      %v2467 = vsel %vm1937, %v2465, %v2466
      %v2468 = vrot.slane %v2440, 1
      %v2469 = vrot.slane %v2168, 1
      %v2470 = vsel %vm1937, %v2468, %v2469
      %v2471 = vrot.slane %v2441, 1
      %v2472 = vrot.slane %v2169, 1
      %v2473 = vsel %vm1937, %v2471, %v2472
      %v2474 = vrot.slane %v2442, 1
      %v2475 = vrot.slane %v2170, 1
      %v2476 = vsel %vm1937, %v2474, %v2475
      %v2477 = vrot.slane %v2443, 1
      %v2478 = vrot.slane %v2171, 1
      %v2479 = vsel %vm1937, %v2477, %v2478
      %v2480 = vrot.slane %v2444, 1
      %v2481 = vrot.slane %v2172, 1
      %v2482 = vsel %vm1937, %v2480, %v2481
      %v2483 = vrot.slane %v2445, 1
      %v2484 = vrot.slane %v2173, 1
      %v2485 = vsel %vm1937, %v2483, %v2484
      %v2486 = vrot.slane %v2446, 1
      %v2487 = vrot.slane %v2174, 1
      %v2488 = vsel %vm1937, %v2486, %v2487
      %v2489 = vrot.slane %v2447, 1
      %v2490 = vrot.slane %v2175, 1
      %v2491 = vsel %vm1937, %v2489, %v2490
      %v2492 = vrot.slane %v2448, 1
      %v2493 = vrot.slane %v2176, 1
      %v2494 = vsel %vm1937, %v2492, %v2493
      %v2495 = vrot.slane %v2449, 1
      %v2496 = vrot.slane %v2177, 1
      %v2497 = vsel %vm1937, %v2495, %v2496
      %2498 = vrot.lane.b32.xlu0 %v2452, 20
      %v2499 = vpop.permute.xlu0 %2498
      %2500 = vrot.lane.b32.xlu0 %v2455, 20
      %v2501 = vpop.permute.xlu0 %2500
      %2502 = vrot.lane.b32.xlu0 %v2458, 20
      %v2503 = vpop.permute.xlu0 %2502
      %2504 = vrot.lane.b32.xlu0 %v2461, 20
      %v2505 = vpop.permute.xlu0 %2504
      %2506 = vrot.lane.b32.xlu0 %v2464, 20
      %v2507 = vpop.permute.xlu0 %2506
      %2508 = vrot.lane.b32.xlu0 %v2467, 20
      %v2509 = vpop.permute.xlu0 %2508
      %2510 = vrot.lane.b32.xlu0 %v2470, 20
      %v2511 = vpop.permute.xlu0 %2510
      %2512 = vrot.lane.b32.xlu0 %v2473, 20
      %v2513 = vpop.permute.xlu0 %2512
      %2514 = vrot.lane.b32.xlu0 %v2476, 20
      %v2515 = vpop.permute.xlu0 %2514
      %2516 = vrot.lane.b32.xlu0 %v2479, 20
      %v2517 = vpop.permute.xlu0 %2516
      %2518 = vrot.lane.b32.xlu0 %v2482, 20
      %v2519 = vpop.permute.xlu0 %2518
      %2520 = vrot.lane.b32.xlu0 %v2485, 20
      %v2521 = vpop.permute.xlu0 %2520
      %2522 = vrot.lane.b32.xlu0 %v2488, 20
      %v2523 = vpop.permute.xlu0 %2522
      %2524 = vrot.lane.b32.xlu0 %v2491, 20
      %v2525 = vpop.permute.xlu0 %2524
      %2526 = vrot.lane.b32.xlu0 %v2494, 20
      %v2527 = vpop.permute.xlu0 %2526
      %2528 = vrot.lane.b32.xlu0 %v2497, 20
      %v2529 = vpop.permute.xlu0 %2528
      %v2562 = vunpack.c.l.b16 %v1472
      %v2563 = vunpack.c.l.b16 %v1473
      %v2564 = vunpack.c.l.b16 %v1474
      %v2565 = vunpack.c.l.b16 %v1475
      %v2566 = vunpack.c.l.b16 %v1476
      %v2567 = vunpack.c.l.b16 %v1477
      %v2568 = vunpack.c.l.b16 %v1478
      %v2569 = vunpack.c.l.b16 %v1479
      %v2570 = vunpack.c.l.b16 %v1480
      %v2571 = vunpack.c.l.b16 %v1481
      %v2572 = vunpack.c.l.b16 %v1482
      %v2573 = vunpack.c.l.b16 %v1483
      %v2574 = vunpack.c.l.b16 %v1484
      %v2575 = vunpack.c.l.b16 %v1485
      %v2576 = vunpack.c.l.b16 %v1486
      %v2577 = vunpack.c.l.b16 %v1487
      %v2578 = vunpack.c.l.b16 %v1488
      %v2579 = vunpack.c.l.b16 %v1489
      %v2580 = vunpack.c.l.b16 %v1490
      %v2581 = vunpack.c.l.b16 %v1491
      %v2582 = vunpack.c.l.b16 %v1492
      %v2583 = vunpack.c.l.b16 %v1493
      %v2584 = vunpack.c.l.b16 %v1494
      %v2585 = vunpack.c.l.b16 %v1495
      %v2586 = vunpack.c.l.b16 %v1496
      %v2587 = vunpack.c.l.b16 %v1497
      %v2588 = vunpack.c.l.b16 %v1498
      %v2589 = vunpack.c.l.b16 %v1499
      %v2590 = vunpack.c.l.b16 %v1500
      %v2591 = vunpack.c.l.b16 %v1501
      %v2592 = vunpack.c.l.b16 %v1502
      %v2593 = vunpack.c.l.b16 %v1503
      %v2594 = vpack.c.b16 %v2563, %v2562
      %v2595 = vpack.c.b16 %v2565, %v2564
      %v2596 = vpack.c.b16 %v2567, %v2566
      %v2597 = vpack.c.b16 %v2569, %v2568
      %v2598 = vpack.c.b16 %v2571, %v2570
      %v2599 = vpack.c.b16 %v2573, %v2572
      %v2600 = vpack.c.b16 %v2575, %v2574
      %v2601 = vpack.c.b16 %v2577, %v2576
      %v2602 = vpack.c.b16 %v2579, %v2578
      %v2603 = vpack.c.b16 %v2581, %v2580
      %v2604 = vpack.c.b16 %v2583, %v2582
      %v2605 = vpack.c.b16 %v2585, %v2584
      %v2606 = vpack.c.b16 %v2587, %v2586
      %v2607 = vpack.c.b16 %v2589, %v2588
      %v2608 = vpack.c.b16 %v2591, %v2590
      %v2609 = vpack.c.b16 %v2593, %v2592
      %2610 = vrot.lane.b32.xlu0 %v2594, 24
      %v2611 = vpop.permute.xlu0 %2610
      %2612 = vrot.lane.b32.xlu0 %v2595, 24
      %v2613 = vpop.permute.xlu0 %2612
      %2614 = vrot.lane.b32.xlu0 %v2596, 24
      %v2615 = vpop.permute.xlu0 %2614
      %2616 = vrot.lane.b32.xlu0 %v2597, 24
      %v2617 = vpop.permute.xlu0 %2616
      %2618 = vrot.lane.b32.xlu0 %v2598, 24
      %v2619 = vpop.permute.xlu0 %2618
      %2620 = vrot.lane.b32.xlu0 %v2599, 24
      %v2621 = vpop.permute.xlu0 %2620
      %2622 = vrot.lane.b32.xlu0 %v2600, 24
      %v2623 = vpop.permute.xlu0 %2622
      %2624 = vrot.lane.b32.xlu0 %v2601, 24
      %v2625 = vpop.permute.xlu0 %2624
      %2626 = vrot.lane.b32.xlu0 %v2602, 24
      %v2627 = vpop.permute.xlu0 %2626
      %2628 = vrot.lane.b32.xlu0 %v2603, 24
      %v2629 = vpop.permute.xlu0 %2628
      %2630 = vrot.lane.b32.xlu0 %v2604, 24
      %v2631 = vpop.permute.xlu0 %2630
      %2632 = vrot.lane.b32.xlu0 %v2605, 24
      %v2633 = vpop.permute.xlu0 %2632
      %2634 = vrot.lane.b32.xlu0 %v2606, 24
      %v2635 = vpop.permute.xlu0 %2634
      %2636 = vrot.lane.b32.xlu0 %v2607, 24
      %v2637 = vpop.permute.xlu0 %2636
      %2638 = vrot.lane.b32.xlu0 %v2608, 24
      %v2639 = vpop.permute.xlu0 %2638
      %2640 = vrot.lane.b32.xlu0 %v2609, 24
      %v2641 = vpop.permute.xlu0 %2640
      %v2658 = vunpack.c.l.b16 %v1504
      %v2659 = vunpack.c.l.b16 %v1505
      %v2660 = vunpack.c.l.b16 %v1506
      %v2661 = vunpack.c.l.b16 %v1507
      %v2662 = vunpack.c.l.b16 %v1508
      %v2663 = vunpack.c.l.b16 %v1509
      %v2664 = vunpack.c.l.b16 %v1510
      %v2665 = vunpack.c.l.b16 %v1511
      %v2666 = vunpack.c.l.b16 %v1512
      %v2667 = vunpack.c.l.b16 %v1513
      %v2668 = vunpack.c.l.b16 %v1514
      %v2669 = vunpack.c.l.b16 %v1515
      %v2670 = vunpack.c.l.b16 %v1516
      %v2671 = vunpack.c.l.b16 %v1517
      %v2672 = vunpack.c.l.b16 %v1518
      %v2673 = vunpack.c.l.b16 %v1519
      %v2674 = vpack.c.b16 %v2658, %v2658
      %v2675 = vpack.c.b16 %v2659, %v2659
      %v2676 = vpack.c.b16 %v2660, %v2660
      %v2677 = vpack.c.b16 %v2661, %v2661
      %v2678 = vpack.c.b16 %v2662, %v2662
      %v2679 = vpack.c.b16 %v2663, %v2663
      %v2680 = vpack.c.b16 %v2664, %v2664
      %v2681 = vpack.c.b16 %v2665, %v2665
      %v2682 = vpack.c.b16 %v2666, %v2666
      %v2683 = vpack.c.b16 %v2667, %v2667
      %v2684 = vpack.c.b16 %v2668, %v2668
      %v2685 = vpack.c.b16 %v2669, %v2669
      %v2686 = vpack.c.b16 %v2670, %v2670
      %v2687 = vpack.c.b16 %v2671, %v2671
      %v2688 = vpack.c.b16 %v2672, %v2672
      %v2689 = vpack.c.b16 %v2673, %v2673
      %v2691 = vshrl.u32 %v2594, 16
      %v2693 = vshll.u32 %v2594, 16
      %v2695 = vrot.slane %v2693, 1
      %v2696 = vor.u32 %v2691, %v2695
      %v2698 = vshll.u32 %v2674, 16
      %v2700 = vrot.slane %v2698, 1
      %v2701 = vsel %vm1664, %v2696, %v2700
      %v2703 = vshrl.u32 %v2595, 16
      %v2705 = vshll.u32 %v2595, 16
      %v2707 = vrot.slane %v2705, 1
      %v2708 = vor.u32 %v2703, %v2707
      %v2710 = vshll.u32 %v2675, 16
      %v2712 = vrot.slane %v2710, 1
      %v2713 = vsel %vm1664, %v2708, %v2712
      %v2715 = vshrl.u32 %v2596, 16
      %v2717 = vshll.u32 %v2596, 16
      %v2719 = vrot.slane %v2717, 1
      %v2720 = vor.u32 %v2715, %v2719
      %v2722 = vshll.u32 %v2676, 16
      %v2724 = vrot.slane %v2722, 1
      %v2725 = vsel %vm1664, %v2720, %v2724
      %v2727 = vshrl.u32 %v2597, 16
      %v2729 = vshll.u32 %v2597, 16
      %v2731 = vrot.slane %v2729, 1
      %v2732 = vor.u32 %v2727, %v2731
      %v2734 = vshll.u32 %v2677, 16
      %v2736 = vrot.slane %v2734, 1
      %v2737 = vsel %vm1664, %v2732, %v2736
      %v2739 = vshrl.u32 %v2598, 16
      %v2741 = vshll.u32 %v2598, 16
      %v2743 = vrot.slane %v2741, 1
      %v2744 = vor.u32 %v2739, %v2743
      %v2746 = vshll.u32 %v2678, 16
      %v2748 = vrot.slane %v2746, 1
      %v2749 = vsel %vm1664, %v2744, %v2748
      %v2751 = vshrl.u32 %v2599, 16
      %v2753 = vshll.u32 %v2599, 16
      %v2755 = vrot.slane %v2753, 1
      %v2756 = vor.u32 %v2751, %v2755
      %v2758 = vshll.u32 %v2679, 16
      %v2760 = vrot.slane %v2758, 1
      %v2761 = vsel %vm1664, %v2756, %v2760
      %v2763 = vshrl.u32 %v2600, 16
      %v2765 = vshll.u32 %v2600, 16
      %v2767 = vrot.slane %v2765, 1
      %v2768 = vor.u32 %v2763, %v2767
      %v2770 = vshll.u32 %v2680, 16
      %v2772 = vrot.slane %v2770, 1
      %v2773 = vsel %vm1664, %v2768, %v2772
      %v2775 = vshrl.u32 %v2601, 16
      %v2777 = vshll.u32 %v2601, 16
      %v2779 = vrot.slane %v2777, 1
      %v2780 = vor.u32 %v2775, %v2779
      %v2782 = vshll.u32 %v2681, 16
      %v2784 = vrot.slane %v2782, 1
      %v2785 = vsel %vm1664, %v2780, %v2784
      %v2787 = vshrl.u32 %v2602, 16
      %v2789 = vshll.u32 %v2602, 16
      %v2791 = vrot.slane %v2789, 1
      %v2792 = vor.u32 %v2787, %v2791
      %v2794 = vshll.u32 %v2682, 16
      %v2796 = vrot.slane %v2794, 1
      %v2797 = vsel %vm1664, %v2792, %v2796
      %v2799 = vshrl.u32 %v2603, 16
      %v2801 = vshll.u32 %v2603, 16
      %v2803 = vrot.slane %v2801, 1
      %v2804 = vor.u32 %v2799, %v2803
      %v2806 = vshll.u32 %v2683, 16
      %v2808 = vrot.slane %v2806, 1
      %v2809 = vsel %vm1664, %v2804, %v2808
      %v2811 = vshrl.u32 %v2604, 16
      %v2813 = vshll.u32 %v2604, 16
      %v2815 = vrot.slane %v2813, 1
      %v2816 = vor.u32 %v2811, %v2815
      %v2818 = vshll.u32 %v2684, 16
      %v2820 = vrot.slane %v2818, 1
      %v2821 = vsel %vm1664, %v2816, %v2820
      %v2823 = vshrl.u32 %v2605, 16
      %v2825 = vshll.u32 %v2605, 16
      %v2827 = vrot.slane %v2825, 1
      %v2828 = vor.u32 %v2823, %v2827
      %v2830 = vshll.u32 %v2685, 16
      %v2832 = vrot.slane %v2830, 1
      %v2833 = vsel %vm1664, %v2828, %v2832
      %v2835 = vshrl.u32 %v2606, 16
      %v2837 = vshll.u32 %v2606, 16
      %v2839 = vrot.slane %v2837, 1
      %v2840 = vor.u32 %v2835, %v2839
      %v2842 = vshll.u32 %v2686, 16
      %v2844 = vrot.slane %v2842, 1
      %v2845 = vsel %vm1664, %v2840, %v2844
      %v2847 = vshrl.u32 %v2607, 16
      %v2849 = vshll.u32 %v2607, 16
      %v2851 = vrot.slane %v2849, 1
      %v2852 = vor.u32 %v2847, %v2851
      %v2854 = vshll.u32 %v2687, 16
      %v2856 = vrot.slane %v2854, 1
      %v2857 = vsel %vm1664, %v2852, %v2856
      %v2859 = vshrl.u32 %v2608, 16
      %v2861 = vshll.u32 %v2608, 16
      %v2863 = vrot.slane %v2861, 1
      %v2864 = vor.u32 %v2859, %v2863
      %v2866 = vshll.u32 %v2688, 16
      %v2868 = vrot.slane %v2866, 1
      %v2869 = vsel %vm1664, %v2864, %v2868
      %v2871 = vshrl.u32 %v2609, 16
      %v2873 = vshll.u32 %v2609, 16
      %v2875 = vrot.slane %v2873, 1
      %v2876 = vor.u32 %v2871, %v2875
      %v2878 = vshll.u32 %v2689, 16
      %v2880 = vrot.slane %v2878, 1
      %v2881 = vsel %vm1664, %v2876, %v2880
      %2882 = vrot.lane.b32.xlu0 %v2701, 28
      %v2883 = vpop.permute.xlu0 %2882
      %2884 = vrot.lane.b32.xlu0 %v2713, 28
      %v2885 = vpop.permute.xlu0 %2884
      %2886 = vrot.lane.b32.xlu0 %v2725, 28
      %v2887 = vpop.permute.xlu0 %2886
      %2888 = vrot.lane.b32.xlu0 %v2737, 28
      %v2889 = vpop.permute.xlu0 %2888
      %2890 = vrot.lane.b32.xlu0 %v2749, 28
      %v2891 = vpop.permute.xlu0 %2890
      %2892 = vrot.lane.b32.xlu0 %v2761, 28
      %v2893 = vpop.permute.xlu0 %2892
      %2894 = vrot.lane.b32.xlu0 %v2773, 28
      %v2895 = vpop.permute.xlu0 %2894
      %2896 = vrot.lane.b32.xlu0 %v2785, 28
      %v2897 = vpop.permute.xlu0 %2896
      %2898 = vrot.lane.b32.xlu0 %v2797, 28
      %v2899 = vpop.permute.xlu0 %2898
      %2900 = vrot.lane.b32.xlu0 %v2809, 28
      %v2901 = vpop.permute.xlu0 %2900
      %2902 = vrot.lane.b32.xlu0 %v2821, 28
      %v2903 = vpop.permute.xlu0 %2902
      %2904 = vrot.lane.b32.xlu0 %v2833, 28
      %v2905 = vpop.permute.xlu0 %2904
      %2906 = vrot.lane.b32.xlu0 %v2845, 28
      %v2907 = vpop.permute.xlu0 %2906
      %2908 = vrot.lane.b32.xlu0 %v2857, 28
      %v2909 = vpop.permute.xlu0 %2908
      %2910 = vrot.lane.b32.xlu0 %v2869, 28
      %v2911 = vpop.permute.xlu0 %2910
      %2912 = vrot.lane.b32.xlu0 %v2881, 28
      %v2913 = vpop.permute.xlu0 %2912
      %v2930 = vunpack.c.l.b16 %v1520
      %v2931 = vunpack.c.l.b16 %v1521
      %v2932 = vunpack.c.l.b16 %v1522
      %v2933 = vunpack.c.l.b16 %v1523
      %v2934 = vunpack.c.l.b16 %v1524
      %v2935 = vunpack.c.l.b16 %v1525
      %v2936 = vunpack.c.l.b16 %v1526
      %v2937 = vunpack.c.l.b16 %v1527
      %v2938 = vunpack.c.l.b16 %v1528
      %v2939 = vunpack.c.l.b16 %v1529
      %v2940 = vunpack.c.l.b16 %v1530
      %v2941 = vunpack.c.l.b16 %v1531
      %v2942 = vunpack.c.l.b16 %v1532
      %v2943 = vunpack.c.l.b16 %v1533
      %v2944 = vunpack.c.l.b16 %v1534
      %v2945 = vunpack.c.l.b16 %v1535
      %v2946 = vpack.c.b16 %v2563, %v2930
      %v2947 = vpack.c.b16 %v2565, %v2931
      %v2948 = vpack.c.b16 %v2567, %v2932
      %v2949 = vpack.c.b16 %v2569, %v2933
      %v2950 = vpack.c.b16 %v2571, %v2934
      %v2951 = vpack.c.b16 %v2573, %v2935
      %v2952 = vpack.c.b16 %v2575, %v2936
      %v2953 = vpack.c.b16 %v2577, %v2937
      %v2954 = vpack.c.b16 %v2579, %v2938
      %v2955 = vpack.c.b16 %v2581, %v2939
      %v2956 = vpack.c.b16 %v2583, %v2940
      %v2957 = vpack.c.b16 %v2585, %v2941
      %v2958 = vpack.c.b16 %v2587, %v2942
      %v2959 = vpack.c.b16 %v2589, %v2943
      %v2960 = vpack.c.b16 %v2591, %v2944
      %v2961 = vpack.c.b16 %v2593, %v2945
      %v2962 = vrot.slane %v2946, 1
      %v2963 = vrot.slane %v2674, 1
      %v2964 = vsel %vm1937, %v2962, %v2963
      %v2965 = vrot.slane %v2947, 1
      %v2966 = vrot.slane %v2675, 1
      %v2967 = vsel %vm1937, %v2965, %v2966
      %v2968 = vrot.slane %v2948, 1
      %v2969 = vrot.slane %v2676, 1
      %v2970 = vsel %vm1937, %v2968, %v2969
      %v2971 = vrot.slane %v2949, 1
      %v2972 = vrot.slane %v2677, 1
      %v2973 = vsel %vm1937, %v2971, %v2972
      %v2974 = vrot.slane %v2950, 1
      %v2975 = vrot.slane %v2678, 1
      %v2976 = vsel %vm1937, %v2974, %v2975
      %v2977 = vrot.slane %v2951, 1
      %v2978 = vrot.slane %v2679, 1
      %v2979 = vsel %vm1937, %v2977, %v2978
      %v2980 = vrot.slane %v2952, 1
      %v2981 = vrot.slane %v2680, 1
      %v2982 = vsel %vm1937, %v2980, %v2981
      %v2983 = vrot.slane %v2953, 1
      %v2984 = vrot.slane %v2681, 1
      %v2985 = vsel %vm1937, %v2983, %v2984
      %v2986 = vrot.slane %v2954, 1
      %v2987 = vrot.slane %v2682, 1
      %v2988 = vsel %vm1937, %v2986, %v2987
      %v2989 = vrot.slane %v2955, 1
      %v2990 = vrot.slane %v2683, 1
      %v2991 = vsel %vm1937, %v2989, %v2990
      %v2992 = vrot.slane %v2956, 1
      %v2993 = vrot.slane %v2684, 1
      %v2994 = vsel %vm1937, %v2992, %v2993
      %v2995 = vrot.slane %v2957, 1
      %v2996 = vrot.slane %v2685, 1
      %v2997 = vsel %vm1937, %v2995, %v2996
      %v2998 = vrot.slane %v2958, 1
      %v2999 = vrot.slane %v2686, 1
      %v3000 = vsel %vm1937, %v2998, %v2999
      %v3001 = vrot.slane %v2959, 1
      %v3002 = vrot.slane %v2687, 1
      %v3003 = vsel %vm1937, %v3001, %v3002
      %v3004 = vrot.slane %v2960, 1
      %v3005 = vrot.slane %v2688, 1
      %v3006 = vsel %vm1937, %v3004, %v3005
      %v3007 = vrot.slane %v2961, 1
      %v3008 = vrot.slane %v2689, 1
      %v3009 = vsel %vm1937, %v3007, %v3008
      %3010 = vrot.lane.b32.xlu0 %v2964, 32
      %v3011 = vpop.permute.xlu0 %3010
      %3012 = vrot.lane.b32.xlu0 %v2967, 32
      %v3013 = vpop.permute.xlu0 %3012
      %3014 = vrot.lane.b32.xlu0 %v2970, 32
      %v3015 = vpop.permute.xlu0 %3014
      %3016 = vrot.lane.b32.xlu0 %v2973, 32
      %v3017 = vpop.permute.xlu0 %3016
      %3018 = vrot.lane.b32.xlu0 %v2976, 32
      %v3019 = vpop.permute.xlu0 %3018
      %3020 = vrot.lane.b32.xlu0 %v2979, 32
      %v3021 = vpop.permute.xlu0 %3020
      %3022 = vrot.lane.b32.xlu0 %v2982, 32
      %v3023 = vpop.permute.xlu0 %3022
      %3024 = vrot.lane.b32.xlu0 %v2985, 32
      %v3025 = vpop.permute.xlu0 %3024
      %3026 = vrot.lane.b32.xlu0 %v2988, 32
      %v3027 = vpop.permute.xlu0 %3026
      %3028 = vrot.lane.b32.xlu0 %v2991, 32
      %v3029 = vpop.permute.xlu0 %3028
      %3030 = vrot.lane.b32.xlu0 %v2994, 32
      %v3031 = vpop.permute.xlu0 %3030
      %3032 = vrot.lane.b32.xlu0 %v2997, 32
      %v3033 = vpop.permute.xlu0 %3032
      %3034 = vrot.lane.b32.xlu0 %v3000, 32
      %v3035 = vpop.permute.xlu0 %3034
      %3036 = vrot.lane.b32.xlu0 %v3003, 32
      %v3037 = vpop.permute.xlu0 %3036
      %3038 = vrot.lane.b32.xlu0 %v3006, 32
      %v3039 = vpop.permute.xlu0 %3038
      %3040 = vrot.lane.b32.xlu0 %v3009, 32
      %v3041 = vpop.permute.xlu0 %3040
      %vm3042 = vcmask 31744
      %v3044 = vsel %vm3042, %v1600, %v1858
      %v3046 = vsel %vm3042, %v1601, %v1860
      %v3048 = vsel %vm3042, %v1602, %v1862
      %v3050 = vsel %vm3042, %v1603, %v1864
      %v3052 = vsel %vm3042, %v1604, %v1866
      %v3054 = vsel %vm3042, %v1605, %v1868
      %v3056 = vsel %vm3042, %v1606, %v1870
      %v3058 = vsel %vm3042, %v1607, %v1872
      %v3060 = vsel %vm3042, %v1608, %v1874
      %v3062 = vsel %vm3042, %v1609, %v1876
      %v3064 = vsel %vm3042, %v1610, %v1878
      %v3066 = vsel %vm3042, %v1611, %v1880
      %v3068 = vsel %vm3042, %v1612, %v1882
      %v3070 = vsel %vm3042, %v1613, %v1884
      %v3072 = vsel %vm3042, %v1614, %v1886
      %v3074 = vsel %vm3042, %v1615, %v1888
      %v3076 = vsel %vm454, %v3044, %v1987
      %v3078 = vsel %vm454, %v3046, %v1989
      %v3080 = vsel %vm454, %v3048, %v1991
      %v3082 = vsel %vm454, %v3050, %v1993
      %v3084 = vsel %vm454, %v3052, %v1995
      %v3086 = vsel %vm454, %v3054, %v1997
      %v3088 = vsel %vm454, %v3056, %v1999
      %v3090 = vsel %vm454, %v3058, %v2001
      %v3092 = vsel %vm454, %v3060, %v2003
      %v3094 = vsel %vm454, %v3062, %v2005
      %v3096 = vsel %vm454, %v3064, %v2007
      %v3098 = vsel %vm454, %v3066, %v2009
      %v3100 = vsel %vm454, %v3068, %v2011
      %v3102 = vsel %vm454, %v3070, %v2013
      %v3104 = vsel %vm454, %v3072, %v2015
      %v3106 = vsel %vm454, %v3074, %v2017
      %vm3107 = vcmask 97280
      %v3109 = vsel %vm3107, %v3076, %v2099
      %v3111 = vsel %vm3107, %v3078, %v2101
      %v3113 = vsel %vm3107, %v3080, %v2103
      %v3115 = vsel %vm3107, %v3082, %v2105
      %v3117 = vsel %vm3107, %v3084, %v2107
      %v3119 = vsel %vm3107, %v3086, %v2109
      %v3121 = vsel %vm3107, %v3088, %v2111
      %v3123 = vsel %vm3107, %v3090, %v2113
      %v3125 = vsel %vm3107, %v3092, %v2115
      %v3127 = vsel %vm3107, %v3094, %v2117
      %v3129 = vsel %vm3107, %v3096, %v2119
      %v3131 = vsel %vm3107, %v3098, %v2121
      %v3133 = vsel %vm3107, %v3100, %v2123
      %v3135 = vsel %vm3107, %v3102, %v2125
      %v3137 = vsel %vm3107, %v3104, %v2127
      %v3139 = vsel %vm3107, %v3106, %v2129
      %vm3140 = vcmask 130048
      %v3142 = vsel %vm3140, %v3109, %v2371
      %v3144 = vsel %vm3140, %v3111, %v2373
      %v3146 = vsel %vm3140, %v3113, %v2375
      %v3148 = vsel %vm3140, %v3115, %v2377
      %v3150 = vsel %vm3140, %v3117, %v2379
      %v3152 = vsel %vm3140, %v3119, %v2381
      %v3154 = vsel %vm3140, %v3121, %v2383
      %v3156 = vsel %vm3140, %v3123, %v2385
      %v3158 = vsel %vm3140, %v3125, %v2387
      %v3160 = vsel %vm3140, %v3127, %v2389
      %v3162 = vsel %vm3140, %v3129, %v2391
      %v3164 = vsel %vm3140, %v3131, %v2393
      %v3166 = vsel %vm3140, %v3133, %v2395
      %v3168 = vsel %vm3140, %v3135, %v2397
      %v3170 = vsel %vm3140, %v3137, %v2399
      %v3172 = vsel %vm3140, %v3139, %v2401
      %vm3173 = vcmask 162816
      %v3175 = vsel %vm3173, %v3142, %v2499
      %v3177 = vsel %vm3173, %v3144, %v2501
      %v3179 = vsel %vm3173, %v3146, %v2503
      %v3181 = vsel %vm3173, %v3148, %v2505
      %v3183 = vsel %vm3173, %v3150, %v2507
      %v3185 = vsel %vm3173, %v3152, %v2509
      %v3187 = vsel %vm3173, %v3154, %v2511
      %v3189 = vsel %vm3173, %v3156, %v2513
      %v3191 = vsel %vm3173, %v3158, %v2515
      %v3193 = vsel %vm3173, %v3160, %v2517
      %v3195 = vsel %vm3173, %v3162, %v2519
      %v3197 = vsel %vm3173, %v3164, %v2521
      %v3199 = vsel %vm3173, %v3166, %v2523
      %v3201 = vsel %vm3173, %v3168, %v2525
      %v3203 = vsel %vm3173, %v3170, %v2527
      %v3205 = vsel %vm3173, %v3172, %v2529
      %vm3206 = vcmask 195584
      %v3208 = vsel %vm3206, %v3175, %v2611
      %v3210 = vsel %vm3206, %v3177, %v2613
      %v3212 = vsel %vm3206, %v3179, %v2615
      %v3214 = vsel %vm3206, %v3181, %v2617
      %v3216 = vsel %vm3206, %v3183, %v2619
      %v3218 = vsel %vm3206, %v3185, %v2621
      %v3220 = vsel %vm3206, %v3187, %v2623
      %v3222 = vsel %vm3206, %v3189, %v2625
      %v3224 = vsel %vm3206, %v3191, %v2627
      %v3226 = vsel %vm3206, %v3193, %v2629
      %v3228 = vsel %vm3206, %v3195, %v2631
      %v3230 = vsel %vm3206, %v3197, %v2633
      %v3232 = vsel %vm3206, %v3199, %v2635
      %v3234 = vsel %vm3206, %v3201, %v2637
      %v3236 = vsel %vm3206, %v3203, %v2639
      %v3238 = vsel %vm3206, %v3205, %v2641
      %vm3239 = vcmask 228352
      %v3241 = vsel %vm3239, %v3208, %v2883
      %v3243 = vsel %vm3239, %v3210, %v2885
      %v3245 = vsel %vm3239, %v3212, %v2887
      %v3247 = vsel %vm3239, %v3214, %v2889
      %v3249 = vsel %vm3239, %v3216, %v2891
      %v3251 = vsel %vm3239, %v3218, %v2893
      %v3253 = vsel %vm3239, %v3220, %v2895
      %v3255 = vsel %vm3239, %v3222, %v2897
      %v3257 = vsel %vm3239, %v3224, %v2899
      %v3259 = vsel %vm3239, %v3226, %v2901
      %v3261 = vsel %vm3239, %v3228, %v2903
      %v3263 = vsel %vm3239, %v3230, %v2905
      %v3265 = vsel %vm3239, %v3232, %v2907
      %v3267 = vsel %vm3239, %v3234, %v2909
      %v3269 = vsel %vm3239, %v3236, %v2911
      %v3271 = vsel %vm3239, %v3238, %v2913
      %vm3272 = vcmask 261120
      %v3274 = vsel %vm3272, %v3241, %v3011
      %v3276 = vsel %vm3272, %v3243, %v3013
      %v3278 = vsel %vm3272, %v3245, %v3015
      %v3280 = vsel %vm3272, %v3247, %v3017
      %v3282 = vsel %vm3272, %v3249, %v3019
      %v3284 = vsel %vm3272, %v3251, %v3021
      %v3286 = vsel %vm3272, %v3253, %v3023
      %v3288 = vsel %vm3272, %v3255, %v3025
      %v3290 = vsel %vm3272, %v3257, %v3027
      %v3292 = vsel %vm3272, %v3259, %v3029
      %v3294 = vsel %vm3272, %v3261, %v3031
      %v3296 = vsel %vm3272, %v3263, %v3033
      %v3298 = vsel %vm3272, %v3265, %v3035
      %v3300 = vsel %vm3272, %v3267, %v3037
      %v3302 = vsel %vm3272, %v3269, %v3039
      %v3304 = vsel %vm3272, %v3271, %v3041
      %v3305 = vld [vmem:[%s3] sm:$0xf]
      %v3306 = vld [vmem:[%s3 + $0x4] sm:$0xf]
      %v3307 = vld [vmem:[%s3 + $0x8] sm:$0xf]
      %v3308 = vld [vmem:[%s3 + $0xc] sm:$0xf]
      %v3309 = vld [vmem:[%s3 + $0x10] sm:$0x3]
      %v3310 = vld [vmem:[%s4] sm:$0x1]
      %v3312 = vlaneseq
      %v3313 = vshrl.u32 %v3312, 7
      %v3314 = vsub.s32 0, %v3313
      %v3315 = vrot.slane %v3310, %v3314
      %v3322 = vunpack.c.l.b16 %v3305
      %v3323 = vunpack.c.l.b16 %v3306
      %v3324 = vunpack.c.l.b16 %v3307
      %v3325 = vunpack.c.l.b16 %v3308
      %v3326 = vunpack.c.l.b16 %v3309
      %v3327 = vpack.c.b16 %v3323, %v3322
      %v3328 = vpack.c.b16 %v3325, %v3324
      %v3329 = vpack.c.b16 %v3326, %v3326
      %vm3332 = vcmask 293888
      %v3333 = vsel %vm3332, %v3274, 0
      %v3335 = vsel %vm3332, %v3276, 0
      %v3337 = vsel %vm3332, %v3278, 0
      %v3339 = vsel %vm3332, %v3280, 0
      %v3341 = vsel %vm3332, %v3282, 0
      %v3343 = vsel %vm3332, %v3284, 0
      %v3345 = vsel %vm3332, %v3286, 0
      %v3347 = vsel %vm3332, %v3288, 0
      %v3349 = vsel %vm3332, %v3290, 0
      %v3351 = vsel %vm3332, %v3292, 0
      %v3353 = vsel %vm3332, %v3294, 0
      %v3355 = vsel %vm3332, %v3296, 0
      %v3357 = vsel %vm3332, %v3298, 0
      %v3359 = vsel %vm3332, %v3300, 0
      %v3361 = vsel %vm3332, %v3302, 0
      %v3363 = vsel %vm3332, %v3304, 0
      %vm3365 = vcmask 1041408
      %v3367 = vsel %vm3365, %v3329, 0
      %3369 = vmatprep.subr.bf16.mxu0 0
      %3370 = vmatpush1.bf16.msra.mxu0 %v3327
      %3371 = vmatprep.subr.bf16.mxu0 0
      %3372 = vmatpush1.bf16.msra.mxu0 %v3328
      %3373 = vmatprep.subr.bf16.mxu0 0
      %3374 = vmatpush1.bf16.msra.mxu0 %v3367
      %3375 = vmatprep.subr.bf16.mxu0 0
      %3376 = vmatpush1.bf16.msra.mxu0 0
      %3377 = vmatprep.subr.bf16.mxu0 0
      %3378 = vmatpush1.bf16.msra.mxu0 0
      %3379 = vmatprep.subr.bf16.mxu0 0
      %3380 = vmatpush1.bf16.msra.mxu0 0
      %3381 = vmatprep.subr.bf16.mxu0 0
      %3382 = vmatpush1.bf16.msra.mxu0 0
      %3383 = vmatprep.subr.bf16.mxu0 0
      %3384 = vmatpush1.bf16.msra.mxu0 0
      %3385 = vmatprep.subr.bf16.mxu0 0
      %3386 = vmatpush1.bf16.msra.mxu0 0
      %3387 = vmatprep.subr.bf16.mxu0 0
      %3388 = vmatpush1.bf16.msra.mxu0 0
      %3389 = vmatprep.subr.bf16.mxu0 0
      %3390 = vmatpush1.bf16.msra.mxu0 0
      %3391 = vmatprep.subr.bf16.mxu0 0
      %3392 = vmatpush1.bf16.msra.mxu0 0
      %3393 = vmatprep.subr.bf16.mxu0 0
      %3394 = vmatpush1.bf16.msra.mxu0 0
      %3395 = vmatprep.subr.bf16.mxu0 0
      %3396 = vmatpush1.bf16.msra.mxu0 0
      %3397 = vmatprep.subr.bf16.mxu0 0
      %3398 = vmatpush1.bf16.msra.mxu0 0
      %3399 = vmatprep.subr.bf16.mxu0 0
      %3400 = vmatpush1.bf16.msra.mxu0 0
      %3401 = vmatprep.mubr.bf16.mxu0 0
      %3402 = vmatmul.mubr.bf16.gmra.mrb[0].mxu0 %v3333
      %v3403 = vpop.f32.mrb[0].mxu0
      %v3404 = vadd.f32 %v3315, %v3403
      %v3405 = vpop.f32.mrb[0].mxu0
      %v3406 = vpop.f32.mrb[0].mxu0
      %v3407 = vadd.f32 %v3315, %v3406
      %v3408 = vpop.f32.mrb[0].mxu0
      %3409 = vmatprep.mubr.bf16.mxu0 0
      %3410 = vmatmul.mubr.bf16.gmra.mrb[0].mxu0 %v3335
      %v3411 = vpop.f32.mrb[0].mxu0
      %v3412 = vadd.f32 %v3315, %v3411
      %v3413 = vpop.f32.mrb[0].mxu0
      %v3414 = vpop.f32.mrb[0].mxu0
      %v3415 = vadd.f32 %v3315, %v3414
      %v3416 = vpop.f32.mrb[0].mxu0
      %3417 = vmatprep.mubr.bf16.mxu0 0
      %3418 = vmatmul.mubr.bf16.gmra.mrb[0].mxu0 %v3337
      %v3419 = vpop.f32.mrb[0].mxu0
      %v3420 = vadd.f32 %v3315, %v3419
      %v3421 = vpop.f32.mrb[0].mxu0
      %v3422 = vpop.f32.mrb[0].mxu0
      %v3423 = vadd.f32 %v3315, %v3422
      %v3424 = vpop.f32.mrb[0].mxu0
      %3425 = vmatprep.mubr.bf16.mxu0 0
      %3426 = vmatmul.mubr.bf16.gmra.mrb[0].mxu0 %v3339
      %v3427 = vpop.f32.mrb[0].mxu0
      %v3428 = vadd.f32 %v3315, %v3427
      %v3429 = vpop.f32.mrb[0].mxu0
      %v3430 = vpop.f32.mrb[0].mxu0
      %v3431 = vadd.f32 %v3315, %v3430
      %v3432 = vpop.f32.mrb[0].mxu0
      %3433 = vmatprep.mubr.bf16.mxu0 0
      %3434 = vmatmul.mubr.bf16.gmra.mrb[0].mxu0 %v3341
      %v3435 = vpop.f32.mrb[0].mxu0
      %v3436 = vadd.f32 %v3315, %v3435
      %v3437 = vpop.f32.mrb[0].mxu0
      %v3438 = vpop.f32.mrb[0].mxu0
      %v3439 = vadd.f32 %v3315, %v3438
      %v3440 = vpop.f32.mrb[0].mxu0
      %3441 = vmatprep.mubr.bf16.mxu0 0
      %3442 = vmatmul.mubr.bf16.gmra.mrb[0].mxu0 %v3343
      %v3443 = vpop.f32.mrb[0].mxu0
      %v3444 = vadd.f32 %v3315, %v3443
      %v3445 = vpop.f32.mrb[0].mxu0
      %v3446 = vpop.f32.mrb[0].mxu0
      %v3447 = vadd.f32 %v3315, %v3446
      %v3448 = vpop.f32.mrb[0].mxu0
      %3449 = vmatprep.mubr.bf16.mxu0 0
      %3450 = vmatmul.mubr.bf16.gmra.mrb[0].mxu0 %v3345
      %v3451 = vpop.f32.mrb[0].mxu0
      %v3452 = vadd.f32 %v3315, %v3451
      %v3453 = vpop.f32.mrb[0].mxu0
      %v3454 = vpop.f32.mrb[0].mxu0
      %v3455 = vadd.f32 %v3315, %v3454
      %v3456 = vpop.f32.mrb[0].mxu0
      %3457 = vmatprep.mubr.bf16.mxu0 0
      %3458 = vmatmul.mubr.bf16.gmra.mrb[0].mxu0 %v3347
      %v3459 = vpop.f32.mrb[0].mxu0
      %v3460 = vadd.f32 %v3315, %v3459
      %v3461 = vpop.f32.mrb[0].mxu0
      %v3462 = vpop.f32.mrb[0].mxu0
      %v3463 = vadd.f32 %v3315, %v3462
      %v3464 = vpop.f32.mrb[0].mxu0
      %3465 = vmatprep.mubr.bf16.mxu0 0
      %3466 = vmatmul.mubr.bf16.gmra.mrb[0].mxu0 %v3349
      %v3467 = vpop.f32.mrb[0].mxu0
      %v3468 = vadd.f32 %v3315, %v3467
      %v3469 = vpop.f32.mrb[0].mxu0
      %v3470 = vpop.f32.mrb[0].mxu0
      %v3471 = vadd.f32 %v3315, %v3470
      %v3472 = vpop.f32.mrb[0].mxu0
      %3473 = vmatprep.mubr.bf16.mxu0 0
      %3474 = vmatmul.mubr.bf16.gmra.mrb[0].mxu0 %v3351
      %v3475 = vpop.f32.mrb[0].mxu0
      %v3476 = vadd.f32 %v3315, %v3475
      %v3477 = vpop.f32.mrb[0].mxu0
      %v3478 = vpop.f32.mrb[0].mxu0
      %v3479 = vadd.f32 %v3315, %v3478
      %v3480 = vpop.f32.mrb[0].mxu0
      %3481 = vmatprep.mubr.bf16.mxu0 0
      %3482 = vmatmul.mubr.bf16.gmra.mrb[0].mxu0 %v3353
      %v3483 = vpop.f32.mrb[0].mxu0
      %v3484 = vadd.f32 %v3315, %v3483
      %v3485 = vpop.f32.mrb[0].mxu0
      %v3486 = vpop.f32.mrb[0].mxu0
      %v3487 = vadd.f32 %v3315, %v3486
      %v3488 = vpop.f32.mrb[0].mxu0
      %3489 = vmatprep.mubr.bf16.mxu0 0
      %3490 = vmatmul.mubr.bf16.gmra.mrb[0].mxu0 %v3355
      %v3491 = vpop.f32.mrb[0].mxu0
      %v3492 = vadd.f32 %v3315, %v3491
      %v3493 = vpop.f32.mrb[0].mxu0
      %v3494 = vpop.f32.mrb[0].mxu0
      %v3495 = vadd.f32 %v3315, %v3494
      %v3496 = vpop.f32.mrb[0].mxu0
      %3497 = vmatprep.mubr.bf16.mxu0 0
      %3498 = vmatmul.mubr.bf16.gmra.mrb[0].mxu0 %v3357
      %v3499 = vpop.f32.mrb[0].mxu0
      %v3500 = vadd.f32 %v3315, %v3499
      %v3501 = vpop.f32.mrb[0].mxu0
      %v3502 = vpop.f32.mrb[0].mxu0
      %v3503 = vadd.f32 %v3315, %v3502
      %v3504 = vpop.f32.mrb[0].mxu0
      %3505 = vmatprep.mubr.bf16.mxu0 0
      %3506 = vmatmul.mubr.bf16.gmra.mrb[0].mxu0 %v3359
      %v3507 = vpop.f32.mrb[0].mxu0
      %v3508 = vadd.f32 %v3315, %v3507
      %v3509 = vpop.f32.mrb[0].mxu0
      %v3510 = vpop.f32.mrb[0].mxu0
      %v3511 = vadd.f32 %v3315, %v3510
      %v3512 = vpop.f32.mrb[0].mxu0
      %3513 = vmatprep.mubr.bf16.mxu0 0
      %3514 = vmatmul.mubr.bf16.gmra.mrb[0].mxu0 %v3361
      %v3515 = vpop.f32.mrb[0].mxu0
      %v3516 = vadd.f32 %v3315, %v3515
      %v3517 = vpop.f32.mrb[0].mxu0
      %v3518 = vpop.f32.mrb[0].mxu0
      %v3519 = vadd.f32 %v3315, %v3518
      %v3520 = vpop.f32.mrb[0].mxu0
      %3521 = vmatprep.mubr.bf16.mxu0 0
      %3522 = vmatmul.mubr.bf16.gmra.mrb[0].mxu0 %v3363
      %v3523 = vpop.f32.mrb[0].mxu0
      %v3524 = vadd.f32 %v3315, %v3523
      %v3525 = vpop.f32.mrb[0].mxu0
      %v3526 = vpop.f32.mrb[0].mxu0
      %v3527 = vadd.f32 %v3315, %v3526
      %v3528 = vpop.f32.mrb[0].mxu0
      %3529 = vdwg.mxu0
      %v3530 = vmax.f32 %v3404, 0.0
      %v3531 = vmax.f32 %v3407, 0.0
      %v3532 = vmax.f32 %v3412, 0.0
      %v3533 = vmax.f32 %v3415, 0.0
      %v3534 = vmax.f32 %v3420, 0.0
      %v3535 = vmax.f32 %v3423, 0.0
      %v3536 = vmax.f32 %v3428, 0.0
      %v3537 = vmax.f32 %v3431, 0.0
      %v3538 = vmax.f32 %v3436, 0.0
      %v3539 = vmax.f32 %v3439, 0.0
      %v3540 = vmax.f32 %v3444, 0.0
      %v3541 = vmax.f32 %v3447, 0.0
      %v3542 = vmax.f32 %v3452, 0.0
      %v3543 = vmax.f32 %v3455, 0.0
      %v3544 = vmax.f32 %v3460, 0.0
      %v3545 = vmax.f32 %v3463, 0.0
      %v3546 = vmax.f32 %v3468, 0.0
      %v3547 = vmax.f32 %v3471, 0.0
      %v3548 = vmax.f32 %v3476, 0.0
      %v3549 = vmax.f32 %v3479, 0.0
      %v3550 = vmax.f32 %v3484, 0.0
      %v3551 = vmax.f32 %v3487, 0.0
      %v3552 = vmax.f32 %v3492, 0.0
      %v3553 = vmax.f32 %v3495, 0.0
      %v3554 = vmax.f32 %v3500, 0.0
      %v3555 = vmax.f32 %v3503, 0.0
      %v3556 = vmax.f32 %v3508, 0.0
      %v3557 = vmax.f32 %v3511, 0.0
      %v3558 = vmax.f32 %v3516, 0.0
      %v3559 = vmax.f32 %v3519, 0.0
      %v3560 = vmax.f32 %v3524, 0.0
      %v3561 = vmax.f32 %v3527, 0.0
      %v3562 = vsel %vm3042, %v3530, 0.0
      %v3563 = vsel %vm3042, %v3532, 0.0
      %v3564 = vadd.f32 %v3562, %v3563
      %v3565 = vsel %vm3042, %v3531, 0.0
      %v3566 = vsel %vm3042, %v3533, 0.0
      %v3567 = vadd.f32 %v3565, %v3566
      %v3568 = vsel %vm3042, %v3534, 0.0
      %v3569 = vsel %vm3042, %v3536, 0.0
      %v3570 = vadd.f32 %v3568, %v3569
      %v3571 = vsel %vm3042, %v3535, 0.0
      %v3572 = vsel %vm3042, %v3537, 0.0
      %v3573 = vadd.f32 %v3571, %v3572
      %v3574 = vsel %vm3042, %v3538, 0.0
      %v3575 = vsel %vm3042, %v3540, 0.0
      %v3576 = vadd.f32 %v3574, %v3575
      %v3577 = vsel %vm3042, %v3539, 0.0
      %v3578 = vsel %vm3042, %v3541, 0.0
      %v3579 = vadd.f32 %v3577, %v3578
      %v3580 = vsel %vm3042, %v3542, 0.0
      %v3581 = vsel %vm3042, %v3544, 0.0
      %v3582 = vadd.f32 %v3580, %v3581
      %v3583 = vsel %vm3042, %v3543, 0.0
      %v3584 = vsel %vm3042, %v3545, 0.0
      %v3585 = vadd.f32 %v3583, %v3584
      %v3586 = vsel %vm3042, %v3546, 0.0
      %v3587 = vsel %vm3042, %v3548, 0.0
      %v3588 = vadd.f32 %v3586, %v3587
      %v3589 = vsel %vm3042, %v3547, 0.0
      %v3590 = vsel %vm3042, %v3549, 0.0
      %v3591 = vadd.f32 %v3589, %v3590
      %v3592 = vsel %vm3042, %v3550, 0.0
      %v3593 = vsel %vm3042, %v3552, 0.0
      %v3594 = vadd.f32 %v3592, %v3593
      %v3595 = vsel %vm3042, %v3551, 0.0
      %v3596 = vsel %vm3042, %v3553, 0.0
      %v3597 = vadd.f32 %v3595, %v3596
      %v3598 = vsel %vm3042, %v3554, 0.0
      %v3599 = vsel %vm3042, %v3556, 0.0
      %v3600 = vadd.f32 %v3598, %v3599
      %v3601 = vsel %vm3042, %v3555, 0.0
      %v3602 = vsel %vm3042, %v3557, 0.0
      %v3603 = vadd.f32 %v3601, %v3602
      %v3604 = vsel %vm3042, %v3558, 0.0
      %v3605 = vsel %vm3042, %v3560, 0.0
      %v3606 = vadd.f32 %v3604, %v3605
      %v3607 = vsel %vm3042, %v3559, 0.0
      %v3608 = vsel %vm3042, %v3561, 0.0
      %v3609 = vadd.f32 %v3607, %v3608
      %v3626 = vcombine.high %v3564, %v3564
      %v3628 = vunpack.c.l.s4 1983009808
      %v3629 = vunpack.c.0.s8 %v3628
      %v3630 = vlaneseq
      %v3631 = vshrl.u32 %v3630, 7
      %v3632 = vsub.s32 %v3629, %v3631
      %v3633 = vrot.slane %v3564, %v3632
      %v3635 = vunpack.c.l.s4 1983009808
      %v3636 = vunpack.c.0.s8 %v3635
      %v3637 = vlaneseq
      %v3638 = vshrl.u32 %v3637, 7
      %v3639 = vsub.s32 %v3636, %v3638
      %v3640 = vrot.slane %v3626, %v3639
      %v3641 = vcombine.high %v3633, %v3633
      %v3642 = vcombine.high %v3640, %v3640
      %v3643 = vcombine.high %v3567, %v3567
      %v3645 = vunpack.c.l.s4 1983009808
      %v3646 = vunpack.c.0.s8 %v3645
      %v3647 = vlaneseq
      %v3648 = vshrl.u32 %v3647, 7
      %v3649 = vsub.s32 %v3646, %v3648
      %v3650 = vrot.slane %v3567, %v3649
      %v3652 = vunpack.c.l.s4 1983009808
      %v3653 = vunpack.c.0.s8 %v3652
      %v3654 = vlaneseq
      %v3655 = vshrl.u32 %v3654, 7
      %v3656 = vsub.s32 %v3653, %v3655
      %v3657 = vrot.slane %v3643, %v3656
      %v3658 = vcombine.high %v3650, %v3650
      %v3659 = vcombine.high %v3657, %v3657
      %v3660 = vcombine.high %v3570, %v3570
      %v3662 = vunpack.c.l.s4 1983009808
      %v3663 = vunpack.c.0.s8 %v3662
      %v3664 = vlaneseq
      %v3665 = vshrl.u32 %v3664, 7
      %v3666 = vsub.s32 %v3663, %v3665
      %v3667 = vrot.slane %v3570, %v3666
      %v3669 = vunpack.c.l.s4 1983009808
      %v3670 = vunpack.c.0.s8 %v3669
      %v3671 = vlaneseq
      %v3672 = vshrl.u32 %v3671, 7
      %v3673 = vsub.s32 %v3670, %v3672
      %v3674 = vrot.slane %v3660, %v3673
      %v3675 = vcombine.high %v3667, %v3667
      %v3676 = vcombine.high %v3674, %v3674
      %v3677 = vcombine.high %v3573, %v3573
      %v3679 = vunpack.c.l.s4 1983009808
      %v3680 = vunpack.c.0.s8 %v3679
      %v3681 = vlaneseq
      %v3682 = vshrl.u32 %v3681, 7
      %v3683 = vsub.s32 %v3680, %v3682
      %v3684 = vrot.slane %v3573, %v3683
      %v3686 = vunpack.c.l.s4 1983009808
      %v3687 = vunpack.c.0.s8 %v3686
      %v3688 = vlaneseq
      %v3689 = vshrl.u32 %v3688, 7
      %v3690 = vsub.s32 %v3687, %v3689
      %v3691 = vrot.slane %v3677, %v3690
      %v3692 = vcombine.high %v3684, %v3684
      %v3693 = vcombine.high %v3691, %v3691
      %v3694 = vcombine.high %v3576, %v3576
      %v3696 = vunpack.c.l.s4 1983009808
      %v3697 = vunpack.c.0.s8 %v3696
      %v3698 = vlaneseq
      %v3699 = vshrl.u32 %v3698, 7
      %v3700 = vsub.s32 %v3697, %v3699
      %v3701 = vrot.slane %v3576, %v3700
      %v3703 = vunpack.c.l.s4 1983009808
      %v3704 = vunpack.c.0.s8 %v3703
      %v3705 = vlaneseq
      %v3706 = vshrl.u32 %v3705, 7
      %v3707 = vsub.s32 %v3704, %v3706
      %v3708 = vrot.slane %v3694, %v3707
      %v3709 = vcombine.high %v3701, %v3701
      %v3710 = vcombine.high %v3708, %v3708
      %v3711 = vcombine.high %v3579, %v3579
      %v3713 = vunpack.c.l.s4 1983009808
      %v3714 = vunpack.c.0.s8 %v3713
      %v3715 = vlaneseq
      %v3716 = vshrl.u32 %v3715, 7
      %v3717 = vsub.s32 %v3714, %v3716
      %v3718 = vrot.slane %v3579, %v3717
      %v3720 = vunpack.c.l.s4 1983009808
      %v3721 = vunpack.c.0.s8 %v3720
      %v3722 = vlaneseq
      %v3723 = vshrl.u32 %v3722, 7
      %v3724 = vsub.s32 %v3721, %v3723
      %v3725 = vrot.slane %v3711, %v3724
      %v3726 = vcombine.high %v3718, %v3718
      %v3727 = vcombine.high %v3725, %v3725
      %v3728 = vcombine.high %v3582, %v3582
      %v3730 = vunpack.c.l.s4 1983009808
      %v3731 = vunpack.c.0.s8 %v3730
      %v3732 = vlaneseq
      %v3733 = vshrl.u32 %v3732, 7
      %v3734 = vsub.s32 %v3731, %v3733
      %v3735 = vrot.slane %v3582, %v3734
      %v3737 = vunpack.c.l.s4 1983009808
      %v3738 = vunpack.c.0.s8 %v3737
      %v3739 = vlaneseq
      %v3740 = vshrl.u32 %v3739, 7
      %v3741 = vsub.s32 %v3738, %v3740
      %v3742 = vrot.slane %v3728, %v3741
      %v3743 = vcombine.high %v3735, %v3735
      %v3744 = vcombine.high %v3742, %v3742
      %v3745 = vcombine.high %v3585, %v3585
      %v3747 = vunpack.c.l.s4 1983009808
      %v3748 = vunpack.c.0.s8 %v3747
      %v3749 = vlaneseq
      %v3750 = vshrl.u32 %v3749, 7
      %v3751 = vsub.s32 %v3748, %v3750
      %v3752 = vrot.slane %v3585, %v3751
      %v3754 = vunpack.c.l.s4 1983009808
      %v3755 = vunpack.c.0.s8 %v3754
      %v3756 = vlaneseq
      %v3757 = vshrl.u32 %v3756, 7
      %v3758 = vsub.s32 %v3755, %v3757
      %v3759 = vrot.slane %v3745, %v3758
      %v3760 = vcombine.high %v3752, %v3752
      %v3761 = vcombine.high %v3759, %v3759
      %v3762 = vcombine.high %v3588, %v3588
      %v3764 = vunpack.c.l.s4 1983009808
      %v3765 = vunpack.c.0.s8 %v3764
      %v3766 = vlaneseq
      %v3767 = vshrl.u32 %v3766, 7
      %v3768 = vsub.s32 %v3765, %v3767
      %v3769 = vrot.slane %v3588, %v3768
      %v3771 = vunpack.c.l.s4 1983009808
      %v3772 = vunpack.c.0.s8 %v3771
      %v3773 = vlaneseq
      %v3774 = vshrl.u32 %v3773, 7
      %v3775 = vsub.s32 %v3772, %v3774
      %v3776 = vrot.slane %v3762, %v3775
      %v3777 = vcombine.high %v3769, %v3769
      %v3778 = vcombine.high %v3776, %v3776
      %v3779 = vcombine.high %v3591, %v3591
      %v3781 = vunpack.c.l.s4 1983009808
      %v3782 = vunpack.c.0.s8 %v3781
      %v3783 = vlaneseq
      %v3784 = vshrl.u32 %v3783, 7
      %v3785 = vsub.s32 %v3782, %v3784
      %v3786 = vrot.slane %v3591, %v3785
      %v3788 = vunpack.c.l.s4 1983009808
      %v3789 = vunpack.c.0.s8 %v3788
      %v3790 = vlaneseq
      %v3791 = vshrl.u32 %v3790, 7
      %v3792 = vsub.s32 %v3789, %v3791
      %v3793 = vrot.slane %v3779, %v3792
      %v3794 = vcombine.high %v3786, %v3786
      %v3795 = vcombine.high %v3793, %v3793
      %v3796 = vcombine.high %v3594, %v3594
      %v3798 = vunpack.c.l.s4 1983009808
      %v3799 = vunpack.c.0.s8 %v3798
      %v3800 = vlaneseq
      %v3801 = vshrl.u32 %v3800, 7
      %v3802 = vsub.s32 %v3799, %v3801
      %v3803 = vrot.slane %v3594, %v3802
      %v3805 = vunpack.c.l.s4 1983009808
      %v3806 = vunpack.c.0.s8 %v3805
      %v3807 = vlaneseq
      %v3808 = vshrl.u32 %v3807, 7
      %v3809 = vsub.s32 %v3806, %v3808
      %v3810 = vrot.slane %v3796, %v3809
      %v3811 = vcombine.high %v3803, %v3803
      %v3812 = vcombine.high %v3810, %v3810
      %v3813 = vcombine.high %v3597, %v3597
      %v3815 = vunpack.c.l.s4 1983009808
      %v3816 = vunpack.c.0.s8 %v3815
      %v3817 = vlaneseq
      %v3818 = vshrl.u32 %v3817, 7
      %v3819 = vsub.s32 %v3816, %v3818
      %v3820 = vrot.slane %v3597, %v3819
      %v3822 = vunpack.c.l.s4 1983009808
      %v3823 = vunpack.c.0.s8 %v3822
      %v3824 = vlaneseq
      %v3825 = vshrl.u32 %v3824, 7
      %v3826 = vsub.s32 %v3823, %v3825
      %v3827 = vrot.slane %v3813, %v3826
      %v3828 = vcombine.high %v3820, %v3820
      %v3829 = vcombine.high %v3827, %v3827
      %v3830 = vcombine.high %v3600, %v3600
      %v3832 = vunpack.c.l.s4 1983009808
      %v3833 = vunpack.c.0.s8 %v3832
      %v3834 = vlaneseq
      %v3835 = vshrl.u32 %v3834, 7
      %v3836 = vsub.s32 %v3833, %v3835
      %v3837 = vrot.slane %v3600, %v3836
      %v3839 = vunpack.c.l.s4 1983009808
      %v3840 = vunpack.c.0.s8 %v3839
      %v3841 = vlaneseq
      %v3842 = vshrl.u32 %v3841, 7
      %v3843 = vsub.s32 %v3840, %v3842
      %v3844 = vrot.slane %v3830, %v3843
      %v3845 = vcombine.high %v3837, %v3837
      %v3846 = vcombine.high %v3844, %v3844
      %v3847 = vcombine.high %v3603, %v3603
      %v3849 = vunpack.c.l.s4 1983009808
      %v3850 = vunpack.c.0.s8 %v3849
      %v3851 = vlaneseq
      %v3852 = vshrl.u32 %v3851, 7
      %v3853 = vsub.s32 %v3850, %v3852
      %v3854 = vrot.slane %v3603, %v3853
      %v3856 = vunpack.c.l.s4 1983009808
      %v3857 = vunpack.c.0.s8 %v3856
      %v3858 = vlaneseq
      %v3859 = vshrl.u32 %v3858, 7
      %v3860 = vsub.s32 %v3857, %v3859
      %v3861 = vrot.slane %v3847, %v3860
      %v3862 = vcombine.high %v3854, %v3854
      %v3863 = vcombine.high %v3861, %v3861
      %v3864 = vcombine.high %v3606, %v3606
      %v3866 = vunpack.c.l.s4 1983009808
      %v3867 = vunpack.c.0.s8 %v3866
      %v3868 = vlaneseq
      %v3869 = vshrl.u32 %v3868, 7
      %v3870 = vsub.s32 %v3867, %v3869
      %v3871 = vrot.slane %v3606, %v3870
      %v3873 = vunpack.c.l.s4 1983009808
      %v3874 = vunpack.c.0.s8 %v3873
      %v3875 = vlaneseq
      %v3876 = vshrl.u32 %v3875, 7
      %v3877 = vsub.s32 %v3874, %v3876
      %v3878 = vrot.slane %v3864, %v3877
      %v3879 = vcombine.high %v3871, %v3871
      %v3880 = vcombine.high %v3878, %v3878
      %v3881 = vcombine.high %v3609, %v3609
      %v3883 = vunpack.c.l.s4 1983009808
      %v3884 = vunpack.c.0.s8 %v3883
      %v3885 = vlaneseq
      %v3886 = vshrl.u32 %v3885, 7
      %v3887 = vsub.s32 %v3884, %v3886
      %v3888 = vrot.slane %v3609, %v3887
      %v3890 = vunpack.c.l.s4 1983009808
      %v3891 = vunpack.c.0.s8 %v3890
      %v3892 = vlaneseq
      %v3893 = vshrl.u32 %v3892, 7
      %v3894 = vsub.s32 %v3891, %v3893
      %v3895 = vrot.slane %v3881, %v3894
      %v3896 = vcombine.high %v3888, %v3888
      %v3897 = vcombine.high %v3895, %v3895
      %vm3962 = vcmask 25600
      %v3963 = vsel %vm3962, %v3633, 0.0
      %v3964 = vrot.slane %v3963, 4
      %v3965 = vadd.f32 %v3963, %v3964
      %v3966 = vrot.slane %v3965, 2
      %v3967 = vadd.f32 %v3965, %v3966
      %v3968 = vrot.slane %v3967, 1
      %v3969 = vadd.f32 %v3967, %v3968
      %v3970 = vsel %vm3962, %v3641, 0.0
      %v3971 = vrot.slane %v3970, 4
      %v3972 = vadd.f32 %v3970, %v3971
      %v3973 = vrot.slane %v3972, 2
      %v3974 = vadd.f32 %v3972, %v3973
      %v3975 = vrot.slane %v3974, 1
      %v3976 = vadd.f32 %v3974, %v3975
      %v3977 = vsel %vm3962, %v3640, 0.0
      %v3978 = vrot.slane %v3977, 4
      %v3979 = vadd.f32 %v3977, %v3978
      %v3980 = vrot.slane %v3979, 2
      %v3981 = vadd.f32 %v3979, %v3980
      %v3982 = vrot.slane %v3981, 1
      %v3983 = vadd.f32 %v3981, %v3982
      %v3984 = vsel %vm3962, %v3642, 0.0
      %v3985 = vrot.slane %v3984, 4
      %v3986 = vadd.f32 %v3984, %v3985
      %v3987 = vrot.slane %v3986, 2
      %v3988 = vadd.f32 %v3986, %v3987
      %v3989 = vrot.slane %v3988, 1
      %v3990 = vadd.f32 %v3988, %v3989
      %v3991 = vsel %vm3962, %v3650, 0.0
      %v3992 = vrot.slane %v3991, 4
      %v3993 = vadd.f32 %v3991, %v3992
      %v3994 = vrot.slane %v3993, 2
      %v3995 = vadd.f32 %v3993, %v3994
      %v3996 = vrot.slane %v3995, 1
      %v3997 = vadd.f32 %v3995, %v3996
      %v3998 = vsel %vm3962, %v3658, 0.0
      %v3999 = vrot.slane %v3998, 4
      %v4000 = vadd.f32 %v3998, %v3999
      %v4001 = vrot.slane %v4000, 2
      %v4002 = vadd.f32 %v4000, %v4001
      %v4003 = vrot.slane %v4002, 1
      %v4004 = vadd.f32 %v4002, %v4003
      %v4005 = vsel %vm3962, %v3657, 0.0
      %v4006 = vrot.slane %v4005, 4
      %v4007 = vadd.f32 %v4005, %v4006
      %v4008 = vrot.slane %v4007, 2
      %v4009 = vadd.f32 %v4007, %v4008
      %v4010 = vrot.slane %v4009, 1
      %v4011 = vadd.f32 %v4009, %v4010
      %v4012 = vsel %vm3962, %v3659, 0.0
      %v4013 = vrot.slane %v4012, 4
      %v4014 = vadd.f32 %v4012, %v4013
      %v4015 = vrot.slane %v4014, 2
      %v4016 = vadd.f32 %v4014, %v4015
      %v4017 = vrot.slane %v4016, 1
      %v4018 = vadd.f32 %v4016, %v4017
      %v4019 = vsel %vm3962, %v3667, 0.0
      %v4020 = vrot.slane %v4019, 4
      %v4021 = vadd.f32 %v4019, %v4020
      %v4022 = vrot.slane %v4021, 2
      %v4023 = vadd.f32 %v4021, %v4022
      %v4024 = vrot.slane %v4023, 1
      %v4025 = vadd.f32 %v4023, %v4024
      %v4026 = vsel %vm3962, %v3675, 0.0
      %v4027 = vrot.slane %v4026, 4
      %v4028 = vadd.f32 %v4026, %v4027
      %v4029 = vrot.slane %v4028, 2
      %v4030 = vadd.f32 %v4028, %v4029
      %v4031 = vrot.slane %v4030, 1
      %v4032 = vadd.f32 %v4030, %v4031
      %v4033 = vsel %vm3962, %v3674, 0.0
      %v4034 = vrot.slane %v4033, 4
      %v4035 = vadd.f32 %v4033, %v4034
      %v4036 = vrot.slane %v4035, 2
      %v4037 = vadd.f32 %v4035, %v4036
      %v4038 = vrot.slane %v4037, 1
      %v4039 = vadd.f32 %v4037, %v4038
      %v4040 = vsel %vm3962, %v3676, 0.0
      %v4041 = vrot.slane %v4040, 4
      %v4042 = vadd.f32 %v4040, %v4041
      %v4043 = vrot.slane %v4042, 2
      %v4044 = vadd.f32 %v4042, %v4043
      %v4045 = vrot.slane %v4044, 1
      %v4046 = vadd.f32 %v4044, %v4045
      %v4047 = vsel %vm3962, %v3684, 0.0
      %v4048 = vrot.slane %v4047, 4
      %v4049 = vadd.f32 %v4047, %v4048
      %v4050 = vrot.slane %v4049, 2
      %v4051 = vadd.f32 %v4049, %v4050
      %v4052 = vrot.slane %v4051, 1
      %v4053 = vadd.f32 %v4051, %v4052
      %v4054 = vsel %vm3962, %v3692, 0.0
      %v4055 = vrot.slane %v4054, 4
      %v4056 = vadd.f32 %v4054, %v4055
      %v4057 = vrot.slane %v4056, 2
      %v4058 = vadd.f32 %v4056, %v4057
      %v4059 = vrot.slane %v4058, 1
      %v4060 = vadd.f32 %v4058, %v4059
      %v4061 = vsel %vm3962, %v3691, 0.0
      %v4062 = vrot.slane %v4061, 4
      %v4063 = vadd.f32 %v4061, %v4062
      %v4064 = vrot.slane %v4063, 2
      %v4065 = vadd.f32 %v4063, %v4064
      %v4066 = vrot.slane %v4065, 1
      %v4067 = vadd.f32 %v4065, %v4066
      %v4068 = vsel %vm3962, %v3693, 0.0
      %v4069 = vrot.slane %v4068, 4
      %v4070 = vadd.f32 %v4068, %v4069
      %v4071 = vrot.slane %v4070, 2
      %v4072 = vadd.f32 %v4070, %v4071
      %v4073 = vrot.slane %v4072, 1
      %v4074 = vadd.f32 %v4072, %v4073
      %v4075 = vsel %vm3962, %v3701, 0.0
      %v4076 = vrot.slane %v4075, 4
      %v4077 = vadd.f32 %v4075, %v4076
      %v4078 = vrot.slane %v4077, 2
      %v4079 = vadd.f32 %v4077, %v4078
      %v4080 = vrot.slane %v4079, 1
      %v4081 = vadd.f32 %v4079, %v4080
      %v4082 = vsel %vm3962, %v3709, 0.0
      %v4083 = vrot.slane %v4082, 4
      %v4084 = vadd.f32 %v4082, %v4083
      %v4085 = vrot.slane %v4084, 2
      %v4086 = vadd.f32 %v4084, %v4085
      %v4087 = vrot.slane %v4086, 1
      %v4088 = vadd.f32 %v4086, %v4087
      %v4089 = vsel %vm3962, %v3708, 0.0
      %v4090 = vrot.slane %v4089, 4
      %v4091 = vadd.f32 %v4089, %v4090
      %v4092 = vrot.slane %v4091, 2
      %v4093 = vadd.f32 %v4091, %v4092
      %v4094 = vrot.slane %v4093, 1
      %v4095 = vadd.f32 %v4093, %v4094
      %v4096 = vsel %vm3962, %v3710, 0.0
      %v4097 = vrot.slane %v4096, 4
      %v4098 = vadd.f32 %v4096, %v4097
      %v4099 = vrot.slane %v4098, 2
      %v4100 = vadd.f32 %v4098, %v4099
      %v4101 = vrot.slane %v4100, 1
      %v4102 = vadd.f32 %v4100, %v4101
      %v4103 = vsel %vm3962, %v3718, 0.0
      %v4104 = vrot.slane %v4103, 4
      %v4105 = vadd.f32 %v4103, %v4104
      %v4106 = vrot.slane %v4105, 2
      %v4107 = vadd.f32 %v4105, %v4106
      %v4108 = vrot.slane %v4107, 1
      %v4109 = vadd.f32 %v4107, %v4108
      %v4110 = vsel %vm3962, %v3726, 0.0
      %v4111 = vrot.slane %v4110, 4
      %v4112 = vadd.f32 %v4110, %v4111
      %v4113 = vrot.slane %v4112, 2
      %v4114 = vadd.f32 %v4112, %v4113
      %v4115 = vrot.slane %v4114, 1
      %v4116 = vadd.f32 %v4114, %v4115
      %v4117 = vsel %vm3962, %v3725, 0.0
      %v4118 = vrot.slane %v4117, 4
      %v4119 = vadd.f32 %v4117, %v4118
      %v4120 = vrot.slane %v4119, 2
      %v4121 = vadd.f32 %v4119, %v4120
      %v4122 = vrot.slane %v4121, 1
      %v4123 = vadd.f32 %v4121, %v4122
      %v4124 = vsel %vm3962, %v3727, 0.0
      %v4125 = vrot.slane %v4124, 4
      %v4126 = vadd.f32 %v4124, %v4125
      %v4127 = vrot.slane %v4126, 2
      %v4128 = vadd.f32 %v4126, %v4127
      %v4129 = vrot.slane %v4128, 1
      %v4130 = vadd.f32 %v4128, %v4129
      %v4131 = vsel %vm3962, %v3735, 0.0
      %v4132 = vrot.slane %v4131, 4
      %v4133 = vadd.f32 %v4131, %v4132
      %v4134 = vrot.slane %v4133, 2
      %v4135 = vadd.f32 %v4133, %v4134
      %v4136 = vrot.slane %v4135, 1
      %v4137 = vadd.f32 %v4135, %v4136
      %v4138 = vsel %vm3962, %v3743, 0.0
      %v4139 = vrot.slane %v4138, 4
      %v4140 = vadd.f32 %v4138, %v4139
      %v4141 = vrot.slane %v4140, 2
      %v4142 = vadd.f32 %v4140, %v4141
      %v4143 = vrot.slane %v4142, 1
      %v4144 = vadd.f32 %v4142, %v4143
      %v4145 = vsel %vm3962, %v3742, 0.0
      %v4146 = vrot.slane %v4145, 4
      %v4147 = vadd.f32 %v4145, %v4146
      %v4148 = vrot.slane %v4147, 2
      %v4149 = vadd.f32 %v4147, %v4148
      %v4150 = vrot.slane %v4149, 1
      %v4151 = vadd.f32 %v4149, %v4150
      %v4152 = vsel %vm3962, %v3744, 0.0
      %v4153 = vrot.slane %v4152, 4
      %v4154 = vadd.f32 %v4152, %v4153
      %v4155 = vrot.slane %v4154, 2
      %v4156 = vadd.f32 %v4154, %v4155
      %v4157 = vrot.slane %v4156, 1
      %v4158 = vadd.f32 %v4156, %v4157
      %v4159 = vsel %vm3962, %v3752, 0.0
      %v4160 = vrot.slane %v4159, 4
      %v4161 = vadd.f32 %v4159, %v4160
      %v4162 = vrot.slane %v4161, 2
      %v4163 = vadd.f32 %v4161, %v4162
      %v4164 = vrot.slane %v4163, 1
      %v4165 = vadd.f32 %v4163, %v4164
      %v4166 = vsel %vm3962, %v3760, 0.0
      %v4167 = vrot.slane %v4166, 4
      %v4168 = vadd.f32 %v4166, %v4167
      %v4169 = vrot.slane %v4168, 2
      %v4170 = vadd.f32 %v4168, %v4169
      %v4171 = vrot.slane %v4170, 1
      %v4172 = vadd.f32 %v4170, %v4171
      %v4173 = vsel %vm3962, %v3759, 0.0
      %v4174 = vrot.slane %v4173, 4
      %v4175 = vadd.f32 %v4173, %v4174
      %v4176 = vrot.slane %v4175, 2
      %v4177 = vadd.f32 %v4175, %v4176
      %v4178 = vrot.slane %v4177, 1
      %v4179 = vadd.f32 %v4177, %v4178
      %v4180 = vsel %vm3962, %v3761, 0.0
      %v4181 = vrot.slane %v4180, 4
      %v4182 = vadd.f32 %v4180, %v4181
      %v4183 = vrot.slane %v4182, 2
      %v4184 = vadd.f32 %v4182, %v4183
      %v4185 = vrot.slane %v4184, 1
      %v4186 = vadd.f32 %v4184, %v4185
      %v4187 = vsel %vm3962, %v3769, 0.0
      %v4188 = vrot.slane %v4187, 4
      %v4189 = vadd.f32 %v4187, %v4188
      %v4190 = vrot.slane %v4189, 2
      %v4191 = vadd.f32 %v4189, %v4190
      %v4192 = vrot.slane %v4191, 1
      %v4193 = vadd.f32 %v4191, %v4192
      %v4194 = vsel %vm3962, %v3777, 0.0
      %v4195 = vrot.slane %v4194, 4
      %v4196 = vadd.f32 %v4194, %v4195
      %v4197 = vrot.slane %v4196, 2
      %v4198 = vadd.f32 %v4196, %v4197
      %v4199 = vrot.slane %v4198, 1
      %v4200 = vadd.f32 %v4198, %v4199
      %v4201 = vsel %vm3962, %v3776, 0.0
      %v4202 = vrot.slane %v4201, 4
      %v4203 = vadd.f32 %v4201, %v4202
      %v4204 = vrot.slane %v4203, 2
      %v4205 = vadd.f32 %v4203, %v4204
      %v4206 = vrot.slane %v4205, 1
      %v4207 = vadd.f32 %v4205, %v4206
      %v4208 = vsel %vm3962, %v3778, 0.0
      %v4209 = vrot.slane %v4208, 4
      %v4210 = vadd.f32 %v4208, %v4209
      %v4211 = vrot.slane %v4210, 2
      %v4212 = vadd.f32 %v4210, %v4211
      %v4213 = vrot.slane %v4212, 1
      %v4214 = vadd.f32 %v4212, %v4213
      %v4215 = vsel %vm3962, %v3786, 0.0
      %v4216 = vrot.slane %v4215, 4
      %v4217 = vadd.f32 %v4215, %v4216
      %v4218 = vrot.slane %v4217, 2
      %v4219 = vadd.f32 %v4217, %v4218
      %v4220 = vrot.slane %v4219, 1
      %v4221 = vadd.f32 %v4219, %v4220
      %v4222 = vsel %vm3962, %v3794, 0.0
      %v4223 = vrot.slane %v4222, 4
      %v4224 = vadd.f32 %v4222, %v4223
      %v4225 = vrot.slane %v4224, 2
      %v4226 = vadd.f32 %v4224, %v4225
      %v4227 = vrot.slane %v4226, 1
      %v4228 = vadd.f32 %v4226, %v4227
      %v4229 = vsel %vm3962, %v3793, 0.0
      %v4230 = vrot.slane %v4229, 4
      %v4231 = vadd.f32 %v4229, %v4230
      %v4232 = vrot.slane %v4231, 2
      %v4233 = vadd.f32 %v4231, %v4232
      %v4234 = vrot.slane %v4233, 1
      %v4235 = vadd.f32 %v4233, %v4234
      %v4236 = vsel %vm3962, %v3795, 0.0
      %v4237 = vrot.slane %v4236, 4
      %v4238 = vadd.f32 %v4236, %v4237
      %v4239 = vrot.slane %v4238, 2
      %v4240 = vadd.f32 %v4238, %v4239
      %v4241 = vrot.slane %v4240, 1
      %v4242 = vadd.f32 %v4240, %v4241
      %v4243 = vsel %vm3962, %v3803, 0.0
      %v4244 = vrot.slane %v4243, 4
      %v4245 = vadd.f32 %v4243, %v4244
      %v4246 = vrot.slane %v4245, 2
      %v4247 = vadd.f32 %v4245, %v4246
      %v4248 = vrot.slane %v4247, 1
      %v4249 = vadd.f32 %v4247, %v4248
      %v4250 = vsel %vm3962, %v3811, 0.0
      %v4251 = vrot.slane %v4250, 4
      %v4252 = vadd.f32 %v4250, %v4251
      %v4253 = vrot.slane %v4252, 2
      %v4254 = vadd.f32 %v4252, %v4253
      %v4255 = vrot.slane %v4254, 1
      %v4256 = vadd.f32 %v4254, %v4255
      %v4257 = vsel %vm3962, %v3810, 0.0
      %v4258 = vrot.slane %v4257, 4
      %v4259 = vadd.f32 %v4257, %v4258
      %v4260 = vrot.slane %v4259, 2
      %v4261 = vadd.f32 %v4259, %v4260
      %v4262 = vrot.slane %v4261, 1
      %v4263 = vadd.f32 %v4261, %v4262
      %v4264 = vsel %vm3962, %v3812, 0.0
      %v4265 = vrot.slane %v4264, 4
      %v4266 = vadd.f32 %v4264, %v4265
      %v4267 = vrot.slane %v4266, 2
      %v4268 = vadd.f32 %v4266, %v4267
      %v4269 = vrot.slane %v4268, 1
      %v4270 = vadd.f32 %v4268, %v4269
      %v4271 = vsel %vm3962, %v3820, 0.0
      %v4272 = vrot.slane %v4271, 4
      %v4273 = vadd.f32 %v4271, %v4272
      %v4274 = vrot.slane %v4273, 2
      %v4275 = vadd.f32 %v4273, %v4274
      %v4276 = vrot.slane %v4275, 1
      %v4277 = vadd.f32 %v4275, %v4276
      %v4278 = vsel %vm3962, %v3828, 0.0
      %v4279 = vrot.slane %v4278, 4
      %v4280 = vadd.f32 %v4278, %v4279
      %v4281 = vrot.slane %v4280, 2
      %v4282 = vadd.f32 %v4280, %v4281
      %v4283 = vrot.slane %v4282, 1
      %v4284 = vadd.f32 %v4282, %v4283
      %v4285 = vsel %vm3962, %v3827, 0.0
      %v4286 = vrot.slane %v4285, 4
      %v4287 = vadd.f32 %v4285, %v4286
      %v4288 = vrot.slane %v4287, 2
      %v4289 = vadd.f32 %v4287, %v4288
      %v4290 = vrot.slane %v4289, 1
      %v4291 = vadd.f32 %v4289, %v4290
      %v4292 = vsel %vm3962, %v3829, 0.0
      %v4293 = vrot.slane %v4292, 4
      %v4294 = vadd.f32 %v4292, %v4293
      %v4295 = vrot.slane %v4294, 2
      %v4296 = vadd.f32 %v4294, %v4295
      %v4297 = vrot.slane %v4296, 1
      %v4298 = vadd.f32 %v4296, %v4297
      %v4299 = vsel %vm3962, %v3837, 0.0
      %v4300 = vrot.slane %v4299, 4
      %v4301 = vadd.f32 %v4299, %v4300
      %v4302 = vrot.slane %v4301, 2
      %v4303 = vadd.f32 %v4301, %v4302
      %v4304 = vrot.slane %v4303, 1
      %v4305 = vadd.f32 %v4303, %v4304
      %v4306 = vsel %vm3962, %v3845, 0.0
      %v4307 = vrot.slane %v4306, 4
      %v4308 = vadd.f32 %v4306, %v4307
      %v4309 = vrot.slane %v4308, 2
      %v4310 = vadd.f32 %v4308, %v4309
      %v4311 = vrot.slane %v4310, 1
      %v4312 = vadd.f32 %v4310, %v4311
      %v4313 = vsel %vm3962, %v3844, 0.0
      %v4314 = vrot.slane %v4313, 4
      %v4315 = vadd.f32 %v4313, %v4314
      %v4316 = vrot.slane %v4315, 2
      %v4317 = vadd.f32 %v4315, %v4316
      %v4318 = vrot.slane %v4317, 1
      %v4319 = vadd.f32 %v4317, %v4318
      %v4320 = vsel %vm3962, %v3846, 0.0
      %v4321 = vrot.slane %v4320, 4
      %v4322 = vadd.f32 %v4320, %v4321
      %v4323 = vrot.slane %v4322, 2
      %v4324 = vadd.f32 %v4322, %v4323
      %v4325 = vrot.slane %v4324, 1
      %v4326 = vadd.f32 %v4324, %v4325
      %v4327 = vsel %vm3962, %v3854, 0.0
      %v4328 = vrot.slane %v4327, 4
      %v4329 = vadd.f32 %v4327, %v4328
      %v4330 = vrot.slane %v4329, 2
      %v4331 = vadd.f32 %v4329, %v4330
      %v4332 = vrot.slane %v4331, 1
      %v4333 = vadd.f32 %v4331, %v4332
      %v4334 = vsel %vm3962, %v3862, 0.0
      %v4335 = vrot.slane %v4334, 4
      %v4336 = vadd.f32 %v4334, %v4335
      %v4337 = vrot.slane %v4336, 2
      %v4338 = vadd.f32 %v4336, %v4337
      %v4339 = vrot.slane %v4338, 1
      %v4340 = vadd.f32 %v4338, %v4339
      %v4341 = vsel %vm3962, %v3861, 0.0
      %v4342 = vrot.slane %v4341, 4
      %v4343 = vadd.f32 %v4341, %v4342
      %v4344 = vrot.slane %v4343, 2
      %v4345 = vadd.f32 %v4343, %v4344
      %v4346 = vrot.slane %v4345, 1
      %v4347 = vadd.f32 %v4345, %v4346
      %v4348 = vsel %vm3962, %v3863, 0.0
      %v4349 = vrot.slane %v4348, 4
      %v4350 = vadd.f32 %v4348, %v4349
      %v4351 = vrot.slane %v4350, 2
      %v4352 = vadd.f32 %v4350, %v4351
      %v4353 = vrot.slane %v4352, 1
      %v4354 = vadd.f32 %v4352, %v4353
      %v4355 = vsel %vm3962, %v3871, 0.0
      %v4356 = vrot.slane %v4355, 4
      %v4357 = vadd.f32 %v4355, %v4356
      %v4358 = vrot.slane %v4357, 2
      %v4359 = vadd.f32 %v4357, %v4358
      %v4360 = vrot.slane %v4359, 1
      %v4361 = vadd.f32 %v4359, %v4360
      %v4362 = vsel %vm3962, %v3879, 0.0
      %v4363 = vrot.slane %v4362, 4
      %v4364 = vadd.f32 %v4362, %v4363
      %v4365 = vrot.slane %v4364, 2
      %v4366 = vadd.f32 %v4364, %v4365
      %v4367 = vrot.slane %v4366, 1
      %v4368 = vadd.f32 %v4366, %v4367
      %v4369 = vsel %vm3962, %v3878, 0.0
      %v4370 = vrot.slane %v4369, 4
      %v4371 = vadd.f32 %v4369, %v4370
      %v4372 = vrot.slane %v4371, 2
      %v4373 = vadd.f32 %v4371, %v4372
      %v4374 = vrot.slane %v4373, 1
      %v4375 = vadd.f32 %v4373, %v4374
      %v4376 = vsel %vm3962, %v3880, 0.0
      %v4377 = vrot.slane %v4376, 4
      %v4378 = vadd.f32 %v4376, %v4377
      %v4379 = vrot.slane %v4378, 2
      %v4380 = vadd.f32 %v4378, %v4379
      %v4381 = vrot.slane %v4380, 1
      %v4382 = vadd.f32 %v4380, %v4381
      %v4383 = vsel %vm3962, %v3888, 0.0
      %v4384 = vrot.slane %v4383, 4
      %v4385 = vadd.f32 %v4383, %v4384
      %v4386 = vrot.slane %v4385, 2
      %v4387 = vadd.f32 %v4385, %v4386
      %v4388 = vrot.slane %v4387, 1
      %v4389 = vadd.f32 %v4387, %v4388
      %v4390 = vsel %vm3962, %v3896, 0.0
      %v4391 = vrot.slane %v4390, 4
      %v4392 = vadd.f32 %v4390, %v4391
      %v4393 = vrot.slane %v4392, 2
      %v4394 = vadd.f32 %v4392, %v4393
      %v4395 = vrot.slane %v4394, 1
      %v4396 = vadd.f32 %v4394, %v4395
      %v4397 = vsel %vm3962, %v3895, 0.0
      %v4398 = vrot.slane %v4397, 4
      %v4399 = vadd.f32 %v4397, %v4398
      %v4400 = vrot.slane %v4399, 2
      %v4401 = vadd.f32 %v4399, %v4400
      %v4402 = vrot.slane %v4401, 1
      %v4403 = vadd.f32 %v4401, %v4402
      %v4404 = vsel %vm3962, %v3897, 0.0
      %v4405 = vrot.slane %v4404, 4
      %v4406 = vadd.f32 %v4404, %v4405
      %v4407 = vrot.slane %v4406, 2
      %v4408 = vadd.f32 %v4406, %v4407
      %v4409 = vrot.slane %v4408, 1
      %v4410 = vadd.f32 %v4408, %v4409
      %v4411 = vmul.f32 %v3969, 0.25
      %v4412 = vmul.f32 %v3976, 0.25
      %v4413 = vmul.f32 %v3983, 0.25
      %v4414 = vmul.f32 %v3990, 0.25
      %v4415 = vmul.f32 %v3997, 0.25
      %v4416 = vmul.f32 %v4004, 0.25
      %v4417 = vmul.f32 %v4011, 0.25
      %v4418 = vmul.f32 %v4018, 0.25
      %v4419 = vmul.f32 %v4025, 0.25
      %v4420 = vmul.f32 %v4032, 0.25
      %v4421 = vmul.f32 %v4039, 0.25
      %v4422 = vmul.f32 %v4046, 0.25
      %v4423 = vmul.f32 %v4053, 0.25
      %v4424 = vmul.f32 %v4060, 0.25
      %v4425 = vmul.f32 %v4067, 0.25
      %v4426 = vmul.f32 %v4074, 0.25
      %v4427 = vmul.f32 %v4081, 0.25
      %v4428 = vmul.f32 %v4088, 0.25
      %v4429 = vmul.f32 %v4095, 0.25
      %v4430 = vmul.f32 %v4102, 0.25
      %v4431 = vmul.f32 %v4109, 0.25
      %v4432 = vmul.f32 %v4116, 0.25
      %v4433 = vmul.f32 %v4123, 0.25
      %v4434 = vmul.f32 %v4130, 0.25
      %v4435 = vmul.f32 %v4137, 0.25
      %v4436 = vmul.f32 %v4144, 0.25
      %v4437 = vmul.f32 %v4151, 0.25
      %v4438 = vmul.f32 %v4158, 0.25
      %v4439 = vmul.f32 %v4165, 0.25
      %v4440 = vmul.f32 %v4172, 0.25
      %v4441 = vmul.f32 %v4179, 0.25
      %v4442 = vmul.f32 %v4186, 0.25
      %v4443 = vmul.f32 %v4193, 0.25
      %v4444 = vmul.f32 %v4200, 0.25
      %v4445 = vmul.f32 %v4207, 0.25
      %v4446 = vmul.f32 %v4214, 0.25
      %v4447 = vmul.f32 %v4221, 0.25
      %v4448 = vmul.f32 %v4228, 0.25
      %v4449 = vmul.f32 %v4235, 0.25
      %v4450 = vmul.f32 %v4242, 0.25
      %v4451 = vmul.f32 %v4249, 0.25
      %v4452 = vmul.f32 %v4256, 0.25
      %v4453 = vmul.f32 %v4263, 0.25
      %v4454 = vmul.f32 %v4270, 0.25
      %v4455 = vmul.f32 %v4277, 0.25
      %v4456 = vmul.f32 %v4284, 0.25
      %v4457 = vmul.f32 %v4291, 0.25
      %v4458 = vmul.f32 %v4298, 0.25
      %v4459 = vmul.f32 %v4305, 0.25
      %v4460 = vmul.f32 %v4312, 0.25
      %v4461 = vmul.f32 %v4319, 0.25
      %v4462 = vmul.f32 %v4326, 0.25
      %v4463 = vmul.f32 %v4333, 0.25
      %v4464 = vmul.f32 %v4340, 0.25
      %v4465 = vmul.f32 %v4347, 0.25
      %v4466 = vmul.f32 %v4354, 0.25
      %v4467 = vmul.f32 %v4361, 0.25
      %v4468 = vmul.f32 %v4368, 0.25
      %v4469 = vmul.f32 %v4375, 0.25
      %v4470 = vmul.f32 %v4382, 0.25
      %v4471 = vmul.f32 %v4389, 0.25
      %v4472 = vmul.f32 %v4396, 0.25
      %v4473 = vmul.f32 %v4403, 0.25
      %v4474 = vmul.f32 %v4410, 0.25
      %v4475 = vpack.c.bf16 %v4411, %v4411
      %v4476 = vpack.c.bf16 %v4412, %v4412
      %v4477 = vpack.c.bf16 %v4413, %v4413
      %v4478 = vpack.c.bf16 %v4414, %v4414
      %v4479 = vpack.c.bf16 %v4415, %v4415
      %v4480 = vpack.c.bf16 %v4416, %v4416
      %v4481 = vpack.c.bf16 %v4417, %v4417
      %v4482 = vpack.c.bf16 %v4418, %v4418
      %v4483 = vpack.c.bf16 %v4419, %v4419
      %v4484 = vpack.c.bf16 %v4420, %v4420
      %v4485 = vpack.c.bf16 %v4421, %v4421
      %v4486 = vpack.c.bf16 %v4422, %v4422
      %v4487 = vpack.c.bf16 %v4423, %v4423
      %v4488 = vpack.c.bf16 %v4424, %v4424
      %v4489 = vpack.c.bf16 %v4425, %v4425
      %v4490 = vpack.c.bf16 %v4426, %v4426
      %v4491 = vpack.c.bf16 %v4427, %v4427
      %v4492 = vpack.c.bf16 %v4428, %v4428
      %v4493 = vpack.c.bf16 %v4429, %v4429
      %v4494 = vpack.c.bf16 %v4430, %v4430
      %v4495 = vpack.c.bf16 %v4431, %v4431
      %v4496 = vpack.c.bf16 %v4432, %v4432
      %v4497 = vpack.c.bf16 %v4433, %v4433
      %v4498 = vpack.c.bf16 %v4434, %v4434
      %v4499 = vpack.c.bf16 %v4435, %v4435
      %v4500 = vpack.c.bf16 %v4436, %v4436
      %v4501 = vpack.c.bf16 %v4437, %v4437
      %v4502 = vpack.c.bf16 %v4438, %v4438
      %v4503 = vpack.c.bf16 %v4439, %v4439
      %v4504 = vpack.c.bf16 %v4440, %v4440
      %v4505 = vpack.c.bf16 %v4441, %v4441
      %v4506 = vpack.c.bf16 %v4442, %v4442
      %v4507 = vpack.c.bf16 %v4443, %v4443
      %v4508 = vpack.c.bf16 %v4444, %v4444
      %v4509 = vpack.c.bf16 %v4445, %v4445
      %v4510 = vpack.c.bf16 %v4446, %v4446
      %v4511 = vpack.c.bf16 %v4447, %v4447
      %v4512 = vpack.c.bf16 %v4448, %v4448
      %v4513 = vpack.c.bf16 %v4449, %v4449
      %v4514 = vpack.c.bf16 %v4450, %v4450
      %v4515 = vpack.c.bf16 %v4451, %v4451
      %v4516 = vpack.c.bf16 %v4452, %v4452
      %v4517 = vpack.c.bf16 %v4453, %v4453
      %v4518 = vpack.c.bf16 %v4454, %v4454
      %v4519 = vpack.c.bf16 %v4455, %v4455
      %v4520 = vpack.c.bf16 %v4456, %v4456
      %v4521 = vpack.c.bf16 %v4457, %v4457
      %v4522 = vpack.c.bf16 %v4458, %v4458
      %v4523 = vpack.c.bf16 %v4459, %v4459
      %v4524 = vpack.c.bf16 %v4460, %v4460
      %v4525 = vpack.c.bf16 %v4461, %v4461
      %v4526 = vpack.c.bf16 %v4462, %v4462
      %v4527 = vpack.c.bf16 %v4463, %v4463
      %v4528 = vpack.c.bf16 %v4464, %v4464
      %v4529 = vpack.c.bf16 %v4465, %v4465
      %v4530 = vpack.c.bf16 %v4466, %v4466
      %v4531 = vpack.c.bf16 %v4467, %v4467
      %v4532 = vpack.c.bf16 %v4468, %v4468
      %v4533 = vpack.c.bf16 %v4469, %v4469
      %v4534 = vpack.c.bf16 %v4470, %v4470
      %v4535 = vpack.c.bf16 %v4471, %v4471
      %v4536 = vpack.c.bf16 %v4472, %v4472
      %v4537 = vpack.c.bf16 %v4473, %v4473
      %v4538 = vpack.c.bf16 %v4474, %v4474
      %v4539 = vld [vmem:[%s5] sm:$0x3]
      %v4540 = vld [vmem:[%s6] sm:$0x1]
      %v4542 = vlaneseq
      %v4543 = vshrl.u32 %v4542, 7
      %v4544 = vsub.s32 0, %v4543
      %v4545 = vrot.slane %v4540, %v4544
      %v4611 = vunpack.c.l.b16 %v4475
      %v4612 = vunpack.c.l.b16 %v4476
      %v4613 = vunpack.c.l.b16 %v4477
      %v4614 = vunpack.c.l.b16 %v4478
      %v4615 = vunpack.c.l.b16 %v4479
      %v4616 = vunpack.c.l.b16 %v4480
      %v4617 = vunpack.c.l.b16 %v4481
      %v4618 = vunpack.c.l.b16 %v4482
      %v4619 = vunpack.c.l.b16 %v4483
      %v4620 = vunpack.c.l.b16 %v4484
      %v4621 = vunpack.c.l.b16 %v4485
      %v4622 = vunpack.c.l.b16 %v4486
      %v4623 = vunpack.c.l.b16 %v4487
      %v4624 = vunpack.c.l.b16 %v4488
      %v4625 = vunpack.c.l.b16 %v4489
      %v4626 = vunpack.c.l.b16 %v4490
      %v4627 = vunpack.c.l.b16 %v4491
      %v4628 = vunpack.c.l.b16 %v4492
      %v4629 = vunpack.c.l.b16 %v4493
      %v4630 = vunpack.c.l.b16 %v4494
      %v4631 = vunpack.c.l.b16 %v4495
      %v4632 = vunpack.c.l.b16 %v4496
      %v4633 = vunpack.c.l.b16 %v4497
      %v4634 = vunpack.c.l.b16 %v4498
      %v4635 = vunpack.c.l.b16 %v4499
      %v4636 = vunpack.c.l.b16 %v4500
      %v4637 = vunpack.c.l.b16 %v4501
      %v4638 = vunpack.c.l.b16 %v4502
      %v4639 = vunpack.c.l.b16 %v4503
      %v4640 = vunpack.c.l.b16 %v4504
      %v4641 = vunpack.c.l.b16 %v4505
      %v4642 = vunpack.c.l.b16 %v4506
      %v4643 = vunpack.c.l.b16 %v4507
      %v4644 = vunpack.c.l.b16 %v4508
      %v4645 = vunpack.c.l.b16 %v4509
      %v4646 = vunpack.c.l.b16 %v4510
      %v4647 = vunpack.c.l.b16 %v4511
      %v4648 = vunpack.c.l.b16 %v4512
      %v4649 = vunpack.c.l.b16 %v4513
      %v4650 = vunpack.c.l.b16 %v4514
      %v4651 = vunpack.c.l.b16 %v4515
      %v4652 = vunpack.c.l.b16 %v4516
      %v4653 = vunpack.c.l.b16 %v4517
      %v4654 = vunpack.c.l.b16 %v4518
      %v4655 = vunpack.c.l.b16 %v4519
      %v4656 = vunpack.c.l.b16 %v4520
      %v4657 = vunpack.c.l.b16 %v4521
      %v4658 = vunpack.c.l.b16 %v4522
      %v4659 = vunpack.c.l.b16 %v4523
      %v4660 = vunpack.c.l.b16 %v4524
      %v4661 = vunpack.c.l.b16 %v4525
      %v4662 = vunpack.c.l.b16 %v4526
      %v4663 = vunpack.c.l.b16 %v4527
      %v4664 = vunpack.c.l.b16 %v4528
      %v4665 = vunpack.c.l.b16 %v4529
      %v4666 = vunpack.c.l.b16 %v4530
      %v4667 = vunpack.c.l.b16 %v4531
      %v4668 = vunpack.c.l.b16 %v4532
      %v4669 = vunpack.c.l.b16 %v4533
      %v4670 = vunpack.c.l.b16 %v4534
      %v4671 = vunpack.c.l.b16 %v4535
      %v4672 = vunpack.c.l.b16 %v4536
      %v4673 = vunpack.c.l.b16 %v4537
      %v4674 = vunpack.c.l.b16 %v4538
      %vm4675 = vcmask 1041409
      %v4676 = vsel %vm4675, %v4612, %v4611
      %vm4677 = vcmask 1042434
      %v4678 = vsel %vm4677, %v4613, %v4676
      %vm4679 = vcmask 1043459
      %v4680 = vsel %vm4679, %v4614, %v4678
      %vm4681 = vcmask 1044484
      %v4682 = vsel %vm4681, %v4615, %v4680
      %vm4683 = vcmask 1045509
      %v4684 = vsel %vm4683, %v4616, %v4682
      %vm4685 = vcmask 1046534
      %v4686 = vsel %vm4685, %v4617, %v4684
      %vm4687 = vcmask 1047559
      %v4688 = vsel %vm4687, %v4618, %v4686
      %v4689 = vsel %vm4675, %v4620, %v4619
      %v4690 = vsel %vm4677, %v4621, %v4689
      %v4691 = vsel %vm4679, %v4622, %v4690
      %v4692 = vsel %vm4681, %v4623, %v4691
      %v4693 = vsel %vm4683, %v4624, %v4692
      %v4694 = vsel %vm4685, %v4625, %v4693
      %v4695 = vsel %vm4687, %v4626, %v4694
      %v4696 = vsel %vm4675, %v4628, %v4627
      %v4697 = vsel %vm4677, %v4629, %v4696
      %v4698 = vsel %vm4679, %v4630, %v4697
      %v4699 = vsel %vm4681, %v4631, %v4698
      %v4700 = vsel %vm4683, %v4632, %v4699
      %v4701 = vsel %vm4685, %v4633, %v4700
      %v4702 = vsel %vm4687, %v4634, %v4701
      %v4703 = vsel %vm4675, %v4636, %v4635
      %v4704 = vsel %vm4677, %v4637, %v4703
      %v4705 = vsel %vm4679, %v4638, %v4704
      %v4706 = vsel %vm4681, %v4639, %v4705
      %v4707 = vsel %vm4683, %v4640, %v4706
      %v4708 = vsel %vm4685, %v4641, %v4707
      %v4709 = vsel %vm4687, %v4642, %v4708
      %v4710 = vsel %vm4675, %v4644, %v4643
      %v4711 = vsel %vm4677, %v4645, %v4710
      %v4712 = vsel %vm4679, %v4646, %v4711
      %v4713 = vsel %vm4681, %v4647, %v4712
      %v4714 = vsel %vm4683, %v4648, %v4713
      %v4715 = vsel %vm4685, %v4649, %v4714
      %v4716 = vsel %vm4687, %v4650, %v4715
      %v4717 = vsel %vm4675, %v4652, %v4651
      %v4718 = vsel %vm4677, %v4653, %v4717
      %v4719 = vsel %vm4679, %v4654, %v4718
      %v4720 = vsel %vm4681, %v4655, %v4719
      %v4721 = vsel %vm4683, %v4656, %v4720
      %v4722 = vsel %vm4685, %v4657, %v4721
      %v4723 = vsel %vm4687, %v4658, %v4722
      %v4724 = vsel %vm4675, %v4660, %v4659
      %v4725 = vsel %vm4677, %v4661, %v4724
      %v4726 = vsel %vm4679, %v4662, %v4725
      %v4727 = vsel %vm4681, %v4663, %v4726
      %v4728 = vsel %vm4683, %v4664, %v4727
      %v4729 = vsel %vm4685, %v4665, %v4728
      %v4730 = vsel %vm4687, %v4666, %v4729
      %v4731 = vsel %vm4675, %v4668, %v4667
      %v4732 = vsel %vm4677, %v4669, %v4731
      %v4733 = vsel %vm4679, %v4670, %v4732
      %v4734 = vsel %vm4681, %v4671, %v4733
      %v4735 = vsel %vm4683, %v4672, %v4734
      %v4736 = vsel %vm4685, %v4673, %v4735
      %v4737 = vsel %vm4687, %v4674, %v4736
      %v4738 = vpack.c.b16 %v4695, %v4688
      %v4739 = vpack.c.b16 %v4709, %v4702
      %v4740 = vpack.c.b16 %v4723, %v4716
      %v4741 = vpack.c.b16 %v4737, %v4730
      %v4743 = vsel %vm3042, %v4738, 0
      %v4746 = vsel %vm3042, %v4739, 0
      %v4749 = vsel %vm3042, %v4740, 0
      %v4752 = vsel %vm3042, %v4741, 0
      %v4755 = vsel %vm3365, %v4539, 0
      %4757 = vmatprep.subr.bf16.mxu0 0
      %4758 = vmatpush1.bf16.msra.mxu0 %v4755
      %4759 = vmatprep.subr.bf16.mxu0 0
      %4760 = vmatpush1.bf16.msra.mxu0 0
      %4761 = vmatprep.subr.bf16.mxu0 0
      %4762 = vmatpush1.bf16.msra.mxu0 0
      %4763 = vmatprep.subr.bf16.mxu0 0
      %4764 = vmatpush1.bf16.msra.mxu0 0
      %4765 = vmatprep.subr.bf16.mxu0 0
      %4766 = vmatpush1.bf16.msra.mxu0 0
      %4767 = vmatprep.subr.bf16.mxu0 0
      %4768 = vmatpush1.bf16.msra.mxu0 0
      %4769 = vmatprep.subr.bf16.mxu0 0
      %4770 = vmatpush1.bf16.msra.mxu0 0
      %4771 = vmatprep.subr.bf16.mxu0 0
      %4772 = vmatpush1.bf16.msra.mxu0 0
      %4773 = vmatprep.subr.bf16.mxu0 0
      %4774 = vmatpush1.bf16.msra.mxu0 0
      %4775 = vmatprep.subr.bf16.mxu0 0
      %4776 = vmatpush1.bf16.msra.mxu0 0
      %4777 = vmatprep.subr.bf16.mxu0 0
      %4778 = vmatpush1.bf16.msra.mxu0 0
      %4779 = vmatprep.subr.bf16.mxu0 0
      %4780 = vmatpush1.bf16.msra.mxu0 0
      %4781 = vmatprep.subr.bf16.mxu0 0
      %4782 = vmatpush1.bf16.msra.mxu0 0
      %4783 = vmatprep.subr.bf16.mxu0 0
      %4784 = vmatpush1.bf16.msra.mxu0 0
      %4785 = vmatprep.subr.bf16.mxu0 0
      %4786 = vmatpush1.bf16.msra.mxu0 0
      %4787 = vmatprep.subr.bf16.mxu0 0
      %4788 = vmatpush1.bf16.msra.mxu0 0
      %4789 = vmatprep.mubr.bf16.mxu0 0
      %4790 = vmatmul.mubr.bf16.gmra.mrb[0].mxu0 %v4743
      %v4791 = vpop.f32.mrb[0].mxu0
      %v4792 = vadd.f32 %v4545, %v4791
      %v4793 = vpop.f32.mrb[0].mxu0
      %v4794 = vpop.f32.mrb[0].mxu0
      %v4795 = vadd.f32 %v4545, %v4794
      %v4796 = vpop.f32.mrb[0].mxu0
      %4797 = vmatprep.mubr.bf16.mxu0 0
      %4798 = vmatmul.mubr.bf16.gmra.mrb[0].mxu0 %v4746
      %v4799 = vpop.f32.mrb[0].mxu0
      %v4800 = vadd.f32 %v4545, %v4799
      %v4801 = vpop.f32.mrb[0].mxu0
      %v4802 = vpop.f32.mrb[0].mxu0
      %v4803 = vadd.f32 %v4545, %v4802
      %v4804 = vpop.f32.mrb[0].mxu0
      %4805 = vmatprep.mubr.bf16.mxu0 0
      %4806 = vmatmul.mubr.bf16.gmra.mrb[0].mxu0 %v4749
      %v4807 = vpop.f32.mrb[0].mxu0
      %v4808 = vadd.f32 %v4545, %v4807
      %v4809 = vpop.f32.mrb[0].mxu0
      %v4810 = vpop.f32.mrb[0].mxu0
      %v4811 = vadd.f32 %v4545, %v4810
      %v4812 = vpop.f32.mrb[0].mxu0
      %4813 = vmatprep.mubr.bf16.mxu0 0
      %4814 = vmatmul.mubr.bf16.gmra.mrb[0].mxu0 %v4752
      %v4815 = vpop.f32.mrb[0].mxu0
      %v4816 = vadd.f32 %v4545, %v4815
      %v4817 = vpop.f32.mrb[0].mxu0
      %v4818 = vpop.f32.mrb[0].mxu0
      %v4819 = vadd.f32 %v4545, %v4818
      %v4820 = vpop.f32.mrb[0].mxu0
      %4821 = vdwg.mxu0
      %v4822 = vunpack.c.l.bf16 %v334
      %v4823 = vunpack.c.l.bf16 %v335
      %v4824 = vunpack.c.l.bf16 %v336
      %v4825 = vunpack.c.l.bf16 %v337
      %v4826 = vunpack.c.l.bf16 %v338
      %v4827 = vunpack.c.l.bf16 %v339
      %v4828 = vunpack.c.l.bf16 %v340
      %v4829 = vunpack.c.l.bf16 %v341
      %v4830 = vunpack.c.l.bf16 %v342
      %v4831 = vunpack.c.l.bf16 %v343
      %v4832 = vunpack.c.l.bf16 %v344
      %v4833 = vunpack.c.l.bf16 %v345
      %v4834 = vunpack.c.l.bf16 %v346
      %v4835 = vunpack.c.l.bf16 %v347
      %v4836 = vunpack.c.l.bf16 %v348
      %v4837 = vunpack.c.l.bf16 %v349
      %v4838 = vunpack.c.l.bf16 %v350
      %v4839 = vunpack.c.l.bf16 %v351
      %v4840 = vunpack.c.l.bf16 %v352
      %v4841 = vunpack.c.l.bf16 %v353
      %v4842 = vunpack.c.l.bf16 %v354
      %v4843 = vunpack.c.l.bf16 %v355
      %v4844 = vunpack.c.l.bf16 %v356
      %v4845 = vunpack.c.l.bf16 %v357
      %v4846 = vunpack.c.l.bf16 %v358
      %v4847 = vunpack.c.l.bf16 %v359
      %v4848 = vunpack.c.l.bf16 %v360
      %v4849 = vunpack.c.l.bf16 %v361
      %v4850 = vunpack.c.l.bf16 %v362
      %v4851 = vunpack.c.l.bf16 %v363
      %v4852 = vunpack.c.l.bf16 %v364
      %v4853 = vunpack.c.l.bf16 %v365
      %v4854 = vsel %vm454, %v4822, 0.0
      %v4855 = vsel %vm454, %v4824, 0.0
      %v4856 = vadd.f32 %v4854, %v4855
      %v4857 = vsel %vm454, %v4823, 0.0
      %v4858 = vsel %vm454, %v4825, 0.0
      %v4859 = vadd.f32 %v4857, %v4858
      %v4860 = vsel %vm454, %v4826, 0.0
      %v4861 = vsel %vm454, %v4828, 0.0
      %v4862 = vadd.f32 %v4860, %v4861
      %v4863 = vsel %vm454, %v4827, 0.0
      %v4864 = vsel %vm454, %v4829, 0.0
      %v4865 = vadd.f32 %v4863, %v4864
      %v4866 = vsel %vm454, %v4830, 0.0
      %v4867 = vsel %vm454, %v4832, 0.0
      %v4868 = vadd.f32 %v4866, %v4867
      %v4869 = vsel %vm454, %v4831, 0.0
      %v4870 = vsel %vm454, %v4833, 0.0
      %v4871 = vadd.f32 %v4869, %v4870
      %v4872 = vsel %vm454, %v4834, 0.0
      %v4873 = vsel %vm454, %v4836, 0.0
      %v4874 = vadd.f32 %v4872, %v4873
      %v4875 = vsel %vm454, %v4835, 0.0
      %v4876 = vsel %vm454, %v4837, 0.0
      %v4877 = vadd.f32 %v4875, %v4876
      %v4878 = vsel %vm454, %v4838, 0.0
      %v4879 = vsel %vm454, %v4840, 0.0
      %v4880 = vadd.f32 %v4878, %v4879
      %v4881 = vsel %vm454, %v4839, 0.0
      %v4882 = vsel %vm454, %v4841, 0.0
      %v4883 = vadd.f32 %v4881, %v4882
      %v4884 = vsel %vm454, %v4842, 0.0
      %v4885 = vsel %vm454, %v4844, 0.0
      %v4886 = vadd.f32 %v4884, %v4885
      %v4887 = vsel %vm454, %v4843, 0.0
      %v4888 = vsel %vm454, %v4845, 0.0
      %v4889 = vadd.f32 %v4887, %v4888
      %v4890 = vsel %vm454, %v4846, 0.0
      %v4891 = vsel %vm454, %v4848, 0.0
      %v4892 = vadd.f32 %v4890, %v4891
      %v4893 = vsel %vm454, %v4847, 0.0
      %v4894 = vsel %vm454, %v4849, 0.0
      %v4895 = vadd.f32 %v4893, %v4894
      %v4896 = vsel %vm454, %v4850, 0.0
      %v4897 = vsel %vm454, %v4852, 0.0
      %v4898 = vadd.f32 %v4896, %v4897
      %v4899 = vsel %vm454, %v4851, 0.0
      %v4900 = vsel %vm454, %v4853, 0.0
      %v4901 = vadd.f32 %v4899, %v4900
      %v4918 = vcombine.high %v4856, %v4856
      %v4920 = vunpack.c.l.s4 1983009808
      %v4921 = vunpack.c.0.s8 %v4920
      %v4922 = vlaneseq
      %v4923 = vshrl.u32 %v4922, 7
      %v4924 = vsub.s32 %v4921, %v4923
      %v4925 = vrot.slane %v4856, %v4924
      %v4927 = vunpack.c.l.s4 1983009808
      %v4928 = vunpack.c.0.s8 %v4927
      %v4929 = vlaneseq
      %v4930 = vshrl.u32 %v4929, 7
      %v4931 = vsub.s32 %v4928, %v4930
      %v4932 = vrot.slane %v4918, %v4931
      %v4933 = vcombine.high %v4925, %v4925
      %v4934 = vcombine.high %v4932, %v4932
      %v4935 = vcombine.high %v4859, %v4859
      %v4937 = vunpack.c.l.s4 1983009808
      %v4938 = vunpack.c.0.s8 %v4937
      %v4939 = vlaneseq
      %v4940 = vshrl.u32 %v4939, 7
      %v4941 = vsub.s32 %v4938, %v4940
      %v4942 = vrot.slane %v4859, %v4941
      %v4944 = vunpack.c.l.s4 1983009808
      %v4945 = vunpack.c.0.s8 %v4944
      %v4946 = vlaneseq
      %v4947 = vshrl.u32 %v4946, 7
      %v4948 = vsub.s32 %v4945, %v4947
      %v4949 = vrot.slane %v4935, %v4948
      %v4950 = vcombine.high %v4942, %v4942
      %v4951 = vcombine.high %v4949, %v4949
      %v4952 = vcombine.high %v4862, %v4862
      %v4954 = vunpack.c.l.s4 1983009808
      %v4955 = vunpack.c.0.s8 %v4954
      %v4956 = vlaneseq
      %v4957 = vshrl.u32 %v4956, 7
      %v4958 = vsub.s32 %v4955, %v4957
      %v4959 = vrot.slane %v4862, %v4958
      %v4961 = vunpack.c.l.s4 1983009808
      %v4962 = vunpack.c.0.s8 %v4961
      %v4963 = vlaneseq
      %v4964 = vshrl.u32 %v4963, 7
      %v4965 = vsub.s32 %v4962, %v4964
      %v4966 = vrot.slane %v4952, %v4965
      %v4967 = vcombine.high %v4959, %v4959
      %v4968 = vcombine.high %v4966, %v4966
      %v4969 = vcombine.high %v4865, %v4865
      %v4971 = vunpack.c.l.s4 1983009808
      %v4972 = vunpack.c.0.s8 %v4971
      %v4973 = vlaneseq
      %v4974 = vshrl.u32 %v4973, 7
      %v4975 = vsub.s32 %v4972, %v4974
      %v4976 = vrot.slane %v4865, %v4975
      %v4978 = vunpack.c.l.s4 1983009808
      %v4979 = vunpack.c.0.s8 %v4978
      %v4980 = vlaneseq
      %v4981 = vshrl.u32 %v4980, 7
      %v4982 = vsub.s32 %v4979, %v4981
      %v4983 = vrot.slane %v4969, %v4982
      %v4984 = vcombine.high %v4976, %v4976
      %v4985 = vcombine.high %v4983, %v4983
      %v4986 = vcombine.high %v4868, %v4868
      %v4988 = vunpack.c.l.s4 1983009808
      %v4989 = vunpack.c.0.s8 %v4988
      %v4990 = vlaneseq
      %v4991 = vshrl.u32 %v4990, 7
      %v4992 = vsub.s32 %v4989, %v4991
      %v4993 = vrot.slane %v4868, %v4992
      %v4995 = vunpack.c.l.s4 1983009808
      %v4996 = vunpack.c.0.s8 %v4995
      %v4997 = vlaneseq
      %v4998 = vshrl.u32 %v4997, 7
      %v4999 = vsub.s32 %v4996, %v4998
      %v5000 = vrot.slane %v4986, %v4999
      %v5001 = vcombine.high %v4993, %v4993
      %v5002 = vcombine.high %v5000, %v5000
      %v5003 = vcombine.high %v4871, %v4871
      %v5005 = vunpack.c.l.s4 1983009808
      %v5006 = vunpack.c.0.s8 %v5005
      %v5007 = vlaneseq
      %v5008 = vshrl.u32 %v5007, 7
      %v5009 = vsub.s32 %v5006, %v5008
      %v5010 = vrot.slane %v4871, %v5009
      %v5012 = vunpack.c.l.s4 1983009808
      %v5013 = vunpack.c.0.s8 %v5012
      %v5014 = vlaneseq
      %v5015 = vshrl.u32 %v5014, 7
      %v5016 = vsub.s32 %v5013, %v5015
      %v5017 = vrot.slane %v5003, %v5016
      %v5018 = vcombine.high %v5010, %v5010
      %v5019 = vcombine.high %v5017, %v5017
      %v5020 = vcombine.high %v4874, %v4874
      %v5022 = vunpack.c.l.s4 1983009808
      %v5023 = vunpack.c.0.s8 %v5022
      %v5024 = vlaneseq
      %v5025 = vshrl.u32 %v5024, 7
      %v5026 = vsub.s32 %v5023, %v5025
      %v5027 = vrot.slane %v4874, %v5026
      %v5029 = vunpack.c.l.s4 1983009808
      %v5030 = vunpack.c.0.s8 %v5029
      %v5031 = vlaneseq
      %v5032 = vshrl.u32 %v5031, 7
      %v5033 = vsub.s32 %v5030, %v5032
      %v5034 = vrot.slane %v5020, %v5033
      %v5035 = vcombine.high %v5027, %v5027
      %v5036 = vcombine.high %v5034, %v5034
      %v5037 = vcombine.high %v4877, %v4877
      %v5039 = vunpack.c.l.s4 1983009808
      %v5040 = vunpack.c.0.s8 %v5039
      %v5041 = vlaneseq
      %v5042 = vshrl.u32 %v5041, 7
      %v5043 = vsub.s32 %v5040, %v5042
      %v5044 = vrot.slane %v4877, %v5043
      %v5046 = vunpack.c.l.s4 1983009808
      %v5047 = vunpack.c.0.s8 %v5046
      %v5048 = vlaneseq
      %v5049 = vshrl.u32 %v5048, 7
      %v5050 = vsub.s32 %v5047, %v5049
      %v5051 = vrot.slane %v5037, %v5050
      %v5052 = vcombine.high %v5044, %v5044
      %v5053 = vcombine.high %v5051, %v5051
      %v5054 = vcombine.high %v4880, %v4880
      %v5056 = vunpack.c.l.s4 1983009808
      %v5057 = vunpack.c.0.s8 %v5056
      %v5058 = vlaneseq
      %v5059 = vshrl.u32 %v5058, 7
      %v5060 = vsub.s32 %v5057, %v5059
      %v5061 = vrot.slane %v4880, %v5060
      %v5063 = vunpack.c.l.s4 1983009808
      %v5064 = vunpack.c.0.s8 %v5063
      %v5065 = vlaneseq
      %v5066 = vshrl.u32 %v5065, 7
      %v5067 = vsub.s32 %v5064, %v5066
      %v5068 = vrot.slane %v5054, %v5067
      %v5069 = vcombine.high %v5061, %v5061
      %v5070 = vcombine.high %v5068, %v5068
      %v5071 = vcombine.high %v4883, %v4883
      %v5073 = vunpack.c.l.s4 1983009808
      %v5074 = vunpack.c.0.s8 %v5073
      %v5075 = vlaneseq
      %v5076 = vshrl.u32 %v5075, 7
      %v5077 = vsub.s32 %v5074, %v5076
      %v5078 = vrot.slane %v4883, %v5077
      %v5080 = vunpack.c.l.s4 1983009808
      %v5081 = vunpack.c.0.s8 %v5080
      %v5082 = vlaneseq
      %v5083 = vshrl.u32 %v5082, 7
      %v5084 = vsub.s32 %v5081, %v5083
      %v5085 = vrot.slane %v5071, %v5084
      %v5086 = vcombine.high %v5078, %v5078
      %v5087 = vcombine.high %v5085, %v5085
      %v5088 = vcombine.high %v4886, %v4886
      %v5090 = vunpack.c.l.s4 1983009808
      %v5091 = vunpack.c.0.s8 %v5090
      %v5092 = vlaneseq
      %v5093 = vshrl.u32 %v5092, 7
      %v5094 = vsub.s32 %v5091, %v5093
      %v5095 = vrot.slane %v4886, %v5094
      %v5097 = vunpack.c.l.s4 1983009808
      %v5098 = vunpack.c.0.s8 %v5097
      %v5099 = vlaneseq
      %v5100 = vshrl.u32 %v5099, 7
      %v5101 = vsub.s32 %v5098, %v5100
      %v5102 = vrot.slane %v5088, %v5101
      %v5103 = vcombine.high %v5095, %v5095
      %v5104 = vcombine.high %v5102, %v5102
      %v5105 = vcombine.high %v4889, %v4889
      %v5107 = vunpack.c.l.s4 1983009808
      %v5108 = vunpack.c.0.s8 %v5107
      %v5109 = vlaneseq
      %v5110 = vshrl.u32 %v5109, 7
      %v5111 = vsub.s32 %v5108, %v5110
      %v5112 = vrot.slane %v4889, %v5111
      %v5114 = vunpack.c.l.s4 1983009808
      %v5115 = vunpack.c.0.s8 %v5114
      %v5116 = vlaneseq
      %v5117 = vshrl.u32 %v5116, 7
      %v5118 = vsub.s32 %v5115, %v5117
      %v5119 = vrot.slane %v5105, %v5118
      %v5120 = vcombine.high %v5112, %v5112
      %v5121 = vcombine.high %v5119, %v5119
      %v5122 = vcombine.high %v4892, %v4892
      %v5124 = vunpack.c.l.s4 1983009808
      %v5125 = vunpack.c.0.s8 %v5124
      %v5126 = vlaneseq
      %v5127 = vshrl.u32 %v5126, 7
      %v5128 = vsub.s32 %v5125, %v5127
      %v5129 = vrot.slane %v4892, %v5128
      %v5131 = vunpack.c.l.s4 1983009808
      %v5132 = vunpack.c.0.s8 %v5131
      %v5133 = vlaneseq
      %v5134 = vshrl.u32 %v5133, 7
      %v5135 = vsub.s32 %v5132, %v5134
      %v5136 = vrot.slane %v5122, %v5135
      %v5137 = vcombine.high %v5129, %v5129
      %v5138 = vcombine.high %v5136, %v5136
      %v5139 = vcombine.high %v4895, %v4895
      %v5141 = vunpack.c.l.s4 1983009808
      %v5142 = vunpack.c.0.s8 %v5141
      %v5143 = vlaneseq
      %v5144 = vshrl.u32 %v5143, 7
      %v5145 = vsub.s32 %v5142, %v5144
      %v5146 = vrot.slane %v4895, %v5145
      %v5148 = vunpack.c.l.s4 1983009808
      %v5149 = vunpack.c.0.s8 %v5148
      %v5150 = vlaneseq
      %v5151 = vshrl.u32 %v5150, 7
      %v5152 = vsub.s32 %v5149, %v5151
      %v5153 = vrot.slane %v5139, %v5152
      %v5154 = vcombine.high %v5146, %v5146
      %v5155 = vcombine.high %v5153, %v5153
      %v5156 = vcombine.high %v4898, %v4898
      %v5158 = vunpack.c.l.s4 1983009808
      %v5159 = vunpack.c.0.s8 %v5158
      %v5160 = vlaneseq
      %v5161 = vshrl.u32 %v5160, 7
      %v5162 = vsub.s32 %v5159, %v5161
      %v5163 = vrot.slane %v4898, %v5162
      %v5165 = vunpack.c.l.s4 1983009808
      %v5166 = vunpack.c.0.s8 %v5165
      %v5167 = vlaneseq
      %v5168 = vshrl.u32 %v5167, 7
      %v5169 = vsub.s32 %v5166, %v5168
      %v5170 = vrot.slane %v5156, %v5169
      %v5171 = vcombine.high %v5163, %v5163
      %v5172 = vcombine.high %v5170, %v5170
      %v5173 = vcombine.high %v4901, %v4901
      %v5175 = vunpack.c.l.s4 1983009808
      %v5176 = vunpack.c.0.s8 %v5175
      %v5177 = vlaneseq
      %v5178 = vshrl.u32 %v5177, 7
      %v5179 = vsub.s32 %v5176, %v5178
      %v5180 = vrot.slane %v4901, %v5179
      %v5182 = vunpack.c.l.s4 1983009808
      %v5183 = vunpack.c.0.s8 %v5182
      %v5184 = vlaneseq
      %v5185 = vshrl.u32 %v5184, 7
      %v5186 = vsub.s32 %v5183, %v5185
      %v5187 = vrot.slane %v5173, %v5186
      %v5188 = vcombine.high %v5180, %v5180
      %v5189 = vcombine.high %v5187, %v5187
      %vm5254 = vcmask 58368
      %v5255 = vsel %vm5254, %v4925, 0.0
      %v5256 = vrot.slane %v5255, 4
      %v5257 = vadd.f32 %v5255, %v5256
      %v5258 = vrot.slane %v5257, 2
      %v5259 = vadd.f32 %v5257, %v5258
      %v5260 = vrot.slane %v5259, 1
      %v5261 = vadd.f32 %v5259, %v5260
      %v5262 = vsel %vm5254, %v4933, 0.0
      %v5263 = vrot.slane %v5262, 4
      %v5264 = vadd.f32 %v5262, %v5263
      %v5265 = vrot.slane %v5264, 2
      %v5266 = vadd.f32 %v5264, %v5265
      %v5267 = vrot.slane %v5266, 1
      %v5268 = vadd.f32 %v5266, %v5267
      %v5269 = vsel %vm5254, %v4932, 0.0
      %v5270 = vrot.slane %v5269, 4
      %v5271 = vadd.f32 %v5269, %v5270
      %v5272 = vrot.slane %v5271, 2
      %v5273 = vadd.f32 %v5271, %v5272
      %v5274 = vrot.slane %v5273, 1
      %v5275 = vadd.f32 %v5273, %v5274
      %v5276 = vsel %vm5254, %v4934, 0.0
      %v5277 = vrot.slane %v5276, 4
      %v5278 = vadd.f32 %v5276, %v5277
      %v5279 = vrot.slane %v5278, 2
      %v5280 = vadd.f32 %v5278, %v5279
      %v5281 = vrot.slane %v5280, 1
      %v5282 = vadd.f32 %v5280, %v5281
      %v5283 = vsel %vm5254, %v4942, 0.0
      %v5284 = vrot.slane %v5283, 4
      %v5285 = vadd.f32 %v5283, %v5284
      %v5286 = vrot.slane %v5285, 2
      %v5287 = vadd.f32 %v5285, %v5286
      %v5288 = vrot.slane %v5287, 1
      %v5289 = vadd.f32 %v5287, %v5288
      %v5290 = vsel %vm5254, %v4950, 0.0
      %v5291 = vrot.slane %v5290, 4
      %v5292 = vadd.f32 %v5290, %v5291
      %v5293 = vrot.slane %v5292, 2
      %v5294 = vadd.f32 %v5292, %v5293
      %v5295 = vrot.slane %v5294, 1
      %v5296 = vadd.f32 %v5294, %v5295
      %v5297 = vsel %vm5254, %v4949, 0.0
      %v5298 = vrot.slane %v5297, 4
      %v5299 = vadd.f32 %v5297, %v5298
      %v5300 = vrot.slane %v5299, 2
      %v5301 = vadd.f32 %v5299, %v5300
      %v5302 = vrot.slane %v5301, 1
      %v5303 = vadd.f32 %v5301, %v5302
      %v5304 = vsel %vm5254, %v4951, 0.0
      %v5305 = vrot.slane %v5304, 4
      %v5306 = vadd.f32 %v5304, %v5305
      %v5307 = vrot.slane %v5306, 2
      %v5308 = vadd.f32 %v5306, %v5307
      %v5309 = vrot.slane %v5308, 1
      %v5310 = vadd.f32 %v5308, %v5309
      %v5311 = vsel %vm5254, %v4959, 0.0
      %v5312 = vrot.slane %v5311, 4
      %v5313 = vadd.f32 %v5311, %v5312
      %v5314 = vrot.slane %v5313, 2
      %v5315 = vadd.f32 %v5313, %v5314
      %v5316 = vrot.slane %v5315, 1
      %v5317 = vadd.f32 %v5315, %v5316
      %v5318 = vsel %vm5254, %v4967, 0.0
      %v5319 = vrot.slane %v5318, 4
      %v5320 = vadd.f32 %v5318, %v5319
      %v5321 = vrot.slane %v5320, 2
      %v5322 = vadd.f32 %v5320, %v5321
      %v5323 = vrot.slane %v5322, 1
      %v5324 = vadd.f32 %v5322, %v5323
      %v5325 = vsel %vm5254, %v4966, 0.0
      %v5326 = vrot.slane %v5325, 4
      %v5327 = vadd.f32 %v5325, %v5326
      %v5328 = vrot.slane %v5327, 2
      %v5329 = vadd.f32 %v5327, %v5328
      %v5330 = vrot.slane %v5329, 1
      %v5331 = vadd.f32 %v5329, %v5330
      %v5332 = vsel %vm5254, %v4968, 0.0
      %v5333 = vrot.slane %v5332, 4
      %v5334 = vadd.f32 %v5332, %v5333
      %v5335 = vrot.slane %v5334, 2
      %v5336 = vadd.f32 %v5334, %v5335
      %v5337 = vrot.slane %v5336, 1
      %v5338 = vadd.f32 %v5336, %v5337
      %v5339 = vsel %vm5254, %v4976, 0.0
      %v5340 = vrot.slane %v5339, 4
      %v5341 = vadd.f32 %v5339, %v5340
      %v5342 = vrot.slane %v5341, 2
      %v5343 = vadd.f32 %v5341, %v5342
      %v5344 = vrot.slane %v5343, 1
      %v5345 = vadd.f32 %v5343, %v5344
      %v5346 = vsel %vm5254, %v4984, 0.0
      %v5347 = vrot.slane %v5346, 4
      %v5348 = vadd.f32 %v5346, %v5347
      %v5349 = vrot.slane %v5348, 2
      %v5350 = vadd.f32 %v5348, %v5349
      %v5351 = vrot.slane %v5350, 1
      %v5352 = vadd.f32 %v5350, %v5351
      %v5353 = vsel %vm5254, %v4983, 0.0
      %v5354 = vrot.slane %v5353, 4
      %v5355 = vadd.f32 %v5353, %v5354
      %v5356 = vrot.slane %v5355, 2
      %v5357 = vadd.f32 %v5355, %v5356
      %v5358 = vrot.slane %v5357, 1
      %v5359 = vadd.f32 %v5357, %v5358
      %v5360 = vsel %vm5254, %v4985, 0.0
      %v5361 = vrot.slane %v5360, 4
      %v5362 = vadd.f32 %v5360, %v5361
      %v5363 = vrot.slane %v5362, 2
      %v5364 = vadd.f32 %v5362, %v5363
      %v5365 = vrot.slane %v5364, 1
      %v5366 = vadd.f32 %v5364, %v5365
      %v5367 = vsel %vm5254, %v4993, 0.0
      %v5368 = vrot.slane %v5367, 4
      %v5369 = vadd.f32 %v5367, %v5368
      %v5370 = vrot.slane %v5369, 2
      %v5371 = vadd.f32 %v5369, %v5370
      %v5372 = vrot.slane %v5371, 1
      %v5373 = vadd.f32 %v5371, %v5372
      %v5374 = vsel %vm5254, %v5001, 0.0
      %v5375 = vrot.slane %v5374, 4
      %v5376 = vadd.f32 %v5374, %v5375
      %v5377 = vrot.slane %v5376, 2
      %v5378 = vadd.f32 %v5376, %v5377
      %v5379 = vrot.slane %v5378, 1
      %v5380 = vadd.f32 %v5378, %v5379
      %v5381 = vsel %vm5254, %v5000, 0.0
      %v5382 = vrot.slane %v5381, 4
      %v5383 = vadd.f32 %v5381, %v5382
      %v5384 = vrot.slane %v5383, 2
      %v5385 = vadd.f32 %v5383, %v5384
      %v5386 = vrot.slane %v5385, 1
      %v5387 = vadd.f32 %v5385, %v5386
      %v5388 = vsel %vm5254, %v5002, 0.0
      %v5389 = vrot.slane %v5388, 4
      %v5390 = vadd.f32 %v5388, %v5389
      %v5391 = vrot.slane %v5390, 2
      %v5392 = vadd.f32 %v5390, %v5391
      %v5393 = vrot.slane %v5392, 1
      %v5394 = vadd.f32 %v5392, %v5393
      %v5395 = vsel %vm5254, %v5010, 0.0
      %v5396 = vrot.slane %v5395, 4
      %v5397 = vadd.f32 %v5395, %v5396
      %v5398 = vrot.slane %v5397, 2
      %v5399 = vadd.f32 %v5397, %v5398
      %v5400 = vrot.slane %v5399, 1
      %v5401 = vadd.f32 %v5399, %v5400
      %v5402 = vsel %vm5254, %v5018, 0.0
      %v5403 = vrot.slane %v5402, 4
      %v5404 = vadd.f32 %v5402, %v5403
      %v5405 = vrot.slane %v5404, 2
      %v5406 = vadd.f32 %v5404, %v5405
      %v5407 = vrot.slane %v5406, 1
      %v5408 = vadd.f32 %v5406, %v5407
      %v5409 = vsel %vm5254, %v5017, 0.0
      %v5410 = vrot.slane %v5409, 4
      %v5411 = vadd.f32 %v5409, %v5410
      %v5412 = vrot.slane %v5411, 2
      %v5413 = vadd.f32 %v5411, %v5412
      %v5414 = vrot.slane %v5413, 1
      %v5415 = vadd.f32 %v5413, %v5414
      %v5416 = vsel %vm5254, %v5019, 0.0
      %v5417 = vrot.slane %v5416, 4
      %v5418 = vadd.f32 %v5416, %v5417
      %v5419 = vrot.slane %v5418, 2
      %v5420 = vadd.f32 %v5418, %v5419
      %v5421 = vrot.slane %v5420, 1
      %v5422 = vadd.f32 %v5420, %v5421
      %v5423 = vsel %vm5254, %v5027, 0.0
      %v5424 = vrot.slane %v5423, 4
      %v5425 = vadd.f32 %v5423, %v5424
      %v5426 = vrot.slane %v5425, 2
      %v5427 = vadd.f32 %v5425, %v5426
      %v5428 = vrot.slane %v5427, 1
      %v5429 = vadd.f32 %v5427, %v5428
      %v5430 = vsel %vm5254, %v5035, 0.0
      %v5431 = vrot.slane %v5430, 4
      %v5432 = vadd.f32 %v5430, %v5431
      %v5433 = vrot.slane %v5432, 2
      %v5434 = vadd.f32 %v5432, %v5433
      %v5435 = vrot.slane %v5434, 1
      %v5436 = vadd.f32 %v5434, %v5435
      %v5437 = vsel %vm5254, %v5034, 0.0
      %v5438 = vrot.slane %v5437, 4
      %v5439 = vadd.f32 %v5437, %v5438
      %v5440 = vrot.slane %v5439, 2
      %v5441 = vadd.f32 %v5439, %v5440
      %v5442 = vrot.slane %v5441, 1
      %v5443 = vadd.f32 %v5441, %v5442
      %v5444 = vsel %vm5254, %v5036, 0.0
      %v5445 = vrot.slane %v5444, 4
      %v5446 = vadd.f32 %v5444, %v5445
      %v5447 = vrot.slane %v5446, 2
      %v5448 = vadd.f32 %v5446, %v5447
      %v5449 = vrot.slane %v5448, 1
      %v5450 = vadd.f32 %v5448, %v5449
      %v5451 = vsel %vm5254, %v5044, 0.0
      %v5452 = vrot.slane %v5451, 4
      %v5453 = vadd.f32 %v5451, %v5452
      %v5454 = vrot.slane %v5453, 2
      %v5455 = vadd.f32 %v5453, %v5454
      %v5456 = vrot.slane %v5455, 1
      %v5457 = vadd.f32 %v5455, %v5456
      %v5458 = vsel %vm5254, %v5052, 0.0
      %v5459 = vrot.slane %v5458, 4
      %v5460 = vadd.f32 %v5458, %v5459
      %v5461 = vrot.slane %v5460, 2
      %v5462 = vadd.f32 %v5460, %v5461
      %v5463 = vrot.slane %v5462, 1
      %v5464 = vadd.f32 %v5462, %v5463
      %v5465 = vsel %vm5254, %v5051, 0.0
      %v5466 = vrot.slane %v5465, 4
      %v5467 = vadd.f32 %v5465, %v5466
      %v5468 = vrot.slane %v5467, 2
      %v5469 = vadd.f32 %v5467, %v5468
      %v5470 = vrot.slane %v5469, 1
      %v5471 = vadd.f32 %v5469, %v5470
      %v5472 = vsel %vm5254, %v5053, 0.0
      %v5473 = vrot.slane %v5472, 4
      %v5474 = vadd.f32 %v5472, %v5473
      %v5475 = vrot.slane %v5474, 2
      %v5476 = vadd.f32 %v5474, %v5475
      %v5477 = vrot.slane %v5476, 1
      %v5478 = vadd.f32 %v5476, %v5477
      %v5479 = vsel %vm5254, %v5061, 0.0
      %v5480 = vrot.slane %v5479, 4
      %v5481 = vadd.f32 %v5479, %v5480
      %v5482 = vrot.slane %v5481, 2
      %v5483 = vadd.f32 %v5481, %v5482
      %v5484 = vrot.slane %v5483, 1
      %v5485 = vadd.f32 %v5483, %v5484
      %v5486 = vsel %vm5254, %v5069, 0.0
      %v5487 = vrot.slane %v5486, 4
      %v5488 = vadd.f32 %v5486, %v5487
      %v5489 = vrot.slane %v5488, 2
      %v5490 = vadd.f32 %v5488, %v5489
      %v5491 = vrot.slane %v5490, 1
      %v5492 = vadd.f32 %v5490, %v5491
      %v5493 = vsel %vm5254, %v5068, 0.0
      %v5494 = vrot.slane %v5493, 4
      %v5495 = vadd.f32 %v5493, %v5494
      %v5496 = vrot.slane %v5495, 2
      %v5497 = vadd.f32 %v5495, %v5496
      %v5498 = vrot.slane %v5497, 1
      %v5499 = vadd.f32 %v5497, %v5498
      %v5500 = vsel %vm5254, %v5070, 0.0
      %v5501 = vrot.slane %v5500, 4
      %v5502 = vadd.f32 %v5500, %v5501
      %v5503 = vrot.slane %v5502, 2
      %v5504 = vadd.f32 %v5502, %v5503
      %v5505 = vrot.slane %v5504, 1
      %v5506 = vadd.f32 %v5504, %v5505
      %v5507 = vsel %vm5254, %v5078, 0.0
      %v5508 = vrot.slane %v5507, 4
      %v5509 = vadd.f32 %v5507, %v5508
      %v5510 = vrot.slane %v5509, 2
      %v5511 = vadd.f32 %v5509, %v5510
      %v5512 = vrot.slane %v5511, 1
      %v5513 = vadd.f32 %v5511, %v5512
      %v5514 = vsel %vm5254, %v5086, 0.0
      %v5515 = vrot.slane %v5514, 4
      %v5516 = vadd.f32 %v5514, %v5515
      %v5517 = vrot.slane %v5516, 2
      %v5518 = vadd.f32 %v5516, %v5517
      %v5519 = vrot.slane %v5518, 1
      %v5520 = vadd.f32 %v5518, %v5519
      %v5521 = vsel %vm5254, %v5085, 0.0
      %v5522 = vrot.slane %v5521, 4
      %v5523 = vadd.f32 %v5521, %v5522
      %v5524 = vrot.slane %v5523, 2
      %v5525 = vadd.f32 %v5523, %v5524
      %v5526 = vrot.slane %v5525, 1
      %v5527 = vadd.f32 %v5525, %v5526
      %v5528 = vsel %vm5254, %v5087, 0.0
      %v5529 = vrot.slane %v5528, 4
      %v5530 = vadd.f32 %v5528, %v5529
      %v5531 = vrot.slane %v5530, 2
      %v5532 = vadd.f32 %v5530, %v5531
      %v5533 = vrot.slane %v5532, 1
      %v5534 = vadd.f32 %v5532, %v5533
      %v5535 = vsel %vm5254, %v5095, 0.0
      %v5536 = vrot.slane %v5535, 4
      %v5537 = vadd.f32 %v5535, %v5536
      %v5538 = vrot.slane %v5537, 2
      %v5539 = vadd.f32 %v5537, %v5538
      %v5540 = vrot.slane %v5539, 1
      %v5541 = vadd.f32 %v5539, %v5540
      %v5542 = vsel %vm5254, %v5103, 0.0
      %v5543 = vrot.slane %v5542, 4
      %v5544 = vadd.f32 %v5542, %v5543
      %v5545 = vrot.slane %v5544, 2
      %v5546 = vadd.f32 %v5544, %v5545
      %v5547 = vrot.slane %v5546, 1
      %v5548 = vadd.f32 %v5546, %v5547
      %v5549 = vsel %vm5254, %v5102, 0.0
      %v5550 = vrot.slane %v5549, 4
      %v5551 = vadd.f32 %v5549, %v5550
      %v5552 = vrot.slane %v5551, 2
      %v5553 = vadd.f32 %v5551, %v5552
      %v5554 = vrot.slane %v5553, 1
      %v5555 = vadd.f32 %v5553, %v5554
      %v5556 = vsel %vm5254, %v5104, 0.0
      %v5557 = vrot.slane %v5556, 4
      %v5558 = vadd.f32 %v5556, %v5557
      %v5559 = vrot.slane %v5558, 2
      %v5560 = vadd.f32 %v5558, %v5559
      %v5561 = vrot.slane %v5560, 1
      %v5562 = vadd.f32 %v5560, %v5561
      %v5563 = vsel %vm5254, %v5112, 0.0
      %v5564 = vrot.slane %v5563, 4
      %v5565 = vadd.f32 %v5563, %v5564
      %v5566 = vrot.slane %v5565, 2
      %v5567 = vadd.f32 %v5565, %v5566
      %v5568 = vrot.slane %v5567, 1
      %v5569 = vadd.f32 %v5567, %v5568
      %v5570 = vsel %vm5254, %v5120, 0.0
      %v5571 = vrot.slane %v5570, 4
      %v5572 = vadd.f32 %v5570, %v5571
      %v5573 = vrot.slane %v5572, 2
      %v5574 = vadd.f32 %v5572, %v5573
      %v5575 = vrot.slane %v5574, 1
      %v5576 = vadd.f32 %v5574, %v5575
      %v5577 = vsel %vm5254, %v5119, 0.0
      %v5578 = vrot.slane %v5577, 4
      %v5579 = vadd.f32 %v5577, %v5578
      %v5580 = vrot.slane %v5579, 2
      %v5581 = vadd.f32 %v5579, %v5580
      %v5582 = vrot.slane %v5581, 1
      %v5583 = vadd.f32 %v5581, %v5582
      %v5584 = vsel %vm5254, %v5121, 0.0
      %v5585 = vrot.slane %v5584, 4
      %v5586 = vadd.f32 %v5584, %v5585
      %v5587 = vrot.slane %v5586, 2
      %v5588 = vadd.f32 %v5586, %v5587
      %v5589 = vrot.slane %v5588, 1
      %v5590 = vadd.f32 %v5588, %v5589
      %v5591 = vsel %vm5254, %v5129, 0.0
      %v5592 = vrot.slane %v5591, 4
      %v5593 = vadd.f32 %v5591, %v5592
      %v5594 = vrot.slane %v5593, 2
      %v5595 = vadd.f32 %v5593, %v5594
      %v5596 = vrot.slane %v5595, 1
      %v5597 = vadd.f32 %v5595, %v5596
      %v5598 = vsel %vm5254, %v5137, 0.0
      %v5599 = vrot.slane %v5598, 4
      %v5600 = vadd.f32 %v5598, %v5599
      %v5601 = vrot.slane %v5600, 2
      %v5602 = vadd.f32 %v5600, %v5601
      %v5603 = vrot.slane %v5602, 1
      %v5604 = vadd.f32 %v5602, %v5603
      %v5605 = vsel %vm5254, %v5136, 0.0
      %v5606 = vrot.slane %v5605, 4
      %v5607 = vadd.f32 %v5605, %v5606
      %v5608 = vrot.slane %v5607, 2
      %v5609 = vadd.f32 %v5607, %v5608
      %v5610 = vrot.slane %v5609, 1
      %v5611 = vadd.f32 %v5609, %v5610
      %v5612 = vsel %vm5254, %v5138, 0.0
      %v5613 = vrot.slane %v5612, 4
      %v5614 = vadd.f32 %v5612, %v5613
      %v5615 = vrot.slane %v5614, 2
      %v5616 = vadd.f32 %v5614, %v5615
      %v5617 = vrot.slane %v5616, 1
      %v5618 = vadd.f32 %v5616, %v5617
      %v5619 = vsel %vm5254, %v5146, 0.0
      %v5620 = vrot.slane %v5619, 4
      %v5621 = vadd.f32 %v5619, %v5620
      %v5622 = vrot.slane %v5621, 2
      %v5623 = vadd.f32 %v5621, %v5622
      %v5624 = vrot.slane %v5623, 1
      %v5625 = vadd.f32 %v5623, %v5624
      %v5626 = vsel %vm5254, %v5154, 0.0
      %v5627 = vrot.slane %v5626, 4
      %v5628 = vadd.f32 %v5626, %v5627
      %v5629 = vrot.slane %v5628, 2
      %v5630 = vadd.f32 %v5628, %v5629
      %v5631 = vrot.slane %v5630, 1
      %v5632 = vadd.f32 %v5630, %v5631
      %v5633 = vsel %vm5254, %v5153, 0.0
      %v5634 = vrot.slane %v5633, 4
      %v5635 = vadd.f32 %v5633, %v5634
      %v5636 = vrot.slane %v5635, 2
      %v5637 = vadd.f32 %v5635, %v5636
      %v5638 = vrot.slane %v5637, 1
      %v5639 = vadd.f32 %v5637, %v5638
      %v5640 = vsel %vm5254, %v5155, 0.0
      %v5641 = vrot.slane %v5640, 4
      %v5642 = vadd.f32 %v5640, %v5641
      %v5643 = vrot.slane %v5642, 2
      %v5644 = vadd.f32 %v5642, %v5643
      %v5645 = vrot.slane %v5644, 1
      %v5646 = vadd.f32 %v5644, %v5645
      %v5647 = vsel %vm5254, %v5163, 0.0
      %v5648 = vrot.slane %v5647, 4
      %v5649 = vadd.f32 %v5647, %v5648
      %v5650 = vrot.slane %v5649, 2
      %v5651 = vadd.f32 %v5649, %v5650
      %v5652 = vrot.slane %v5651, 1
      %v5653 = vadd.f32 %v5651, %v5652
      %v5654 = vsel %vm5254, %v5171, 0.0
      %v5655 = vrot.slane %v5654, 4
      %v5656 = vadd.f32 %v5654, %v5655
      %v5657 = vrot.slane %v5656, 2
      %v5658 = vadd.f32 %v5656, %v5657
      %v5659 = vrot.slane %v5658, 1
      %v5660 = vadd.f32 %v5658, %v5659
      %v5661 = vsel %vm5254, %v5170, 0.0
      %v5662 = vrot.slane %v5661, 4
      %v5663 = vadd.f32 %v5661, %v5662
      %v5664 = vrot.slane %v5663, 2
      %v5665 = vadd.f32 %v5663, %v5664
      %v5666 = vrot.slane %v5665, 1
      %v5667 = vadd.f32 %v5665, %v5666
      %v5668 = vsel %vm5254, %v5172, 0.0
      %v5669 = vrot.slane %v5668, 4
      %v5670 = vadd.f32 %v5668, %v5669
      %v5671 = vrot.slane %v5670, 2
      %v5672 = vadd.f32 %v5670, %v5671
      %v5673 = vrot.slane %v5672, 1
      %v5674 = vadd.f32 %v5672, %v5673
      %v5675 = vsel %vm5254, %v5180, 0.0
      %v5676 = vrot.slane %v5675, 4
      %v5677 = vadd.f32 %v5675, %v5676
      %v5678 = vrot.slane %v5677, 2
      %v5679 = vadd.f32 %v5677, %v5678
      %v5680 = vrot.slane %v5679, 1
      %v5681 = vadd.f32 %v5679, %v5680
      %v5682 = vsel %vm5254, %v5188, 0.0
      %v5683 = vrot.slane %v5682, 4
      %v5684 = vadd.f32 %v5682, %v5683
      %v5685 = vrot.slane %v5684, 2
      %v5686 = vadd.f32 %v5684, %v5685
      %v5687 = vrot.slane %v5686, 1
      %v5688 = vadd.f32 %v5686, %v5687
      %v5689 = vsel %vm5254, %v5187, 0.0
      %v5690 = vrot.slane %v5689, 4
      %v5691 = vadd.f32 %v5689, %v5690
      %v5692 = vrot.slane %v5691, 2
      %v5693 = vadd.f32 %v5691, %v5692
      %v5694 = vrot.slane %v5693, 1
      %v5695 = vadd.f32 %v5693, %v5694
      %v5696 = vsel %vm5254, %v5189, 0.0
      %v5697 = vrot.slane %v5696, 4
      %v5698 = vadd.f32 %v5696, %v5697
      %v5699 = vrot.slane %v5698, 2
      %v5700 = vadd.f32 %v5698, %v5699
      %v5701 = vrot.slane %v5700, 1
      %v5702 = vadd.f32 %v5700, %v5701
      %v5703 = vmul.f32 %v5261, 0.25
      %v5704 = vmul.f32 %v5268, 0.25
      %v5705 = vmul.f32 %v5275, 0.25
      %v5706 = vmul.f32 %v5282, 0.25
      %v5707 = vmul.f32 %v5289, 0.25
      %v5708 = vmul.f32 %v5296, 0.25
      %v5709 = vmul.f32 %v5303, 0.25
      %v5710 = vmul.f32 %v5310, 0.25
      %v5711 = vmul.f32 %v5317, 0.25
      %v5712 = vmul.f32 %v5324, 0.25
      %v5713 = vmul.f32 %v5331, 0.25
      %v5714 = vmul.f32 %v5338, 0.25
      %v5715 = vmul.f32 %v5345, 0.25
      %v5716 = vmul.f32 %v5352, 0.25
      %v5717 = vmul.f32 %v5359, 0.25
      %v5718 = vmul.f32 %v5366, 0.25
      %v5719 = vmul.f32 %v5373, 0.25
      %v5720 = vmul.f32 %v5380, 0.25
      %v5721 = vmul.f32 %v5387, 0.25
      %v5722 = vmul.f32 %v5394, 0.25
      %v5723 = vmul.f32 %v5401, 0.25
      %v5724 = vmul.f32 %v5408, 0.25
      %v5725 = vmul.f32 %v5415, 0.25
      %v5726 = vmul.f32 %v5422, 0.25
      %v5727 = vmul.f32 %v5429, 0.25
      %v5728 = vmul.f32 %v5436, 0.25
      %v5729 = vmul.f32 %v5443, 0.25
      %v5730 = vmul.f32 %v5450, 0.25
      %v5731 = vmul.f32 %v5457, 0.25
      %v5732 = vmul.f32 %v5464, 0.25
      %v5733 = vmul.f32 %v5471, 0.25
      %v5734 = vmul.f32 %v5478, 0.25
      %v5735 = vmul.f32 %v5485, 0.25
      %v5736 = vmul.f32 %v5492, 0.25
      %v5737 = vmul.f32 %v5499, 0.25
      %v5738 = vmul.f32 %v5506, 0.25
      %v5739 = vmul.f32 %v5513, 0.25
      %v5740 = vmul.f32 %v5520, 0.25
      %v5741 = vmul.f32 %v5527, 0.25
      %v5742 = vmul.f32 %v5534, 0.25
      %v5743 = vmul.f32 %v5541, 0.25
      %v5744 = vmul.f32 %v5548, 0.25
      %v5745 = vmul.f32 %v5555, 0.25
      %v5746 = vmul.f32 %v5562, 0.25
      %v5747 = vmul.f32 %v5569, 0.25
      %v5748 = vmul.f32 %v5576, 0.25
      %v5749 = vmul.f32 %v5583, 0.25
      %v5750 = vmul.f32 %v5590, 0.25
      %v5751 = vmul.f32 %v5597, 0.25
      %v5752 = vmul.f32 %v5604, 0.25
      %v5753 = vmul.f32 %v5611, 0.25
      %v5754 = vmul.f32 %v5618, 0.25
      %v5755 = vmul.f32 %v5625, 0.25
      %v5756 = vmul.f32 %v5632, 0.25
      %v5757 = vmul.f32 %v5639, 0.25
      %v5758 = vmul.f32 %v5646, 0.25
      %v5759 = vmul.f32 %v5653, 0.25
      %v5760 = vmul.f32 %v5660, 0.25
      %v5761 = vmul.f32 %v5667, 0.25
      %v5762 = vmul.f32 %v5674, 0.25
      %v5763 = vmul.f32 %v5681, 0.25
      %v5764 = vmul.f32 %v5688, 0.25
      %v5765 = vmul.f32 %v5695, 0.25
      %v5766 = vmul.f32 %v5702, 0.25
      %v5767 = vpack.c.bf16 %v5703, %v5703
      %v5768 = vpack.c.bf16 %v5704, %v5704
      %v5769 = vpack.c.bf16 %v5705, %v5705
      %v5770 = vpack.c.bf16 %v5706, %v5706
      %v5771 = vpack.c.bf16 %v5707, %v5707
      %v5772 = vpack.c.bf16 %v5708, %v5708
      %v5773 = vpack.c.bf16 %v5709, %v5709
      %v5774 = vpack.c.bf16 %v5710, %v5710
      %v5775 = vpack.c.bf16 %v5711, %v5711
      %v5776 = vpack.c.bf16 %v5712, %v5712
      %v5777 = vpack.c.bf16 %v5713, %v5713
      %v5778 = vpack.c.bf16 %v5714, %v5714
      %v5779 = vpack.c.bf16 %v5715, %v5715
      %v5780 = vpack.c.bf16 %v5716, %v5716
      %v5781 = vpack.c.bf16 %v5717, %v5717
      %v5782 = vpack.c.bf16 %v5718, %v5718
      %v5783 = vpack.c.bf16 %v5719, %v5719
      %v5784 = vpack.c.bf16 %v5720, %v5720
      %v5785 = vpack.c.bf16 %v5721, %v5721
      %v5786 = vpack.c.bf16 %v5722, %v5722
      %v5787 = vpack.c.bf16 %v5723, %v5723
      %v5788 = vpack.c.bf16 %v5724, %v5724
      %v5789 = vpack.c.bf16 %v5725, %v5725
      %v5790 = vpack.c.bf16 %v5726, %v5726
      %v5791 = vpack.c.bf16 %v5727, %v5727
      %v5792 = vpack.c.bf16 %v5728, %v5728
      %v5793 = vpack.c.bf16 %v5729, %v5729
      %v5794 = vpack.c.bf16 %v5730, %v5730
      %v5795 = vpack.c.bf16 %v5731, %v5731
      %v5796 = vpack.c.bf16 %v5732, %v5732
      %v5797 = vpack.c.bf16 %v5733, %v5733
      %v5798 = vpack.c.bf16 %v5734, %v5734
      %v5799 = vpack.c.bf16 %v5735, %v5735
      %v5800 = vpack.c.bf16 %v5736, %v5736
      %v5801 = vpack.c.bf16 %v5737, %v5737
      %v5802 = vpack.c.bf16 %v5738, %v5738
      %v5803 = vpack.c.bf16 %v5739, %v5739
      %v5804 = vpack.c.bf16 %v5740, %v5740
      %v5805 = vpack.c.bf16 %v5741, %v5741
      %v5806 = vpack.c.bf16 %v5742, %v5742
      %v5807 = vpack.c.bf16 %v5743, %v5743
      %v5808 = vpack.c.bf16 %v5744, %v5744
      %v5809 = vpack.c.bf16 %v5745, %v5745
      %v5810 = vpack.c.bf16 %v5746, %v5746
      %v5811 = vpack.c.bf16 %v5747, %v5747
      %v5812 = vpack.c.bf16 %v5748, %v5748
      %v5813 = vpack.c.bf16 %v5749, %v5749
      %v5814 = vpack.c.bf16 %v5750, %v5750
      %v5815 = vpack.c.bf16 %v5751, %v5751
      %v5816 = vpack.c.bf16 %v5752, %v5752
      %v5817 = vpack.c.bf16 %v5753, %v5753
      %v5818 = vpack.c.bf16 %v5754, %v5754
      %v5819 = vpack.c.bf16 %v5755, %v5755
      %v5820 = vpack.c.bf16 %v5756, %v5756
      %v5821 = vpack.c.bf16 %v5757, %v5757
      %v5822 = vpack.c.bf16 %v5758, %v5758
      %v5823 = vpack.c.bf16 %v5759, %v5759
      %v5824 = vpack.c.bf16 %v5760, %v5760
      %v5825 = vpack.c.bf16 %v5761, %v5761
      %v5826 = vpack.c.bf16 %v5762, %v5762
      %v5827 = vpack.c.bf16 %v5763, %v5763
      %v5828 = vpack.c.bf16 %v5764, %v5764
      %v5829 = vpack.c.bf16 %v5765, %v5765
      %v5830 = vpack.c.bf16 %v5766, %v5766
      %v5831 = vld [vmem:[%s7] sm:$0xf]
      %v5832 = vld [vmem:[%s8] sm:$0x1]
      %v5834 = vlaneseq
      %v5835 = vshrl.u32 %v5834, 7
      %v5836 = vsub.s32 0, %v5835
      %v5837 = vrot.slane %v5832, %v5836
      %v5903 = vunpack.c.l.b16 %v5767
      %v5904 = vunpack.c.l.b16 %v5768
      %v5905 = vunpack.c.l.b16 %v5769
      %v5906 = vunpack.c.l.b16 %v5770
      %v5907 = vunpack.c.l.b16 %v5771
      %v5908 = vunpack.c.l.b16 %v5772
      %v5909 = vunpack.c.l.b16 %v5773
      %v5910 = vunpack.c.l.b16 %v5774
      %v5911 = vunpack.c.l.b16 %v5775
      %v5912 = vunpack.c.l.b16 %v5776
      %v5913 = vunpack.c.l.b16 %v5777
      %v5914 = vunpack.c.l.b16 %v5778
      %v5915 = vunpack.c.l.b16 %v5779
      %v5916 = vunpack.c.l.b16 %v5780
      %v5917 = vunpack.c.l.b16 %v5781
      %v5918 = vunpack.c.l.b16 %v5782
      %v5919 = vunpack.c.l.b16 %v5783
      %v5920 = vunpack.c.l.b16 %v5784
      %v5921 = vunpack.c.l.b16 %v5785
      %v5922 = vunpack.c.l.b16 %v5786
      %v5923 = vunpack.c.l.b16 %v5787
      %v5924 = vunpack.c.l.b16 %v5788
      %v5925 = vunpack.c.l.b16 %v5789
      %v5926 = vunpack.c.l.b16 %v5790
      %v5927 = vunpack.c.l.b16 %v5791
      %v5928 = vunpack.c.l.b16 %v5792
      %v5929 = vunpack.c.l.b16 %v5793
      %v5930 = vunpack.c.l.b16 %v5794
      %v5931 = vunpack.c.l.b16 %v5795
      %v5932 = vunpack.c.l.b16 %v5796
      %v5933 = vunpack.c.l.b16 %v5797
      %v5934 = vunpack.c.l.b16 %v5798
      %v5935 = vunpack.c.l.b16 %v5799
      %v5936 = vunpack.c.l.b16 %v5800
      %v5937 = vunpack.c.l.b16 %v5801
      %v5938 = vunpack.c.l.b16 %v5802
      %v5939 = vunpack.c.l.b16 %v5803
      %v5940 = vunpack.c.l.b16 %v5804
      %v5941 = vunpack.c.l.b16 %v5805
      %v5942 = vunpack.c.l.b16 %v5806
      %v5943 = vunpack.c.l.b16 %v5807
      %v5944 = vunpack.c.l.b16 %v5808
      %v5945 = vunpack.c.l.b16 %v5809
      %v5946 = vunpack.c.l.b16 %v5810
      %v5947 = vunpack.c.l.b16 %v5811
      %v5948 = vunpack.c.l.b16 %v5812
      %v5949 = vunpack.c.l.b16 %v5813
      %v5950 = vunpack.c.l.b16 %v5814
      %v5951 = vunpack.c.l.b16 %v5815
      %v5952 = vunpack.c.l.b16 %v5816
      %v5953 = vunpack.c.l.b16 %v5817
      %v5954 = vunpack.c.l.b16 %v5818
      %v5955 = vunpack.c.l.b16 %v5819
      %v5956 = vunpack.c.l.b16 %v5820
      %v5957 = vunpack.c.l.b16 %v5821
      %v5958 = vunpack.c.l.b16 %v5822
      %v5959 = vunpack.c.l.b16 %v5823
      %v5960 = vunpack.c.l.b16 %v5824
      %v5961 = vunpack.c.l.b16 %v5825
      %v5962 = vunpack.c.l.b16 %v5826
      %v5963 = vunpack.c.l.b16 %v5827
      %v5964 = vunpack.c.l.b16 %v5828
      %v5965 = vunpack.c.l.b16 %v5829
      %v5966 = vunpack.c.l.b16 %v5830
      %v5967 = vsel %vm4675, %v5904, %v5903
      %v5968 = vsel %vm4677, %v5905, %v5967
      %v5969 = vsel %vm4679, %v5906, %v5968
      %v5970 = vsel %vm4681, %v5907, %v5969
      %v5971 = vsel %vm4683, %v5908, %v5970
      %v5972 = vsel %vm4685, %v5909, %v5971
      %v5973 = vsel %vm4687, %v5910, %v5972
      %v5974 = vsel %vm4675, %v5912, %v5911
      %v5975 = vsel %vm4677, %v5913, %v5974
      %v5976 = vsel %vm4679, %v5914, %v5975
      %v5977 = vsel %vm4681, %v5915, %v5976
      %v5978 = vsel %vm4683, %v5916, %v5977
      %v5979 = vsel %vm4685, %v5917, %v5978
      %v5980 = vsel %vm4687, %v5918, %v5979
      %v5981 = vsel %vm4675, %v5920, %v5919
      %v5982 = vsel %vm4677, %v5921, %v5981
      %v5983 = vsel %vm4679, %v5922, %v5982
      %v5984 = vsel %vm4681, %v5923, %v5983
      %v5985 = vsel %vm4683, %v5924, %v5984
      %v5986 = vsel %vm4685, %v5925, %v5985
      %v5987 = vsel %vm4687, %v5926, %v5986
      %v5988 = vsel %vm4675, %v5928, %v5927
      %v5989 = vsel %vm4677, %v5929, %v5988
      %v5990 = vsel %vm4679, %v5930, %v5989
      %v5991 = vsel %vm4681, %v5931, %v5990
      %v5992 = vsel %vm4683, %v5932, %v5991
      %v5993 = vsel %vm4685, %v5933, %v5992
      %v5994 = vsel %vm4687, %v5934, %v5993
      %v5995 = vsel %vm4675, %v5936, %v5935
      %v5996 = vsel %vm4677, %v5937, %v5995
      %v5997 = vsel %vm4679, %v5938, %v5996
      %v5998 = vsel %vm4681, %v5939, %v5997
      %v5999 = vsel %vm4683, %v5940, %v5998
      %v6000 = vsel %vm4685, %v5941, %v5999
      %v6001 = vsel %vm4687, %v5942, %v6000
      %v6002 = vsel %vm4675, %v5944, %v5943
      %v6003 = vsel %vm4677, %v5945, %v6002
      %v6004 = vsel %vm4679, %v5946, %v6003
      %v6005 = vsel %vm4681, %v5947, %v6004
      %v6006 = vsel %vm4683, %v5948, %v6005
      %v6007 = vsel %vm4685, %v5949, %v6006
      %v6008 = vsel %vm4687, %v5950, %v6007
      %v6009 = vsel %vm4675, %v5952, %v5951
      %v6010 = vsel %vm4677, %v5953, %v6009
      %v6011 = vsel %vm4679, %v5954, %v6010
      %v6012 = vsel %vm4681, %v5955, %v6011
      %v6013 = vsel %vm4683, %v5956, %v6012
      %v6014 = vsel %vm4685, %v5957, %v6013
      %v6015 = vsel %vm4687, %v5958, %v6014
      %v6016 = vsel %vm4675, %v5960, %v5959
      %v6017 = vsel %vm4677, %v5961, %v6016
      %v6018 = vsel %vm4679, %v5962, %v6017
      %v6019 = vsel %vm4681, %v5963, %v6018
      %v6020 = vsel %vm4683, %v5964, %v6019
      %v6021 = vsel %vm4685, %v5965, %v6020
      %v6022 = vsel %vm4687, %v5966, %v6021
      %v6023 = vpack.c.b16 %v5980, %v5973
      %v6024 = vpack.c.b16 %v5994, %v5987
      %v6025 = vpack.c.b16 %v6008, %v6001
      %v6026 = vpack.c.b16 %v6022, %v6015
      %v6028 = vsel %vm454, %v6023, 0
      %v6031 = vsel %vm454, %v6024, 0
      %v6034 = vsel %vm454, %v6025, 0
      %v6037 = vsel %vm454, %v6026, 0
      %v6040 = vsel %vm503, %v5831, 0
      %6042 = vmatprep.subr.bf16.mxu0 0
      %6043 = vmatpush1.bf16.msra.mxu0 %v6040
      %6044 = vmatprep.subr.bf16.mxu0 0
      %6045 = vmatpush1.bf16.msra.mxu0 0
      %6046 = vmatprep.subr.bf16.mxu0 0
      %6047 = vmatpush1.bf16.msra.mxu0 0
      %6048 = vmatprep.subr.bf16.mxu0 0
      %6049 = vmatpush1.bf16.msra.mxu0 0
      %6050 = vmatprep.subr.bf16.mxu0 0
      %6051 = vmatpush1.bf16.msra.mxu0 0
      %6052 = vmatprep.subr.bf16.mxu0 0
      %6053 = vmatpush1.bf16.msra.mxu0 0
      %6054 = vmatprep.subr.bf16.mxu0 0
      %6055 = vmatpush1.bf16.msra.mxu0 0
      %6056 = vmatprep.subr.bf16.mxu0 0
      %6057 = vmatpush1.bf16.msra.mxu0 0
      %6058 = vmatprep.subr.bf16.mxu0 0
      %6059 = vmatpush1.bf16.msra.mxu0 0
      %6060 = vmatprep.subr.bf16.mxu0 0
      %6061 = vmatpush1.bf16.msra.mxu0 0
      %6062 = vmatprep.subr.bf16.mxu0 0
      %6063 = vmatpush1.bf16.msra.mxu0 0
      %6064 = vmatprep.subr.bf16.mxu0 0
      %6065 = vmatpush1.bf16.msra.mxu0 0
      %6066 = vmatprep.subr.bf16.mxu0 0
      %6067 = vmatpush1.bf16.msra.mxu0 0
      %6068 = vmatprep.subr.bf16.mxu0 0
      %6069 = vmatpush1.bf16.msra.mxu0 0
      %6070 = vmatprep.subr.bf16.mxu0 0
      %6071 = vmatpush1.bf16.msra.mxu0 0
      %6072 = vmatprep.subr.bf16.mxu0 0
      %6073 = vmatpush1.bf16.msra.mxu0 0
      %6074 = vmatprep.mubr.bf16.mxu0 0
      %6075 = vmatmul.mubr.bf16.gmra.mrb[0].mxu0 %v6028
      %v6076 = vpop.f32.mrb[0].mxu0
      %v6077 = vadd.f32 %v5837, %v6076
      %v6078 = vpop.f32.mrb[0].mxu0
      %v6079 = vpop.f32.mrb[0].mxu0
      %v6080 = vadd.f32 %v5837, %v6079
      %v6081 = vpop.f32.mrb[0].mxu0
      %6082 = vmatprep.mubr.bf16.mxu0 0
      %6083 = vmatmul.mubr.bf16.gmra.mrb[0].mxu0 %v6031
      %v6084 = vpop.f32.mrb[0].mxu0
      %v6085 = vadd.f32 %v5837, %v6084
      %v6086 = vpop.f32.mrb[0].mxu0
      %v6087 = vpop.f32.mrb[0].mxu0
      %v6088 = vadd.f32 %v5837, %v6087
      %v6089 = vpop.f32.mrb[0].mxu0
      %6090 = vmatprep.mubr.bf16.mxu0 0
      %6091 = vmatmul.mubr.bf16.gmra.mrb[0].mxu0 %v6034
      %v6092 = vpop.f32.mrb[0].mxu0
      %v6093 = vadd.f32 %v5837, %v6092
      %v6094 = vpop.f32.mrb[0].mxu0
      %v6095 = vpop.f32.mrb[0].mxu0
      %v6096 = vadd.f32 %v5837, %v6095
      %v6097 = vpop.f32.mrb[0].mxu0
      %6098 = vmatprep.mubr.bf16.mxu0 0
      %6099 = vmatmul.mubr.bf16.gmra.mrb[0].mxu0 %v6037
      %v6100 = vpop.f32.mrb[0].mxu0
      %v6101 = vadd.f32 %v5837, %v6100
      %v6102 = vpop.f32.mrb[0].mxu0
      %v6103 = vpop.f32.mrb[0].mxu0
      %v6104 = vadd.f32 %v5837, %v6103
      %v6105 = vpop.f32.mrb[0].mxu0
      %6106 = vdwg.mxu0
      %v6107 = vadd.f32 %v4792, %v6077
      %v6108 = vadd.f32 %v4795, %v6080
      %v6109 = vadd.f32 %v4800, %v6085
      %v6110 = vadd.f32 %v4803, %v6088
      %v6111 = vadd.f32 %v4808, %v6093
      %v6112 = vadd.f32 %v4811, %v6096
      %v6113 = vadd.f32 %v4816, %v6101
      %v6114 = vadd.f32 %v4819, %v6104
      %v6115 = vmax.f32 %v6107, 0.0
      %v6116 = vmax.f32 %v6108, 0.0
      %v6117 = vmax.f32 %v6109, 0.0
      %v6118 = vmax.f32 %v6110, 0.0
      %v6119 = vmax.f32 %v6111, 0.0
      %v6120 = vmax.f32 %v6112, 0.0
      %v6121 = vmax.f32 %v6113, 0.0
      %v6122 = vmax.f32 %v6114, 0.0
      %v6123 = vpack.c.bf16 %v6116, %v6115
      %v6124 = vpack.c.bf16 %v6118, %v6117
      %v6125 = vpack.c.bf16 %v6120, %v6119
      %v6126 = vpack.c.bf16 %v6122, %v6121
      %v6131 = vunpack.c.l.b16 %v6123
      %v6132 = vunpack.c.h.b16 %v6123
      %v6133 = vunpack.c.l.b16 %v6124
      %v6134 = vunpack.c.h.b16 %v6124
      %v6135 = vunpack.c.l.b16 %v6125
      %v6136 = vunpack.c.h.b16 %v6125
      %v6137 = vunpack.c.l.b16 %v6126
      %v6138 = vunpack.c.h.b16 %v6126
      %v6139 = vpack.c.b16 %v6131, %v6131
      %v6140 = vpack.c.b16 %v6132, %v6132
      %v6141 = vpack.c.b16 %v6133, %v6133
      %v6142 = vpack.c.b16 %v6134, %v6134
      %v6143 = vpack.c.b16 %v6135, %v6135
      %v6144 = vpack.c.b16 %v6136, %v6136
      %v6145 = vpack.c.b16 %v6137, %v6137
      %v6146 = vpack.c.b16 %v6138, %v6138
      %vm6155 = vcmask 125952
      %6156 = vst.msk [vmem:[%s332] sm:$0xf] %vm6155, %v6139
      %6157 = vst.msk [vmem:[%s332 + $0x4] sm:$0xf] %vm6155, %v6140
      %6158 = vst.msk [vmem:[%s332 + $0x8] sm:$0xf] %vm6155, %v6141
      %6159 = vst.msk [vmem:[%s332 + $0xc] sm:$0xf] %vm6155, %v6142
      %6160 = vst.msk [vmem:[%s332 + $0x10] sm:$0xf] %vm6155, %v6143
      %6161 = vst.msk [vmem:[%s332 + $0x14] sm:$0xf] %vm6155, %v6144
      %6162 = vst.msk [vmem:[%s332 + $0x18] sm:$0xf] %vm6155, %v6145
      %6163 = vst.msk [vmem:[%s332 + $0x1c] sm:$0xf] %vm6155, %v6146
      %p6164 = scmp.lt.s32.totalorder %s20, 1
      %s6165 = scalar_select %p6164, %s20, 1
      %s6166 = smul.addr %s6165, 8
      %s6167 = smul.addr %s6166, 4
      %s6168 = scalar_lea.vmem %s9, %s6167
      // Predicated region
      $region57: #{tpu_custom_call.1} parent=55 // pred_check
        %p6169 = pneg %p232
      $region58: #{tpu_custom_call.1} parent=55 // pred_check_branch
        %6171 = sbr.rel (%p6169) target = $region60
      $region59: #{tpu_custom_call.1} parent=55 // pred_region
        _
      $region60: #{tpu_custom_call.1} parent=55 // pred_fallthru
        _
    $region56: #{tpu_custom_call.1} parent=5 // pred_fallthru
      _
    %p6172 = scmp.le.s32.totalorder 2, %s15
    // Predicated region
    $region61: #{tpu_custom_call.1} parent=5 // pred_check
      %p6173 = pneg %p6172
    $region62: #{tpu_custom_call.1} parent=5 // pred_check_branch
      %6175 = sbr.rel (%p6173) target = $region64
    $region63: #{tpu_custom_call.1} parent=5 // pred_region
      %s6176 = ssub.s32 %s15, 2
      // Predicated region
      $region65: #{tpu_custom_call.1} parent=63 // pred_check
        %p6177 = pneg %p238
      $region66: #{tpu_custom_call.1} parent=63 // pred_check_branch
        %6179 = sbr.rel (%p6177) target = $region68
      $region67: #{tpu_custom_call.1} parent=63 // pred_region
        %p6180 = scmp.lt.s32.totalorder %s21, 1
        %s6181 = scalar_select %p6180, %s21, 1
        %s6182 = smul.addr %s6181, 8
        %s6183 = smul.addr %s6182, 4
        %s6184 = scalar_lea.vmem %s9, %s6183
      $region68: #{tpu_custom_call.1} parent=63 // pred_fallthru
        _
    $region64: #{tpu_custom_call.1} parent=5 // pred_fallthru
      _
  $region6: #{tpu_custom_call.1} parent=0 // loop_footer
    %s19 = sadd.s32 1, %s15
  $region7: #{tpu_custom_call.1} parent=0 // loop_footer_branch
    %14 = sbr.rel target = $region3
  $region8: #{tpu_custom_call.1} parent=0 // loop_exit
    _

</llo_original>
